<compile_context>
chip_gen: v5e
topology: v5e:2x2
jax: 0.10.0
libtpu: 0.0.40
codegen_flags: <defaults>
</compile_context>

<pallas_src>
import functools

import jax
import jax.numpy as jnp
from jax import lax
from jax.experimental import pallas as pl
from jax.experimental.pallas import tpu as pltpu


def _round_up(x, m):
    return (x + m - 1) // m * m


def _choose_time_chunk(T, target=128):
    """Largest divisor of T that is <= target (keeps the reversed recurrence exact)."""
    # TODO(synk): non-divisor time chunking would need explicit tail handling for
    # the backward direction; here every chunk size divides T exactly.
    best = 1
    for c in range(1, min(T, target) + 1):
        if T % c == 0:
            best = c
    return best


def _lstm_layer_kernel(x_ref, wih_ref, whh_ref, b_ref, h0_ref, c0_ref,
                       y_ref, h_scr, c_scr, gx_scr, *, hp, tt, unroll):
    """One bidirectional LSTM layer. grid = (direction, time_chunk).

    x_ref  : (Tt, Bp, Dp)     time-major input chunk (reversed chunk order for d=1)
    wih_ref: (1, Dp, 4Hp)     padded W_ih^T (bf16) for this direction
    whh_ref: (1, Hp, 4Hp)     padded W_hh^T (bf16) for this direction
    b_ref  : (1, 1, 4Hp)      padded b_ih + b_hh (f32)
    h0_ref : (1, Bp, Hp)      initial h for this direction
    c0_ref : (1, Bp, Hp)      initial c for this direction
    y_ref  : (Tt, Bp, Hp)     this direction's half of the (T, Bp, 2Hp) output
    h_scr, c_scr : (Bp, Hp)   f32 recurrent state, persists across time chunks
    gx_scr : (Tt, Bp, 4Hp)    f32 hoisted input projection for the chunk
    """
    d = pl.program_id(0)       # 0 = forward, 1 = backward
    tc = pl.program_id(1)      # time-chunk index (arrives in recurrence order)

    bp = x_ref.shape[1]
    dp = x_ref.shape[2]

    # (Re)initialize the recurrent state at the first chunk of each direction.
    @pl.when(tc == 0)
    def _():
        h_scr[...] = h0_ref[0]
        c_scr[...] = c0_ref[0]

    # Hoisted input projection: ONE (Tt*Bp, Dp) x (Dp, 4Hp) bf16 MXU matmul per
    # chunk; bias is added once here, not per time step.
    x2d = x_ref[...].reshape(tt * bp, dp).astype(jnp.bfloat16)
    gx = jnp.dot(x2d, wih_ref[0], preferred_element_type=jnp.float32) + b_ref[0]
    gx_scr[...] = gx.reshape(tt, bp, 4 * hp)

    whh = whh_ref[0]

    def step(s, carry):
        # Forward walks local steps 0..tt-1; backward walks tt-1..0.
        ls = (1 - d) * s + d * (tt - 1 - s)
        gx_t = gx_scr[ls]                                     # (Bp, 4Hp)

        h = h_scr[...]
        c = c_scr[...]
        gates = gx_t + jnp.dot(h.astype(jnp.bfloat16), whh,
                               preferred_element_type=jnp.float32)

        # Hp-aligned (128-lane) gate slices.
        i_g = jax.nn.sigmoid(gates[:, 0 * hp:1 * hp])
        f_g = jax.nn.sigmoid(gates[:, 1 * hp:2 * hp])
        g_g = jnp.tanh(gates[:, 2 * hp:3 * hp])
        o_g = jax.nn.sigmoid(gates[:, 3 * hp:4 * hp])

        c_new = f_g * c + i_g * g_g
        h_new = o_g * jnp.tanh(c_new)

        c_scr[...] = c_new
        h_scr[...] = h_new
        y_ref[ls] = h_new.astype(y_ref.dtype)
        return carry

    lax.fori_loop(0, tt, step, 0, unroll=unroll)


def init_lstm_params(key, input_size, hidden_size, num_layers):
    """PyTorch-style uniform(-1/sqrt(H), 1/sqrt(H)) init, raw (unpadded) weights."""
    k = 1.0 / float(hidden_size) ** 0.5
    params = []
    for layer in range(num_layers):
        in_sz = input_size if layer == 0 else 2 * hidden_size
        layer_params = []
        for _direction in range(2):
            key, k1, k2, k3, k4 = jax.random.split(key, 5)
            w_ih = jax.random.uniform(k1, (4 * hidden_size, in_sz), jnp.float32, -k, k)
            w_hh = jax.random.uniform(k2, (4 * hidden_size, hidden_size), jnp.float32, -k, k)
            b_ih = jax.random.uniform(k3, (4 * hidden_size,), jnp.float32, -k, k)
            b_hh = jax.random.uniform(k4, (4 * hidden_size,), jnp.float32, -k, k)
            layer_params.append((w_ih, w_hh, b_ih, b_hh))
        params.append(layer_params)
    return params


def prepare_params(params, input_size, hidden_size):
    """One-time weight prep: transpose, fold biases, pad each gate to Hp=128
    lanes, scatter layer>0 input rows to the padded (2*Hp) activation layout,
    and store the matmul operands in bf16 (f32 accumulation in the kernel)."""
    H = hidden_size
    Hp = _round_up(H, 128)
    prepared = []
    for layer, layer_params in enumerate(params):
        if layer == 0:
            dp = input_size
            row_map = [(0, input_size, 0)]           # (src_row, n_rows, dst_row)
        else:
            dp = 2 * Hp
            row_map = [(0, H, 0), (H, H, Hp)]        # fwd half, bwd half

        def pad_gate_cols(m):
            out = jnp.zeros((m.shape[0], 4 * Hp), jnp.float32)
            for g in range(4):
                out = out.at[:, g * Hp:g * Hp + H].set(m[:, g * H:(g + 1) * H])
            return out

        wih_l, whh_l, b_l = [], [], []
        for (w_ih, w_hh, b_ih, b_hh) in layer_params:
            wih_c = pad_gate_cols(jnp.transpose(w_ih))          # (d_in, 4Hp)
            wih_p = jnp.zeros((dp, 4 * Hp), jnp.float32)
            for src, n, dst in row_map:
                wih_p = wih_p.at[dst:dst + n, :].set(wih_c[src:src + n, :])

            whh_p = jnp.zeros((Hp, 4 * Hp), jnp.float32)
            whh_p = whh_p.at[:H, :].set(pad_gate_cols(jnp.transpose(w_hh)))

            b_p = pad_gate_cols((b_ih + b_hh).reshape(1, 4 * H))

            wih_l.append(wih_p.astype(jnp.bfloat16))
            whh_l.append(whh_p.astype(jnp.bfloat16))
            b_l.append(b_p)
        prepared.append((jnp.stack(wih_l),       # (2, Dp, 4Hp) bf16
                         jnp.stack(whh_l),       # (2, Hp, 4Hp) bf16
                         jnp.stack(b_l)))        # (2, 1, 4Hp) f32
    return prepared


def _pad_state(s, Bp, Hp):
    """(num_layers*2, B, H) -> zero-padded (num_layers*2, Bp, Hp) f32."""
    L2, B, H = s.shape
    out = jnp.zeros((L2, Bp, Hp), jnp.float32)
    return out.at[:, :B, :H].set(s.astype(jnp.float32))


def lstm_block_forward(X, prepared, h0, c0, num_layers, hidden_size,
                       max_time_chunk=128):
    """X: (B, T, input_size) batch_first. Returns (B, T, 2*hidden_size) f32."""
    B, T, _ = X.shape
    H = hidden_size
    Hp = _round_up(H, 128)
    Bp = _round_up(B, 8)

    Tt = _choose_time_chunk(T, max_time_chunk)
    Tc = T // Tt
    unroll = True if Tt <= 16 else 4

    # Time-major, batch padded to a sublane multiple.  bf16 here is identical
    # to casting inside the kernel (the MXU operand is bf16 either way).
    x = jnp.transpose(X, (1, 0, 2)).astype(jnp.bfloat16)      # (T, B, D)
    x = jnp.pad(x, ((0, 0), (0, Bp - B), (0, 0)))             # (T, Bp, D)

    h0p = _pad_state(h0, Bp, Hp)
    c0p = _pad_state(c0, Bp, Hp)

    kernel = functools.partial(_lstm_layer_kernel, hp=Hp, tt=Tt, unroll=unroll)

    def t_block(d, t):
        # forward visits time chunks 0..Tc-1; backward visits Tc-1..0
        return (1 - d) * t + d * (Tc - 1 - t)

    for layer in range(num_layers):
        wih, whh, b = prepared[layer]
        dp = wih.shape[1]
        h0_l = h0p[2 * layer:2 * layer + 2]                   # (2, Bp, Hp)
        c0_l = c0p[2 * layer:2 * layer + 2]
        # Intermediate activations only feed the next layer's bf16 matmul ->
        # store them in bf16 (half the HBM traffic); final layer stays f32.
        out_dtype = jnp.float32 if layer == num_layers - 1 else jnp.bfloat16

        x = pl.pallas_call(
            kernel,
            out_shape=jax.ShapeDtypeStruct((T, Bp, 2 * Hp), out_dtype),
            grid_spec=pltpu.PrefetchScalarGridSpec(
                num_scalar_prefetch=0,
                grid=(2, Tc),                                 # (direction, time chunk)
                in_specs=[
                    pl.BlockSpec((Tt, Bp, dp), lambda d, t: (t_block(d, t), 0, 0)),
                    pl.BlockSpec((1, dp, 4 * Hp), lambda d, t: (d, 0, 0)),
                    pl.BlockSpec((1, Hp, 4 * Hp), lambda d, t: (d, 0, 0)),
                    pl.BlockSpec((1, 1, 4 * Hp), lambda d, t: (d, 0, 0)),
                    pl.BlockSpec((1, Bp, Hp), lambda d, t: (d, 0, 0)),
                    pl.BlockSpec((1, Bp, Hp), lambda d, t: (d, 0, 0)),
                ],
                out_specs=pl.BlockSpec((Tt, Bp, Hp),
                                       lambda d, t: (t_block(d, t), 0, d)),
                scratch_shapes=[
                    pltpu.VMEM((Bp, Hp), jnp.float32),            # h state
                    pltpu.VMEM((Bp, Hp), jnp.float32),            # c state
                    pltpu.VMEM((Tt, Bp, 4 * Hp), jnp.float32),    # hoisted x-projection
                ],
            ),
            compiler_params=pltpu.CompilerParams(
                dimension_semantics=("parallel", "arbitrary"),
                vmem_limit_bytes=48 * 1024 * 1024,     # stays under v7x's 64 MiB / TC
            ),
        )(x, wih, whh, b, h0_l, c0_l)
        # x is now the padded bidirectional output (T, Bp, 2*Hp): next layer's input.

    # Strip batch / hidden padding once, at the very end.
    fwd = x[:, :B, :H]
    bwd = x[:, :B, Hp:Hp + H]
    out = jnp.concatenate([fwd, bwd], axis=-1)                # (T, B, 2H)
    return jnp.transpose(out, (1, 0, 2)).astype(jnp.float32)  # batch_first (B, T, 2H)


if __name__ == "__main__":
    batch = 2
    seq = 8
    input_size = 4
    hidden_size = 32
    num_layers = 2

    key = jax.random.PRNGKey(0)
    k_x, k_p, k_h, k_c = jax.random.split(key, 4)

    X = jax.random.normal(k_x, (batch, seq, input_size), jnp.float32)
    params = init_lstm_params(k_p, input_size, hidden_size, num_layers)
    prepared = prepare_params(params, input_size, hidden_size)

    # The PyTorch forward draws fresh randn h0/c0 each call; we draw them
    # deterministically from a fixed key instead.
    h0 = jax.random.normal(k_h, (num_layers * 2, batch, hidden_size), jnp.float32)
    c0 = jax.random.normal(k_c, (num_layers * 2, batch, hidden_size), jnp.float32)

    fwd_fn = jax.jit(functools.partial(lstm_block_forward,
                                       num_layers=num_layers,
                                       hidden_size=hidden_size))
    out = fwd_fn(X, prepared, h0, c0)
    out = jax.block_until_ready(out)

    assert out.shape == (batch, seq, 2 * hidden_size), out.shape
    assert out.dtype == jnp.float32
    assert bool(jnp.all(jnp.isfinite(out)))
    print("KERNEL_OK")
</pallas_src>

<mosaic_0001>
module attributes {stable_mosaic.version = 11 : i64} {
  func.func @_lstm_layer_kernel(%arg0: i32, %arg1: i32, %arg2: memref<8x8x256xbf16, #tpu.memory_space<vmem>>, %arg3: memref<1x256x512xbf16, #tpu.memory_space<vmem>>, %arg4: memref<1x128x512xbf16, #tpu.memory_space<vmem>>, %arg5: memref<1x1x512xf32, #tpu.memory_space<vmem>>, %arg6: memref<1x8x128xf32, #tpu.memory_space<vmem>>, %arg7: memref<1x8x128xf32, #tpu.memory_space<vmem>>, %arg8: memref<8x8x128xf32, #tpu.memory_space<vmem>>, %arg9: memref<8x128xf32, #tpu.memory_space<vmem>>, %arg10: memref<8x128xf32, #tpu.memory_space<vmem>>, %arg11: memref<8x8x512xf32, #tpu.memory_space<vmem>>) attributes {dimension_semantics = [#tpu.dimension_semantics<parallel>, #tpu.dimension_semantics<arbitrary>], iteration_bounds = array<i64: 2, 1>, scalar_prefetch = 0 : i64, scratch_operands = 3 : i64, tpu.core_type = #tpu.core_type<tc>, window_params = [{transform_indices = @transform_0, window_bounds = array<i64: 8, 8, 256>}, {transform_indices = @transform_1, window_bounds = array<i64: 1, 256, 512>}, {transform_indices = @transform_2, window_bounds = array<i64: 1, 128, 512>}, {transform_indices = @transform_3, window_bounds = array<i64: 1, 1, 512>}, {transform_indices = @transform_4, window_bounds = array<i64: 1, 8, 128>}, {transform_indices = @transform_5, window_bounds = array<i64: 1, 8, 128>}, {transform_indices = @transform_6, window_bounds = array<i64: 8, 8, 128>}]} {
    %c0_i32 = arith.constant 0 : i32
    %0 = arith.cmpi eq, %arg1, %c0_i32 : i32
    %1 = arith.extui %0 : i1 to i32
    %c0_i32_0 = arith.constant 0 : i32
    %2 = arith.cmpi ne, %1, %c0_i32_0 : i32
    scf.if %2 {
      %c0_160 = arith.constant 0 : index
      %c0_161 = arith.constant 0 : index
      %c0_162 = arith.constant 0 : index
      %368 = vector.load %arg6[%c0_160, %c0_161, %c0_162] : memref<1x8x128xf32, #tpu.memory_space<vmem>>, vector<1x8x128xf32>
      %369 = vector.shape_cast %368 : vector<1x8x128xf32> to vector<8x128xf32>
      %c0_163 = arith.constant 0 : index
      %c0_164 = arith.constant 0 : index
      %370 = vector.load %arg9[%c0_163, %c0_164] : memref<8x128xf32, #tpu.memory_space<vmem>>, vector<8x128xf32>
      tpu.vector_store %arg9[%c0_163, %c0_164], %369 {strides = array<i32>} : memref<8x128xf32, #tpu.memory_space<vmem>>, vector<8x128xf32>,
      %c0_165 = arith.constant 0 : index
      %c0_166 = arith.constant 0 : index
      %c0_167 = arith.constant 0 : index
      %371 = vector.load %arg7[%c0_165, %c0_166, %c0_167] : memref<1x8x128xf32, #tpu.memory_space<vmem>>, vector<1x8x128xf32>
      %372 = vector.shape_cast %371 : vector<1x8x128xf32> to vector<8x128xf32>
      %c0_168 = arith.constant 0 : index
      %c0_169 = arith.constant 0 : index
      %373 = vector.load %arg10[%c0_168, %c0_169] : memref<8x128xf32, #tpu.memory_space<vmem>>, vector<8x128xf32>
      tpu.vector_store %arg10[%c0_168, %c0_169], %372 {strides = array<i32>} : memref<8x128xf32, #tpu.memory_space<vmem>>, vector<8x128xf32>,
    } else {
    }
    %c0 = arith.constant 0 : index
    %c0_1 = arith.constant 0 : index
    %c0_2 = arith.constant 0 : index
    %3 = vector.load %arg2[%c0, %c0_1, %c0_2] : memref<8x8x256xbf16, #tpu.memory_space<vmem>>, vector<8x8x256xbf16>
    %4 = vector.shape_cast %3 : vector<8x8x256xbf16> to vector<64x256xbf16>
    %c0_3 = arith.constant 0 : index
    %c0_4 = arith.constant 0 : index
    %c0_5 = arith.constant 0 : index
    %5 = vector.load %arg3[%c0_3, %c0_4, %c0_5] : memref<1x256x512xbf16, #tpu.memory_space<vmem>>, vector<1x256x512xbf16>
    %6 = vector.shape_cast %5 : vector<1x256x512xbf16> to vector<256x512xbf16>
    %cst = arith.constant dense<0.000000e+00> : vector<64x512xf32>
    %7 = tpu.matmul %4, %6, %cst {dimension_numbers = #tpu.dot_dimension_numbers<[1], [0], [0], [1], [0, 0, 1, 1], [], []>} : vector<64x256xbf16>, vector<256x512xbf16>, vector<64x512xf32> -> vector<64x512xf32>
    %c0_6 = arith.constant 0 : index
    %c0_7 = arith.constant 0 : index
    %c0_8 = arith.constant 0 : index
    %8 = vector.load %arg5[%c0_6, %c0_7, %c0_8] : memref<1x1x512xf32, #tpu.memory_space<vmem>>, vector<1x1x512xf32>
    %9 = vector.shape_cast %8 : vector<1x1x512xf32> to vector<1x512xf32>
    %10 = vector.broadcast %9 : vector<1x512xf32> to vector<64x512xf32>
    %11 = arith.addf %7, %10 : vector<64x512xf32>
    %12 = vector.shape_cast %11 : vector<64x512xf32> to vector<8x8x512xf32>
    %c0_9 = arith.constant 0 : index
    %c0_10 = arith.constant 0 : index
    %c0_11 = arith.constant 0 : index
    %13 = vector.load %arg11[%c0_9, %c0_10, %c0_11] : memref<8x8x512xf32, #tpu.memory_space<vmem>>, vector<8x8x512xf32>
    tpu.vector_store %arg11[%c0_9, %c0_10, %c0_11], %12 {strides = array<i32>} : memref<8x8x512xf32, #tpu.memory_space<vmem>>, vector<8x8x512xf32>,
    %c0_12 = arith.constant 0 : index
    %c0_13 = arith.constant 0 : index
    %c0_14 = arith.constant 0 : index
    %14 = vector.load %arg4[%c0_12, %c0_13, %c0_14] : memref<1x128x512xbf16, #tpu.memory_space<vmem>>, vector<1x128x512xbf16>
    %15 = vector.shape_cast %14 : vector<1x128x512xbf16> to vector<128x512xbf16>
    %c0_i32_15 = arith.constant 0 : i32
    %c1_i32 = arith.constant 1 : i32
    %16 = arith.subi %c1_i32, %arg0 : i32
    %17 = arith.muli %16, %c0_i32_15 : i32
    %c7_i32 = arith.constant 7 : i32
    %18 = arith.subi %c7_i32, %c0_i32_15 : i32
    %19 = arith.muli %arg0, %18 : i32
    %20 = arith.addi %17, %19 : i32
    %21 = arith.index_cast %20 : i32 to index
    %c0_16 = arith.constant 0 : index
    %c0_17 = arith.constant 0 : index
    %22 = vector.load %arg11[%21, %c0_16, %c0_17] : memref<8x8x512xf32, #tpu.memory_space<vmem>>, vector<1x8x512xf32>
    %23 = vector.shape_cast %22 : vector<1x8x512xf32> to vector<8x512xf32>
    %c0_18 = arith.constant 0 : index
    %c0_19 = arith.constant 0 : index
    %24 = vector.load %arg9[%c0_18, %c0_19] : memref<8x128xf32, #tpu.memory_space<vmem>>, vector<8x128xf32>
    %c0_20 = arith.constant 0 : index
    %c0_21 = arith.constant 0 : index
    %25 = vector.load %arg10[%c0_20, %c0_21] : memref<8x128xf32, #tpu.memory_space<vmem>>, vector<8x128xf32>
    %26 = arith.truncf %24 : vector<8x128xf32> to vector<8x128xbf16>
    %cst_22 = arith.constant dense<0.000000e+00> : vector<8x512xf32>
    %27 = tpu.matmul %26, %15, %cst_22 {dimension_numbers = #tpu.dot_dimension_numbers<[1], [0], [0], [1], [0, 0, 1, 1], [], []>} : vector<8x128xbf16>, vector<128x512xbf16>, vector<8x512xf32> -> vector<8x512xf32>
    %28 = arith.addf %23, %27 : vector<8x512xf32>
    %29 = vector.extract_strided_slice %28 {offsets = [0, 0], sizes = [8, 128], strides = [1, 1]} : vector<8x512xf32> to vector<8x128xf32>
    %30 = arith.negf %29 : vector<8x128xf32>
    %31 = math.exp %30 : vector<8x128xf32>
    %cst_23 = arith.constant 1.000000e+00 : f32
    %32 = vector.broadcast %cst_23 : f32 to vector<8x128xf32>
    %33 = arith.addf %32, %31 : vector<8x128xf32>
    %34 = arith.divf %32, %33 : vector<8x128xf32>
    %35 = vector.extract_strided_slice %28 {offsets = [0, 128], sizes = [8, 128], strides = [1, 1]} : vector<8x512xf32> to vector<8x128xf32>
    %36 = arith.negf %35 : vector<8x128xf32>
    %37 = math.exp %36 : vector<8x128xf32>
    %cst_24 = arith.constant 1.000000e+00 : f32
    %38 = vector.broadcast %cst_24 : f32 to vector<8x128xf32>
    %39 = arith.addf %38, %37 : vector<8x128xf32>
    %40 = arith.divf %38, %39 : vector<8x128xf32>
    %41 = vector.extract_strided_slice %28 {offsets = [0, 256], sizes = [8, 128], strides = [1, 1]} : vector<8x512xf32> to vector<8x128xf32>
    %42 = math.tanh %41 : vector<8x128xf32>
    %43 = vector.extract_strided_slice %28 {offsets = [0, 384], sizes = [8, 128], strides = [1, 1]} : vector<8x512xf32> to vector<8x128xf32>
    %44 = arith.negf %43 : vector<8x128xf32>
    %45 = math.exp %44 : vector<8x128xf32>
    %cst_25 = arith.constant 1.000000e+00 : f32
    %46 = vector.broadcast %cst_25 : f32 to vector<8x128xf32>
    %47 = arith.addf %46, %45 : vector<8x128xf32>
    %48 = arith.divf %46, %47 : vector<8x128xf32>
    %49 = arith.mulf %40, %25 : vector<8x128xf32>
    %50 = arith.mulf %34, %42 : vector<8x128xf32>
    %51 = arith.addf %49, %50 : vector<8x128xf32>
    %52 = math.tanh %51 : vector<8x128xf32>
    %53 = arith.mulf %48, %52 : vector<8x128xf32>
    %c0_26 = arith.constant 0 : index
    %c0_27 = arith.constant 0 : index
    %54 = vector.load %arg10[%c0_26, %c0_27] : memref<8x128xf32, #tpu.memory_space<vmem>>, vector<8x128xf32>
    tpu.vector_store %arg10[%c0_26, %c0_27], %51 {strides = array<i32>} : memref<8x128xf32, #tpu.memory_space<vmem>>, vector<8x128xf32>,
    %c0_28 = arith.constant 0 : index
    %c0_29 = arith.constant 0 : index
    %55 = vector.load %arg9[%c0_28, %c0_29] : memref<8x128xf32, #tpu.memory_space<vmem>>, vector<8x128xf32>
    tpu.vector_store %arg9[%c0_28, %c0_29], %53 {strides = array<i32>} : memref<8x128xf32, #tpu.memory_space<vmem>>, vector<8x128xf32>,
    %56 = arith.index_cast %20 : i32 to index
    %c0_30 = arith.constant 0 : index
    %c0_31 = arith.constant 0 : index
    %57 = vector.load %arg8[%56, %c0_30, %c0_31] : memref<8x8x128xf32, #tpu.memory_space<vmem>>, vector<1x8x128xf32>
    %58 = vector.shape_cast %57 : vector<1x8x128xf32> to vector<8x128xf32>
    %59 = vector.shape_cast %53 : vector<8x128xf32> to vector<1x8x128xf32>
    tpu.vector_store %arg8[%56, %c0_30, %c0_31], %59 {strides = array<i32>} : memref<8x8x128xf32, #tpu.memory_space<vmem>>, vector<1x8x128xf32>,
    %c1_i32_32 = arith.constant 1 : i32
    %c1_i32_33 = arith.constant 1 : i32
    %60 = arith.subi %c1_i32_33, %arg0 : i32
    %61 = arith.muli %60, %c1_i32_32 : i32
    %c7_i32_34 = arith.constant 7 : i32
    %62 = arith.subi %c7_i32_34, %c1_i32_32 : i32
    %63 = arith.muli %arg0, %62 : i32
    %64 = arith.addi %61, %63 : i32
    %65 = arith.index_cast %64 : i32 to index
    %c0_35 = arith.constant 0 : index
    %c0_36 = arith.constant 0 : index
    %66 = vector.load %arg11[%65, %c0_35, %c0_36] : memref<8x8x512xf32, #tpu.memory_space<vmem>>, vector<1x8x512xf32>
    %67 = vector.shape_cast %66 : vector<1x8x512xf32> to vector<8x512xf32>
    %c0_37 = arith.constant 0 : index
    %c0_38 = arith.constant 0 : index
    %68 = vector.load %arg9[%c0_37, %c0_38] : memref<8x128xf32, #tpu.memory_space<vmem>>, vector<8x128xf32>
    %c0_39 = arith.constant 0 : index
    %c0_40 = arith.constant 0 : index
    %69 = vector.load %arg10[%c0_39, %c0_40] : memref<8x128xf32, #tpu.memory_space<vmem>>, vector<8x128xf32>
    %70 = arith.truncf %68 : vector<8x128xf32> to vector<8x128xbf16>
    %cst_41 = arith.constant dense<0.000000e+00> : vector<8x512xf32>
    %71 = tpu.matmul %70, %15, %cst_41 {dimension_numbers = #tpu.dot_dimension_numbers<[1], [0], [0], [1], [0, 0, 1, 1], [], []>} : vector<8x128xbf16>, vector<128x512xbf16>, vector<8x512xf32> -> vector<8x512xf32>
    %72 = arith.addf %67, %71 : vector<8x512xf32>
    %73 = vector.extract_strided_slice %72 {offsets = [0, 0], sizes = [8, 128], strides = [1, 1]} : vector<8x512xf32> to vector<8x128xf32>
    %74 = arith.negf %73 : vector<8x128xf32>
    %75 = math.exp %74 : vector<8x128xf32>
    %cst_42 = arith.constant 1.000000e+00 : f32
    %76 = vector.broadcast %cst_42 : f32 to vector<8x128xf32>
    %77 = arith.addf %76, %75 : vector<8x128xf32>
    %78 = arith.divf %76, %77 : vector<8x128xf32>
    %79 = vector.extract_strided_slice %72 {offsets = [0, 128], sizes = [8, 128], strides = [1, 1]} : vector<8x512xf32> to vector<8x128xf32>
    %80 = arith.negf %79 : vector<8x128xf32>
    %81 = math.exp %80 : vector<8x128xf32>
    %cst_43 = arith.constant 1.000000e+00 : f32
    %82 = vector.broadcast %cst_43 : f32 to vector<8x128xf32>
    %83 = arith.addf %82, %81 : vector<8x128xf32>
    %84 = arith.divf %82, %83 : vector<8x128xf32>
    %85 = vector.extract_strided_slice %72 {offsets = [0, 256], sizes = [8, 128], strides = [1, 1]} : vector<8x512xf32> to vector<8x128xf32>
    %86 = math.tanh %85 : vector<8x128xf32>
    %87 = vector.extract_strided_slice %72 {offsets = [0, 384], sizes = [8, 128], strides = [1, 1]} : vector<8x512xf32> to vector<8x128xf32>
    %88 = arith.negf %87 : vector<8x128xf32>
    %89 = math.exp %88 : vector<8x128xf32>
    %cst_44 = arith.constant 1.000000e+00 : f32
    %90 = vector.broadcast %cst_44 : f32 to vector<8x128xf32>
    %91 = arith.addf %90, %89 : vector<8x128xf32>
    %92 = arith.divf %90, %91 : vector<8x128xf32>
    %93 = arith.mulf %84, %69 : vector<8x128xf32>
    %94 = arith.mulf %78, %86 : vector<8x128xf32>
    %95 = arith.addf %93, %94 : vector<8x128xf32>
    %96 = math.tanh %95 : vector<8x128xf32>
    %97 = arith.mulf %92, %96 : vector<8x128xf32>
    %c0_45 = arith.constant 0 : index
    %c0_46 = arith.constant 0 : index
    %98 = vector.load %arg10[%c0_45, %c0_46] : memref<8x128xf32, #tpu.memory_space<vmem>>, vector<8x128xf32>
    tpu.vector_store %arg10[%c0_45, %c0_46], %95 {strides = array<i32>} : memref<8x128xf32, #tpu.memory_space<vmem>>, vector<8x128xf32>,
    %c0_47 = arith.constant 0 : index
    %c0_48 = arith.constant 0 : index
    %99 = vector.load %arg9[%c0_47, %c0_48] : memref<8x128xf32, #tpu.memory_space<vmem>>, vector<8x128xf32>
    tpu.vector_store %arg9[%c0_47, %c0_48], %97 {strides = array<i32>} : memref<8x128xf32, #tpu.memory_space<vmem>>, vector<8x128xf32>,
    %100 = arith.index_cast %64 : i32 to index
    %c0_49 = arith.constant 0 : index
    %c0_50 = arith.constant 0 : index
    %101 = vector.load %arg8[%100, %c0_49, %c0_50] : memref<8x8x128xf32, #tpu.memory_space<vmem>>, vector<1x8x128xf32>
    %102 = vector.shape_cast %101 : vector<1x8x128xf32> to vector<8x128xf32>
    %103 = vector.shape_cast %97 : vector<8x128xf32> to vector<1x8x128xf32>
    tpu.vector_store %arg8[%100, %c0_49, %c0_50], %103 {strides = array<i32>} : memref<8x8x128xf32, #tpu.memory_space<vmem>>, vector<1x8x128xf32>,
    %c2_i32 = arith.constant 2 : i32
    %c1_i32_51 = arith.constant 1 : i32
    %104 = arith.subi %c1_i32_51, %arg0 : i32
    %105 = arith.muli %104, %c2_i32 : i32
    %c7_i32_52 = arith.constant 7 : i32
    %106 = arith.subi %c7_i32_52, %c2_i32 : i32
    %107 = arith.muli %arg0, %106 : i32
    %108 = arith.addi %105, %107 : i32
    %109 = arith.index_cast %108 : i32 to index
    %c0_53 = arith.constant 0 : index
    %c0_54 = arith.constant 0 : index
    %110 = vector.load %arg11[%109, %c0_53, %c0_54] : memref<8x8x512xf32, #tpu.memory_space<vmem>>, vector<1x8x512xf32>
    %111 = vector.shape_cast %110 : vector<1x8x512xf32> to vector<8x512xf32>
    %c0_55 = arith.constant 0 : index
    %c0_56 = arith.constant 0 : index
    %112 = vector.load %arg9[%c0_55, %c0_56] : memref<8x128xf32, #tpu.memory_space<vmem>>, vector<8x128xf32>
    %c0_57 = arith.constant 0 : index
    %c0_58 = arith.constant 0 : index
    %113 = vector.load %arg10[%c0_57, %c0_58] : memref<8x128xf32, #tpu.memory_space<vmem>>, vector<8x128xf32>
    %114 = arith.truncf %112 : vector<8x128xf32> to vector<8x128xbf16>
    %cst_59 = arith.constant dense<0.000000e+00> : vector<8x512xf32>
    %115 = tpu.matmul %114, %15, %cst_59 {dimension_numbers = #tpu.dot_dimension_numbers<[1], [0], [0], [1], [0, 0, 1, 1], [], []>} : vector<8x128xbf16>, vector<128x512xbf16>, vector<8x512xf32> -> vector<8x512xf32>
    %116 = arith.addf %111, %115 : vector<8x512xf32>
    %117 = vector.extract_strided_slice %116 {offsets = [0, 0], sizes = [8, 128], strides = [1, 1]} : vector<8x512xf32> to vector<8x128xf32>
    %118 = arith.negf %117 : vector<8x128xf32>
    %119 = math.exp %118 : vector<8x128xf32>
    %cst_60 = arith.constant 1.000000e+00 : f32
    %120 = vector.broadcast %cst_60 : f32 to vector<8x128xf32>
    %121 = arith.addf %120, %119 : vector<8x128xf32>
    %122 = arith.divf %120, %121 : vector<8x128xf32>
    %123 = vector.extract_strided_slice %116 {offsets = [0, 128], sizes = [8, 128], strides = [1, 1]} : vector<8x512xf32> to vector<8x128xf32>
    %124 = arith.negf %123 : vector<8x128xf32>
    %125 = math.exp %124 : vector<8x128xf32>
    %cst_61 = arith.constant 1.000000e+00 : f32
    %126 = vector.broadcast %cst_61 : f32 to vector<8x128xf32>
    %127 = arith.addf %126, %125 : vector<8x128xf32>
    %128 = arith.divf %126, %127 : vector<8x128xf32>
    %129 = vector.extract_strided_slice %116 {offsets = [0, 256], sizes = [8, 128], strides = [1, 1]} : vector<8x512xf32> to vector<8x128xf32>
    %130 = math.tanh %129 : vector<8x128xf32>
    %131 = vector.extract_strided_slice %116 {offsets = [0, 384], sizes = [8, 128], strides = [1, 1]} : vector<8x512xf32> to vector<8x128xf32>
    %132 = arith.negf %131 : vector<8x128xf32>
    %133 = math.exp %132 : vector<8x128xf32>
    %cst_62 = arith.constant 1.000000e+00 : f32
    %134 = vector.broadcast %cst_62 : f32 to vector<8x128xf32>
    %135 = arith.addf %134, %133 : vector<8x128xf32>
    %136 = arith.divf %134, %135 : vector<8x128xf32>
    %137 = arith.mulf %128, %113 : vector<8x128xf32>
    %138 = arith.mulf %122, %130 : vector<8x128xf32>
    %139 = arith.addf %137, %138 : vector<8x128xf32>
    %140 = math.tanh %139 : vector<8x128xf32>
    %141 = arith.mulf %136, %140 : vector<8x128xf32>
    %c0_63 = arith.constant 0 : index
    %c0_64 = arith.constant 0 : index
    %142 = vector.load %arg10[%c0_63, %c0_64] : memref<8x128xf32, #tpu.memory_space<vmem>>, vector<8x128xf32>
    tpu.vector_store %arg10[%c0_63, %c0_64], %139 {strides = array<i32>} : memref<8x128xf32, #tpu.memory_space<vmem>>, vector<8x128xf32>,
    %c0_65 = arith.constant 0 : index
    %c0_66 = arith.constant 0 : index
    %143 = vector.load %arg9[%c0_65, %c0_66] : memref<8x128xf32, #tpu.memory_space<vmem>>, vector<8x128xf32>
    tpu.vector_store %arg9[%c0_65, %c0_66], %141 {strides = array<i32>} : memref<8x128xf32, #tpu.memory_space<vmem>>, vector<8x128xf32>,
    %144 = arith.index_cast %108 : i32 to index
    %c0_67 = arith.constant 0 : index
    %c0_68 = arith.constant 0 : index
    %145 = vector.load %arg8[%144, %c0_67, %c0_68] : memref<8x8x128xf32, #tpu.memory_space<vmem>>, vector<1x8x128xf32>
    %146 = vector.shape_cast %145 : vector<1x8x128xf32> to vector<8x128xf32>
    %147 = vector.shape_cast %141 : vector<8x128xf32> to vector<1x8x128xf32>
    tpu.vector_store %arg8[%144, %c0_67, %c0_68], %147 {strides = array<i32>} : memref<8x8x128xf32, #tpu.memory_space<vmem>>, vector<1x8x128xf32>,
    %c3_i32 = arith.constant 3 : i32
    %c1_i32_69 = arith.constant 1 : i32
    %148 = arith.subi %c1_i32_69, %arg0 : i32
    %149 = arith.muli %148, %c3_i32 : i32
    %c7_i32_70 = arith.constant 7 : i32
    %150 = arith.subi %c7_i32_70, %c3_i32 : i32
    %151 = arith.muli %arg0, %150 : i32
    %152 = arith.addi %149, %151 : i32
    %153 = arith.index_cast %152 : i32 to index
    %c0_71 = arith.constant 0 : index
    %c0_72 = arith.constant 0 : index
    %154 = vector.load %arg11[%153, %c0_71, %c0_72] : memref<8x8x512xf32, #tpu.memory_space<vmem>>, vector<1x8x512xf32>
    %155 = vector.shape_cast %154 : vector<1x8x512xf32> to vector<8x512xf32>
    %c0_73 = arith.constant 0 : index
    %c0_74 = arith.constant 0 : index
    %156 = vector.load %arg9[%c0_73, %c0_74] : memref<8x128xf32, #tpu.memory_space<vmem>>, vector<8x128xf32>
    %c0_75 = arith.constant 0 : index
    %c0_76 = arith.constant 0 : index
    %157 = vector.load %arg10[%c0_75, %c0_76] : memref<8x128xf32, #tpu.memory_space<vmem>>, vector<8x128xf32>
    %158 = arith.truncf %156 : vector<8x128xf32> to vector<8x128xbf16>
    %cst_77 = arith.constant dense<0.000000e+00> : vector<8x512xf32>
    %159 = tpu.matmul %158, %15, %cst_77 {dimension_numbers = #tpu.dot_dimension_numbers<[1], [0], [0], [1], [0, 0, 1, 1], [], []>} : vector<8x128xbf16>, vector<128x512xbf16>, vector<8x512xf32> -> vector<8x512xf32>
    %160 = arith.addf %155, %159 : vector<8x512xf32>
    %161 = vector.extract_strided_slice %160 {offsets = [0, 0], sizes = [8, 128], strides = [1, 1]} : vector<8x512xf32> to vector<8x128xf32>
    %162 = arith.negf %161 : vector<8x128xf32>
    %163 = math.exp %162 : vector<8x128xf32>
    %cst_78 = arith.constant 1.000000e+00 : f32
    %164 = vector.broadcast %cst_78 : f32 to vector<8x128xf32>
    %165 = arith.addf %164, %163 : vector<8x128xf32>
    %166 = arith.divf %164, %165 : vector<8x128xf32>
    %167 = vector.extract_strided_slice %160 {offsets = [0, 128], sizes = [8, 128], strides = [1, 1]} : vector<8x512xf32> to vector<8x128xf32>
    %168 = arith.negf %167 : vector<8x128xf32>
    %169 = math.exp %168 : vector<8x128xf32>
    %cst_79 = arith.constant 1.000000e+00 : f32
    %170 = vector.broadcast %cst_79 : f32 to vector<8x128xf32>
    %171 = arith.addf %170, %169 : vector<8x128xf32>
    %172 = arith.divf %170, %171 : vector<8x128xf32>
    %173 = vector.extract_strided_slice %160 {offsets = [0, 256], sizes = [8, 128], strides = [1, 1]} : vector<8x512xf32> to vector<8x128xf32>
    %174 = math.tanh %173 : vector<8x128xf32>
    %175 = vector.extract_strided_slice %160 {offsets = [0, 384], sizes = [8, 128], strides = [1, 1]} : vector<8x512xf32> to vector<8x128xf32>
    %176 = arith.negf %175 : vector<8x128xf32>
    %177 = math.exp %176 : vector<8x128xf32>
    %cst_80 = arith.constant 1.000000e+00 : f32
    %178 = vector.broadcast %cst_80 : f32 to vector<8x128xf32>
    %179 = arith.addf %178, %177 : vector<8x128xf32>
    %180 = arith.divf %178, %179 : vector<8x128xf32>
    %181 = arith.mulf %172, %157 : vector<8x128xf32>
    %182 = arith.mulf %166, %174 : vector<8x128xf32>
    %183 = arith.addf %181, %182 : vector<8x128xf32>
    %184 = math.tanh %183 : vector<8x128xf32>
    %185 = arith.mulf %180, %184 : vector<8x128xf32>
    %c0_81 = arith.constant 0 : index
    %c0_82 = arith.constant 0 : index
    %186 = vector.load %arg10[%c0_81, %c0_82] : memref<8x128xf32, #tpu.memory_space<vmem>>, vector<8x128xf32>
    tpu.vector_store %arg10[%c0_81, %c0_82], %183 {strides = array<i32>} : memref<8x128xf32, #tpu.memory_space<vmem>>, vector<8x128xf32>,
    %c0_83 = arith.constant 0 : index
    %c0_84 = arith.constant 0 : index
    %187 = vector.load %arg9[%c0_83, %c0_84] : memref<8x128xf32, #tpu.memory_space<vmem>>, vector<8x128xf32>
    tpu.vector_store %arg9[%c0_83, %c0_84], %185 {strides = array<i32>} : memref<8x128xf32, #tpu.memory_space<vmem>>, vector<8x128xf32>,
    %188 = arith.index_cast %152 : i32 to index
    %c0_85 = arith.constant 0 : index
    %c0_86 = arith.constant 0 : index
    %189 = vector.load %arg8[%188, %c0_85, %c0_86] : memref<8x8x128xf32, #tpu.memory_space<vmem>>, vector<1x8x128xf32>
    %190 = vector.shape_cast %189 : vector<1x8x128xf32> to vector<8x128xf32>
    %191 = vector.shape_cast %185 : vector<8x128xf32> to vector<1x8x128xf32>
    tpu.vector_store %arg8[%188, %c0_85, %c0_86], %191 {strides = array<i32>} : memref<8x8x128xf32, #tpu.memory_space<vmem>>, vector<1x8x128xf32>,
    %c4_i32 = arith.constant 4 : i32
    %c1_i32_87 = arith.constant 1 : i32
    %192 = arith.subi %c1_i32_87, %arg0 : i32
    %193 = arith.muli %192, %c4_i32 : i32
    %c7_i32_88 = arith.constant 7 : i32
    %194 = arith.subi %c7_i32_88, %c4_i32 : i32
    %195 = arith.muli %arg0, %194 : i32
    %196 = arith.addi %193, %195 : i32
    %197 = arith.index_cast %196 : i32 to index
    %c0_89 = arith.constant 0 : index
    %c0_90 = arith.constant 0 : index
    %198 = vector.load %arg11[%197, %c0_89, %c0_90] : memref<8x8x512xf32, #tpu.memory_space<vmem>>, vector<1x8x512xf32>
    %199 = vector.shape_cast %198 : vector<1x8x512xf32> to vector<8x512xf32>
    %c0_91 = arith.constant 0 : index
    %c0_92 = arith.constant 0 : index
    %200 = vector.load %arg9[%c0_91, %c0_92] : memref<8x128xf32, #tpu.memory_space<vmem>>, vector<8x128xf32>
    %c0_93 = arith.constant 0 : index
    %c0_94 = arith.constant 0 : index
    %201 = vector.load %arg10[%c0_93, %c0_94] : memref<8x128xf32, #tpu.memory_space<vmem>>, vector<8x128xf32>
    %202 = arith.truncf %200 : vector<8x128xf32> to vector<8x128xbf16>
    %cst_95 = arith.constant dense<0.000000e+00> : vector<8x512xf32>
    %203 = tpu.matmul %202, %15, %cst_95 {dimension_numbers = #tpu.dot_dimension_numbers<[1], [0], [0], [1], [0, 0, 1, 1], [], []>} : vector<8x128xbf16>, vector<128x512xbf16>, vector<8x512xf32> -> vector<8x512xf32>
    %204 = arith.addf %199, %203 : vector<8x512xf32>
    %205 = vector.extract_strided_slice %204 {offsets = [0, 0], sizes = [8, 128], strides = [1, 1]} : vector<8x512xf32> to vector<8x128xf32>
    %206 = arith.negf %205 : vector<8x128xf32>
    %207 = math.exp %206 : vector<8x128xf32>
    %cst_96 = arith.constant 1.000000e+00 : f32
    %208 = vector.broadcast %cst_96 : f32 to vector<8x128xf32>
    %209 = arith.addf %208, %207 : vector<8x128xf32>
    %210 = arith.divf %208, %209 : vector<8x128xf32>
    %211 = vector.extract_strided_slice %204 {offsets = [0, 128], sizes = [8, 128], strides = [1, 1]} : vector<8x512xf32> to vector<8x128xf32>
    %212 = arith.negf %211 : vector<8x128xf32>
    %213 = math.exp %212 : vector<8x128xf32>
    %cst_97 = arith.constant 1.000000e+00 : f32
    %214 = vector.broadcast %cst_97 : f32 to vector<8x128xf32>
    %215 = arith.addf %214, %213 : vector<8x128xf32>
    %216 = arith.divf %214, %215 : vector<8x128xf32>
    %217 = vector.extract_strided_slice %204 {offsets = [0, 256], sizes = [8, 128], strides = [1, 1]} : vector<8x512xf32> to vector<8x128xf32>
    %218 = math.tanh %217 : vector<8x128xf32>
    %219 = vector.extract_strided_slice %204 {offsets = [0, 384], sizes = [8, 128], strides = [1, 1]} : vector<8x512xf32> to vector<8x128xf32>
    %220 = arith.negf %219 : vector<8x128xf32>
    %221 = math.exp %220 : vector<8x128xf32>
    %cst_98 = arith.constant 1.000000e+00 : f32
    %222 = vector.broadcast %cst_98 : f32 to vector<8x128xf32>
    %223 = arith.addf %222, %221 : vector<8x128xf32>
    %224 = arith.divf %222, %223 : vector<8x128xf32>
    %225 = arith.mulf %216, %201 : vector<8x128xf32>
    %226 = arith.mulf %210, %218 : vector<8x128xf32>
    %227 = arith.addf %225, %226 : vector<8x128xf32>
    %228 = math.tanh %227 : vector<8x128xf32>
    %229 = arith.mulf %224, %228 : vector<8x128xf32>
    %c0_99 = arith.constant 0 : index
    %c0_100 = arith.constant 0 : index
    %230 = vector.load %arg10[%c0_99, %c0_100] : memref<8x128xf32, #tpu.memory_space<vmem>>, vector<8x128xf32>
    tpu.vector_store %arg10[%c0_99, %c0_100], %227 {strides = array<i32>} : memref<8x128xf32, #tpu.memory_space<vmem>>, vector<8x128xf32>,
    %c0_101 = arith.constant 0 : index
    %c0_102 = arith.constant 0 : index
    %231 = vector.load %arg9[%c0_101, %c0_102] : memref<8x128xf32, #tpu.memory_space<vmem>>, vector<8x128xf32>
    tpu.vector_store %arg9[%c0_101, %c0_102], %229 {strides = array<i32>} : memref<8x128xf32, #tpu.memory_space<vmem>>, vector<8x128xf32>,
    %232 = arith.index_cast %196 : i32 to index
    %c0_103 = arith.constant 0 : index
    %c0_104 = arith.constant 0 : index
    %233 = vector.load %arg8[%232, %c0_103, %c0_104] : memref<8x8x128xf32, #tpu.memory_space<vmem>>, vector<1x8x128xf32>
    %234 = vector.shape_cast %233 : vector<1x8x128xf32> to vector<8x128xf32>
    %235 = vector.shape_cast %229 : vector<8x128xf32> to vector<1x8x128xf32>
    tpu.vector_store %arg8[%232, %c0_103, %c0_104], %235 {strides = array<i32>} : memref<8x8x128xf32, #tpu.memory_space<vmem>>, vector<1x8x128xf32>,
    %c5_i32 = arith.constant 5 : i32
    %c1_i32_105 = arith.constant 1 : i32
    %236 = arith.subi %c1_i32_105, %arg0 : i32
    %237 = arith.muli %236, %c5_i32 : i32
    %c7_i32_106 = arith.constant 7 : i32
    %238 = arith.subi %c7_i32_106, %c5_i32 : i32
    %239 = arith.muli %arg0, %238 : i32
    %240 = arith.addi %237, %239 : i32
    %241 = arith.index_cast %240 : i32 to index
    %c0_107 = arith.constant 0 : index
    %c0_108 = arith.constant 0 : index
    %242 = vector.load %arg11[%241, %c0_107, %c0_108] : memref<8x8x512xf32, #tpu.memory_space<vmem>>, vector<1x8x512xf32>
    %243 = vector.shape_cast %242 : vector<1x8x512xf32> to vector<8x512xf32>
    %c0_109 = arith.constant 0 : index
    %c0_110 = arith.constant 0 : index
    %244 = vector.load %arg9[%c0_109, %c0_110] : memref<8x128xf32, #tpu.memory_space<vmem>>, vector<8x128xf32>
    %c0_111 = arith.constant 0 : index
    %c0_112 = arith.constant 0 : index
    %245 = vector.load %arg10[%c0_111, %c0_112] : memref<8x128xf32, #tpu.memory_space<vmem>>, vector<8x128xf32>
    %246 = arith.truncf %244 : vector<8x128xf32> to vector<8x128xbf16>
    %cst_113 = arith.constant dense<0.000000e+00> : vector<8x512xf32>
    %247 = tpu.matmul %246, %15, %cst_113 {dimension_numbers = #tpu.dot_dimension_numbers<[1], [0], [0], [1], [0, 0, 1, 1], [], []>} : vector<8x128xbf16>, vector<128x512xbf16>, vector<8x512xf32> -> vector<8x512xf32>
    %248 = arith.addf %243, %247 : vector<8x512xf32>
    %249 = vector.extract_strided_slice %248 {offsets = [0, 0], sizes = [8, 128], strides = [1, 1]} : vector<8x512xf32> to vector<8x128xf32>
    %250 = arith.negf %249 : vector<8x128xf32>
    %251 = math.exp %250 : vector<8x128xf32>
    %cst_114 = arith.constant 1.000000e+00 : f32
    %252 = vector.broadcast %cst_114 : f32 to vector<8x128xf32>
    %253 = arith.addf %252, %251 : vector<8x128xf32>
    %254 = arith.divf %252, %253 : vector<8x128xf32>
    %255 = vector.extract_strided_slice %248 {offsets = [0, 128], sizes = [8, 128], strides = [1, 1]} : vector<8x512xf32> to vector<8x128xf32>
    %256 = arith.negf %255 : vector<8x128xf32>
    %257 = math.exp %256 : vector<8x128xf32>
    %cst_115 = arith.constant 1.000000e+00 : f32
    %258 = vector.broadcast %cst_115 : f32 to vector<8x128xf32>
    %259 = arith.addf %258, %257 : vector<8x128xf32>
    %260 = arith.divf %258, %259 : vector<8x128xf32>
    %261 = vector.extract_strided_slice %248 {offsets = [0, 256], sizes = [8, 128], strides = [1, 1]} : vector<8x512xf32> to vector<8x128xf32>
    %262 = math.tanh %261 : vector<8x128xf32>
    %263 = vector.extract_strided_slice %248 {offsets = [0, 384], sizes = [8, 128], strides = [1, 1]} : vector<8x512xf32> to vector<8x128xf32>
    %264 = arith.negf %263 : vector<8x128xf32>
    %265 = math.exp %264 : vector<8x128xf32>
    %cst_116 = arith.constant 1.000000e+00 : f32
    %266 = vector.broadcast %cst_116 : f32 to vector<8x128xf32>
    %267 = arith.addf %266, %265 : vector<8x128xf32>
    %268 = arith.divf %266, %267 : vector<8x128xf32>
    %269 = arith.mulf %260, %245 : vector<8x128xf32>
    %270 = arith.mulf %254, %262 : vector<8x128xf32>
    %271 = arith.addf %269, %270 : vector<8x128xf32>
    %272 = math.tanh %271 : vector<8x128xf32>
    %273 = arith.mulf %268, %272 : vector<8x128xf32>
    %c0_117 = arith.constant 0 : index
    %c0_118 = arith.constant 0 : index
    %274 = vector.load %arg10[%c0_117, %c0_118] : memref<8x128xf32, #tpu.memory_space<vmem>>, vector<8x128xf32>
    tpu.vector_store %arg10[%c0_117, %c0_118], %271 {strides = array<i32>} : memref<8x128xf32, #tpu.memory_space<vmem>>, vector<8x128xf32>,
    %c0_119 = arith.constant 0 : index
    %c0_120 = arith.constant 0 : index
    %275 = vector.load %arg9[%c0_119, %c0_120] : memref<8x128xf32, #tpu.memory_space<vmem>>, vector<8x128xf32>
    tpu.vector_store %arg9[%c0_119, %c0_120], %273 {strides = array<i32>} : memref<8x128xf32, #tpu.memory_space<vmem>>, vector<8x128xf32>,
    %276 = arith.index_cast %240 : i32 to index
    %c0_121 = arith.constant 0 : index
    %c0_122 = arith.constant 0 : index
    %277 = vector.load %arg8[%276, %c0_121, %c0_122] : memref<8x8x128xf32, #tpu.memory_space<vmem>>, vector<1x8x128xf32>
    %278 = vector.shape_cast %277 : vector<1x8x128xf32> to vector<8x128xf32>
    %279 = vector.shape_cast %273 : vector<8x128xf32> to vector<1x8x128xf32>
    tpu.vector_store %arg8[%276, %c0_121, %c0_122], %279 {strides = array<i32>} : memref<8x8x128xf32, #tpu.memory_space<vmem>>, vector<1x8x128xf32>,
    %c6_i32 = arith.constant 6 : i32
    %c1_i32_123 = arith.constant 1 : i32
    %280 = arith.subi %c1_i32_123, %arg0 : i32
    %281 = arith.muli %280, %c6_i32 : i32
    %c7_i32_124 = arith.constant 7 : i32
    %282 = arith.subi %c7_i32_124, %c6_i32 : i32
    %283 = arith.muli %arg0, %282 : i32
    %284 = arith.addi %281, %283 : i32
    %285 = arith.index_cast %284 : i32 to index
    %c0_125 = arith.constant 0 : index
    %c0_126 = arith.constant 0 : index
    %286 = vector.load %arg11[%285, %c0_125, %c0_126] : memref<8x8x512xf32, #tpu.memory_space<vmem>>, vector<1x8x512xf32>
    %287 = vector.shape_cast %286 : vector<1x8x512xf32> to vector<8x512xf32>
    %c0_127 = arith.constant 0 : index
    %c0_128 = arith.constant 0 : index
    %288 = vector.load %arg9[%c0_127, %c0_128] : memref<8x128xf32, #tpu.memory_space<vmem>>, vector<8x128xf32>
    %c0_129 = arith.constant 0 : index
    %c0_130 = arith.constant 0 : index
    %289 = vector.load %arg10[%c0_129, %c0_130] : memref<8x128xf32, #tpu.memory_space<vmem>>, vector<8x128xf32>
    %290 = arith.truncf %288 : vector<8x128xf32> to vector<8x128xbf16>
    %cst_131 = arith.constant dense<0.000000e+00> : vector<8x512xf32>
    %291 = tpu.matmul %290, %15, %cst_131 {dimension_numbers = #tpu.dot_dimension_numbers<[1], [0], [0], [1], [0, 0, 1, 1], [], []>} : vector<8x128xbf16>, vector<128x512xbf16>, vector<8x512xf32> -> vector<8x512xf32>
    %292 = arith.addf %287, %291 : vector<8x512xf32>
    %293 = vector.extract_strided_slice %292 {offsets = [0, 0], sizes = [8, 128], strides = [1, 1]} : vector<8x512xf32> to vector<8x128xf32>
    %294 = arith.negf %293 : vector<8x128xf32>
    %295 = math.exp %294 : vector<8x128xf32>
    %cst_132 = arith.constant 1.000000e+00 : f32
    %296 = vector.broadcast %cst_132 : f32 to vector<8x128xf32>
    %297 = arith.addf %296, %295 : vector<8x128xf32>
    %298 = arith.divf %296, %297 : vector<8x128xf32>
    %299 = vector.extract_strided_slice %292 {offsets = [0, 128], sizes = [8, 128], strides = [1, 1]} : vector<8x512xf32> to vector<8x128xf32>
    %300 = arith.negf %299 : vector<8x128xf32>
    %301 = math.exp %300 : vector<8x128xf32>
    %cst_133 = arith.constant 1.000000e+00 : f32
    %302 = vector.broadcast %cst_133 : f32 to vector<8x128xf32>
    %303 = arith.addf %302, %301 : vector<8x128xf32>
    %304 = arith.divf %302, %303 : vector<8x128xf32>
    %305 = vector.extract_strided_slice %292 {offsets = [0, 256], sizes = [8, 128], strides = [1, 1]} : vector<8x512xf32> to vector<8x128xf32>
    %306 = math.tanh %305 : vector<8x128xf32>
    %307 = vector.extract_strided_slice %292 {offsets = [0, 384], sizes = [8, 128], strides = [1, 1]} : vector<8x512xf32> to vector<8x128xf32>
    %308 = arith.negf %307 : vector<8x128xf32>
    %309 = math.exp %308 : vector<8x128xf32>
    %cst_134 = arith.constant 1.000000e+00 : f32
    %310 = vector.broadcast %cst_134 : f32 to vector<8x128xf32>
    %311 = arith.addf %310, %309 : vector<8x128xf32>
    %312 = arith.divf %310, %311 : vector<8x128xf32>
    %313 = arith.mulf %304, %289 : vector<8x128xf32>
    %314 = arith.mulf %298, %306 : vector<8x128xf32>
    %315 = arith.addf %313, %314 : vector<8x128xf32>
    %316 = math.tanh %315 : vector<8x128xf32>
    %317 = arith.mulf %312, %316 : vector<8x128xf32>
    %c0_135 = arith.constant 0 : index
    %c0_136 = arith.constant 0 : index
    %318 = vector.load %arg10[%c0_135, %c0_136] : memref<8x128xf32, #tpu.memory_space<vmem>>, vector<8x128xf32>
    tpu.vector_store %arg10[%c0_135, %c0_136], %315 {strides = array<i32>} : memref<8x128xf32, #tpu.memory_space<vmem>>, vector<8x128xf32>,
    %c0_137 = arith.constant 0 : index
    %c0_138 = arith.constant 0 : index
    %319 = vector.load %arg9[%c0_137, %c0_138] : memref<8x128xf32, #tpu.memory_space<vmem>>, vector<8x128xf32>
    tpu.vector_store %arg9[%c0_137, %c0_138], %317 {strides = array<i32>} : memref<8x128xf32, #tpu.memory_space<vmem>>, vector<8x128xf32>,
    %320 = arith.index_cast %284 : i32 to index
    %c0_139 = arith.constant 0 : index
    %c0_140 = arith.constant 0 : index
    %321 = vector.load %arg8[%320, %c0_139, %c0_140] : memref<8x8x128xf32, #tpu.memory_space<vmem>>, vector<1x8x128xf32>
    %322 = vector.shape_cast %321 : vector<1x8x128xf32> to vector<8x128xf32>
    %323 = vector.shape_cast %317 : vector<8x128xf32> to vector<1x8x128xf32>
    tpu.vector_store %arg8[%320, %c0_139, %c0_140], %323 {strides = array<i32>} : memref<8x8x128xf32, #tpu.memory_space<vmem>>, vector<1x8x128xf32>,
    %c7_i32_141 = arith.constant 7 : i32
    %c1_i32_142 = arith.constant 1 : i32
    %324 = arith.subi %c1_i32_142, %arg0 : i32
    %325 = arith.muli %324, %c7_i32_141 : i32
    %c7_i32_143 = arith.constant 7 : i32
    %326 = arith.subi %c7_i32_143, %c7_i32_141 : i32
    %327 = arith.muli %arg0, %326 : i32
    %328 = arith.addi %325, %327 : i32
    %329 = arith.index_cast %328 : i32 to index
    %c0_144 = arith.constant 0 : index
    %c0_145 = arith.constant 0 : index
    %330 = vector.load %arg11[%329, %c0_144, %c0_145] : memref<8x8x512xf32, #tpu.memory_space<vmem>>, vector<1x8x512xf32>
    %331 = vector.shape_cast %330 : vector<1x8x512xf32> to vector<8x512xf32>
    %c0_146 = arith.constant 0 : index
    %c0_147 = arith.constant 0 : index
    %332 = vector.load %arg9[%c0_146, %c0_147] : memref<8x128xf32, #tpu.memory_space<vmem>>, vector<8x128xf32>
    %c0_148 = arith.constant 0 : index
    %c0_149 = arith.constant 0 : index
    %333 = vector.load %arg10[%c0_148, %c0_149] : memref<8x128xf32, #tpu.memory_space<vmem>>, vector<8x128xf32>
    %334 = arith.truncf %332 : vector<8x128xf32> to vector<8x128xbf16>
    %cst_150 = arith.constant dense<0.000000e+00> : vector<8x512xf32>
    %335 = tpu.matmul %334, %15, %cst_150 {dimension_numbers = #tpu.dot_dimension_numbers<[1], [0], [0], [1], [0, 0, 1, 1], [], []>} : vector<8x128xbf16>, vector<128x512xbf16>, vector<8x512xf32> -> vector<8x512xf32>
    %336 = arith.addf %331, %335 : vector<8x512xf32>
    %337 = vector.extract_strided_slice %336 {offsets = [0, 0], sizes = [8, 128], strides = [1, 1]} : vector<8x512xf32> to vector<8x128xf32>
    %338 = arith.negf %337 : vector<8x128xf32>
    %339 = math.exp %338 : vector<8x128xf32>
    %cst_151 = arith.constant 1.000000e+00 : f32
    %340 = vector.broadcast %cst_151 : f32 to vector<8x128xf32>
    %341 = arith.addf %340, %339 : vector<8x128xf32>
    %342 = arith.divf %340, %341 : vector<8x128xf32>
    %343 = vector.extract_strided_slice %336 {offsets = [0, 128], sizes = [8, 128], strides = [1, 1]} : vector<8x512xf32> to vector<8x128xf32>
    %344 = arith.negf %343 : vector<8x128xf32>
    %345 = math.exp %344 : vector<8x128xf32>
    %cst_152 = arith.constant 1.000000e+00 : f32
    %346 = vector.broadcast %cst_152 : f32 to vector<8x128xf32>
    %347 = arith.addf %346, %345 : vector<8x128xf32>
    %348 = arith.divf %346, %347 : vector<8x128xf32>
    %349 = vector.extract_strided_slice %336 {offsets = [0, 256], sizes = [8, 128], strides = [1, 1]} : vector<8x512xf32> to vector<8x128xf32>
    %350 = math.tanh %349 : vector<8x128xf32>
    %351 = vector.extract_strided_slice %336 {offsets = [0, 384], sizes = [8, 128], strides = [1, 1]} : vector<8x512xf32> to vector<8x128xf32>
    %352 = arith.negf %351 : vector<8x128xf32>
    %353 = math.exp %352 : vector<8x128xf32>
    %cst_153 = arith.constant 1.000000e+00 : f32
    %354 = vector.broadcast %cst_153 : f32 to vector<8x128xf32>
    %355 = arith.addf %354, %353 : vector<8x128xf32>
    %356 = arith.divf %354, %355 : vector<8x128xf32>
    %357 = arith.mulf %348, %333 : vector<8x128xf32>
    %358 = arith.mulf %342, %350 : vector<8x128xf32>
    %359 = arith.addf %357, %358 : vector<8x128xf32>
    %360 = math.tanh %359 : vector<8x128xf32>
    %361 = arith.mulf %356, %360 : vector<8x128xf32>
    %c0_154 = arith.constant 0 : index
    %c0_155 = arith.constant 0 : index
    %362 = vector.load %arg10[%c0_154, %c0_155] : memref<8x128xf32, #tpu.memory_space<vmem>>, vector<8x128xf32>
    tpu.vector_store %arg10[%c0_154, %c0_155], %359 {strides = array<i32>} : memref<8x128xf32, #tpu.memory_space<vmem>>, vector<8x128xf32>,
    %c0_156 = arith.constant 0 : index
    %c0_157 = arith.constant 0 : index
    %363 = vector.load %arg9[%c0_156, %c0_157] : memref<8x128xf32, #tpu.memory_space<vmem>>, vector<8x128xf32>
    tpu.vector_store %arg9[%c0_156, %c0_157], %361 {strides = array<i32>} : memref<8x128xf32, #tpu.memory_space<vmem>>, vector<8x128xf32>,
    %364 = arith.index_cast %328 : i32 to index
    %c0_158 = arith.constant 0 : index
    %c0_159 = arith.constant 0 : index
    %365 = vector.load %arg8[%364, %c0_158, %c0_159] : memref<8x8x128xf32, #tpu.memory_space<vmem>>, vector<1x8x128xf32>
    %366 = vector.shape_cast %365 : vector<1x8x128xf32> to vector<8x128xf32>
    %367 = vector.shape_cast %361 : vector<8x128xf32> to vector<1x8x128xf32>
    tpu.vector_store %arg8[%364, %c0_158, %c0_159], %367 {strides = array<i32>} : memref<8x8x128xf32, #tpu.memory_space<vmem>>, vector<1x8x128xf32>,
    %c8_i32 = arith.constant 8 : i32
    return
  }
  func.func @transform_0(%arg0: i32, %arg1: i32) -> (i32, i32, i32) {
    %c1_i32 = arith.constant 1 : i32
    %0 = arith.subi %c1_i32, %arg0 : i32
    %1 = arith.muli %0, %arg1 : i32
    %c0_i32 = arith.constant 0 : i32
    %2 = arith.subi %c0_i32, %arg1 : i32
    %3 = arith.muli %arg0, %2 : i32
    %4 = arith.addi %1, %3 : i32
    %c0_i32_0 = arith.constant 0 : i32
    %c0_i32_1 = arith.constant 0 : i32
    %c0_i32_2 = arith.constant 0 : i32
    return %4, %c0_i32_0, %c0_i32_1 : i32, i32, i32
  }
  func.func @transform_1(%arg0: i32, %arg1: i32) -> (i32, i32, i32) {
    %c0_i32 = arith.constant 0 : i32
    %c0_i32_0 = arith.constant 0 : i32
    %c0_i32_1 = arith.constant 0 : i32
    return %arg0, %c0_i32, %c0_i32_0 : i32, i32, i32
  }
  func.func @transform_2(%arg0: i32, %arg1: i32) -> (i32, i32, i32) {
    %c0_i32 = arith.constant 0 : i32
    %c0_i32_0 = arith.constant 0 : i32
    %c0_i32_1 = arith.constant 0 : i32
    return %arg0, %c0_i32, %c0_i32_0 : i32, i32, i32
  }
  func.func @transform_3(%arg0: i32, %arg1: i32) -> (i32, i32, i32) {
    %c0_i32 = arith.constant 0 : i32
    %c0_i32_0 = arith.constant 0 : i32
    %c0_i32_1 = arith.constant 0 : i32
    return %arg0, %c0_i32, %c0_i32_0 : i32, i32, i32
  }
  func.func @transform_4(%arg0: i32, %arg1: i32) -> (i32, i32, i32) {
    %c0_i32 = arith.constant 0 : i32
    %c0_i32_0 = arith.constant 0 : i32
    %c0_i32_1 = arith.constant 0 : i32
    return %arg0, %c0_i32, %c0_i32_0 : i32, i32, i32
  }
  func.func @transform_5(%arg0: i32, %arg1: i32) -> (i32, i32, i32) {
    %c0_i32 = arith.constant 0 : i32
    %c0_i32_0 = arith.constant 0 : i32
    %c0_i32_1 = arith.constant 0 : i32
    return %arg0, %c0_i32, %c0_i32_0 : i32, i32, i32
  }
  func.func @transform_6(%arg0: i32, %arg1: i32) -> (i32, i32, i32) {
    %c1_i32 = arith.constant 1 : i32
    %0 = arith.subi %c1_i32, %arg0 : i32
    %1 = arith.muli %0, %arg1 : i32
    %c0_i32 = arith.constant 0 : i32
    %2 = arith.subi %c0_i32, %arg1 : i32
    %3 = arith.muli %arg0, %2 : i32
    %4 = arith.addi %1, %3 : i32
    %c0_i32_0 = arith.constant 0 : i32
    %c0_i32_1 = arith.constant 0 : i32
    return %4, %c0_i32_0, %arg0 : i32, i32, i32
  }
}

module attributes {stable_mosaic.version = 11 : i64} {
  func.func @_lstm_layer_kernel(%arg0: i32, %arg1: i32, %arg2: memref<8x8x4xbf16, #tpu.memory_space<vmem>>, %arg3: memref<1x4x512xbf16, #tpu.memory_space<vmem>>, %arg4: memref<1x128x512xbf16, #tpu.memory_space<vmem>>, %arg5: memref<1x1x512xf32, #tpu.memory_space<vmem>>, %arg6: memref<1x8x128xf32, #tpu.memory_space<vmem>>, %arg7: memref<1x8x128xf32, #tpu.memory_space<vmem>>, %arg8: memref<8x8x128xbf16, #tpu.memory_space<vmem>>, %arg9: memref<8x128xf32, #tpu.memory_space<vmem>>, %arg10: memref<8x128xf32, #tpu.memory_space<vmem>>, %arg11: memref<8x8x512xf32, #tpu.memory_space<vmem>>) attributes {dimension_semantics = [#tpu.dimension_semantics<parallel>, #tpu.dimension_semantics<arbitrary>], iteration_bounds = array<i64: 2, 1>, scalar_prefetch = 0 : i64, scratch_operands = 3 : i64, tpu.core_type = #tpu.core_type<tc>, window_params = [{transform_indices = @transform_0, window_bounds = array<i64: 8, 8, 4>}, {transform_indices = @transform_1, window_bounds = array<i64: 1, 4, 512>}, {transform_indices = @transform_2, window_bounds = array<i64: 1, 128, 512>}, {transform_indices = @transform_3, window_bounds = array<i64: 1, 1, 512>}, {transform_indices = @transform_4, window_bounds = array<i64: 1, 8, 128>}, {transform_indices = @transform_5, window_bounds = array<i64: 1, 8, 128>}, {transform_indices = @transform_6, window_bounds = array<i64: 8, 8, 128>}]} {
    %c0_i32 = arith.constant 0 : i32
    %0 = arith.cmpi eq, %arg1, %c0_i32 : i32
    %1 = arith.extui %0 : i1 to i32
    %c0_i32_0 = arith.constant 0 : i32
    %2 = arith.cmpi ne, %1, %c0_i32_0 : i32
    scf.if %2 {
      %c0_160 = arith.constant 0 : index
      %c0_161 = arith.constant 0 : index
      %c0_162 = arith.constant 0 : index
      %376 = vector.load %arg6[%c0_160, %c0_161, %c0_162] : memref<1x8x128xf32, #tpu.memory_space<vmem>>, vector<1x8x128xf32>
      %377 = vector.shape_cast %376 : vector<1x8x128xf32> to vector<8x128xf32>
      %c0_163 = arith.constant 0 : index
      %c0_164 = arith.constant 0 : index
      %378 = vector.load %arg9[%c0_163, %c0_164] : memref<8x128xf32, #tpu.memory_space<vmem>>, vector<8x128xf32>
      tpu.vector_store %arg9[%c0_163, %c0_164], %377 {strides = array<i32>} : memref<8x128xf32, #tpu.memory_space<vmem>>, vector<8x128xf32>,
      %c0_165 = arith.constant 0 : index
      %c0_166 = arith.constant 0 : index
      %c0_167 = arith.constant 0 : index
      %379 = vector.load %arg7[%c0_165, %c0_166, %c0_167] : memref<1x8x128xf32, #tpu.memory_space<vmem>>, vector<1x8x128xf32>
      %380 = vector.shape_cast %379 : vector<1x8x128xf32> to vector<8x128xf32>
      %c0_168 = arith.constant 0 : index
      %c0_169 = arith.constant 0 : index
      %381 = vector.load %arg10[%c0_168, %c0_169] : memref<8x128xf32, #tpu.memory_space<vmem>>, vector<8x128xf32>
      tpu.vector_store %arg10[%c0_168, %c0_169], %380 {strides = array<i32>} : memref<8x128xf32, #tpu.memory_space<vmem>>, vector<8x128xf32>,
    } else {
    }
    %c0 = arith.constant 0 : index
    %c0_1 = arith.constant 0 : index
    %c0_2 = arith.constant 0 : index
    %3 = vector.load %arg2[%c0, %c0_1, %c0_2] : memref<8x8x4xbf16, #tpu.memory_space<vmem>>, vector<8x8x4xbf16>
    %4 = vector.shape_cast %3 : vector<8x8x4xbf16> to vector<64x4xbf16>
    %c0_3 = arith.constant 0 : index
    %c0_4 = arith.constant 0 : index
    %c0_5 = arith.constant 0 : index
    %5 = vector.load %arg3[%c0_3, %c0_4, %c0_5] : memref<1x4x512xbf16, #tpu.memory_space<vmem>>, vector<1x4x512xbf16>
    %6 = vector.shape_cast %5 : vector<1x4x512xbf16> to vector<4x512xbf16>
    %cst = arith.constant dense<0.000000e+00> : vector<64x512xf32>
    %7 = tpu.matmul %4, %6, %cst {dimension_numbers = #tpu.dot_dimension_numbers<[1], [0], [0], [1], [0, 0, 1, 1], [], []>} : vector<64x4xbf16>, vector<4x512xbf16>, vector<64x512xf32> -> vector<64x512xf32>
    %c0_6 = arith.constant 0 : index
    %c0_7 = arith.constant 0 : index
    %c0_8 = arith.constant 0 : index
    %8 = vector.load %arg5[%c0_6, %c0_7, %c0_8] : memref<1x1x512xf32, #tpu.memory_space<vmem>>, vector<1x1x512xf32>
    %9 = vector.shape_cast %8 : vector<1x1x512xf32> to vector<1x512xf32>
    %10 = vector.broadcast %9 : vector<1x512xf32> to vector<64x512xf32>
    %11 = arith.addf %7, %10 : vector<64x512xf32>
    %12 = vector.shape_cast %11 : vector<64x512xf32> to vector<8x8x512xf32>
    %c0_9 = arith.constant 0 : index
    %c0_10 = arith.constant 0 : index
    %c0_11 = arith.constant 0 : index
    %13 = vector.load %arg11[%c0_9, %c0_10, %c0_11] : memref<8x8x512xf32, #tpu.memory_space<vmem>>, vector<8x8x512xf32>
    tpu.vector_store %arg11[%c0_9, %c0_10, %c0_11], %12 {strides = array<i32>} : memref<8x8x512xf32, #tpu.memory_space<vmem>>, vector<8x8x512xf32>,
    %c0_12 = arith.constant 0 : index
    %c0_13 = arith.constant 0 : index
    %c0_14 = arith.constant 0 : index
    %14 = vector.load %arg4[%c0_12, %c0_13, %c0_14] : memref<1x128x512xbf16, #tpu.memory_space<vmem>>, vector<1x128x512xbf16>
    %15 = vector.shape_cast %14 : vector<1x128x512xbf16> to vector<128x512xbf16>
    %c0_i32_15 = arith.constant 0 : i32
    %c1_i32 = arith.constant 1 : i32
    %16 = arith.subi %c1_i32, %arg0 : i32
    %17 = arith.muli %16, %c0_i32_15 : i32
    %c7_i32 = arith.constant 7 : i32
    %18 = arith.subi %c7_i32, %c0_i32_15 : i32
    %19 = arith.muli %arg0, %18 : i32
    %20 = arith.addi %17, %19 : i32
    %21 = arith.index_cast %20 : i32 to index
    %c0_16 = arith.constant 0 : index
    %c0_17 = arith.constant 0 : index
    %22 = vector.load %arg11[%21, %c0_16, %c0_17] : memref<8x8x512xf32, #tpu.memory_space<vmem>>, vector<1x8x512xf32>
    %23 = vector.shape_cast %22 : vector<1x8x512xf32> to vector<8x512xf32>
    %c0_18 = arith.constant 0 : index
    %c0_19 = arith.constant 0 : index
    %24 = vector.load %arg9[%c0_18, %c0_19] : memref<8x128xf32, #tpu.memory_space<vmem>>, vector<8x128xf32>
    %c0_20 = arith.constant 0 : index
    %c0_21 = arith.constant 0 : index
    %25 = vector.load %arg10[%c0_20, %c0_21] : memref<8x128xf32, #tpu.memory_space<vmem>>, vector<8x128xf32>
    %26 = arith.truncf %24 : vector<8x128xf32> to vector<8x128xbf16>
    %cst_22 = arith.constant dense<0.000000e+00> : vector<8x512xf32>
    %27 = tpu.matmul %26, %15, %cst_22 {dimension_numbers = #tpu.dot_dimension_numbers<[1], [0], [0], [1], [0, 0, 1, 1], [], []>} : vector<8x128xbf16>, vector<128x512xbf16>, vector<8x512xf32> -> vector<8x512xf32>
    %28 = arith.addf %23, %27 : vector<8x512xf32>
    %29 = vector.extract_strided_slice %28 {offsets = [0, 0], sizes = [8, 128], strides = [1, 1]} : vector<8x512xf32> to vector<8x128xf32>
    %30 = arith.negf %29 : vector<8x128xf32>
    %31 = math.exp %30 : vector<8x128xf32>
    %cst_23 = arith.constant 1.000000e+00 : f32
    %32 = vector.broadcast %cst_23 : f32 to vector<8x128xf32>
    %33 = arith.addf %32, %31 : vector<8x128xf32>
    %34 = arith.divf %32, %33 : vector<8x128xf32>
    %35 = vector.extract_strided_slice %28 {offsets = [0, 128], sizes = [8, 128], strides = [1, 1]} : vector<8x512xf32> to vector<8x128xf32>
    %36 = arith.negf %35 : vector<8x128xf32>
    %37 = math.exp %36 : vector<8x128xf32>
    %cst_24 = arith.constant 1.000000e+00 : f32
    %38 = vector.broadcast %cst_24 : f32 to vector<8x128xf32>
    %39 = arith.addf %38, %37 : vector<8x128xf32>
    %40 = arith.divf %38, %39 : vector<8x128xf32>
    %41 = vector.extract_strided_slice %28 {offsets = [0, 256], sizes = [8, 128], strides = [1, 1]} : vector<8x512xf32> to vector<8x128xf32>
    %42 = math.tanh %41 : vector<8x128xf32>
    %43 = vector.extract_strided_slice %28 {offsets = [0, 384], sizes = [8, 128], strides = [1, 1]} : vector<8x512xf32> to vector<8x128xf32>
    %44 = arith.negf %43 : vector<8x128xf32>
    %45 = math.exp %44 : vector<8x128xf32>
    %cst_25 = arith.constant 1.000000e+00 : f32
    %46 = vector.broadcast %cst_25 : f32 to vector<8x128xf32>
    %47 = arith.addf %46, %45 : vector<8x128xf32>
    %48 = arith.divf %46, %47 : vector<8x128xf32>
    %49 = arith.mulf %40, %25 : vector<8x128xf32>
    %50 = arith.mulf %34, %42 : vector<8x128xf32>
    %51 = arith.addf %49, %50 : vector<8x128xf32>
    %52 = math.tanh %51 : vector<8x128xf32>
    %53 = arith.mulf %48, %52 : vector<8x128xf32>
    %c0_26 = arith.constant 0 : index
    %c0_27 = arith.constant 0 : index
    %54 = vector.load %arg10[%c0_26, %c0_27] : memref<8x128xf32, #tpu.memory_space<vmem>>, vector<8x128xf32>
    tpu.vector_store %arg10[%c0_26, %c0_27], %51 {strides = array<i32>} : memref<8x128xf32, #tpu.memory_space<vmem>>, vector<8x128xf32>,
    %c0_28 = arith.constant 0 : index
    %c0_29 = arith.constant 0 : index
    %55 = vector.load %arg9[%c0_28, %c0_29] : memref<8x128xf32, #tpu.memory_space<vmem>>, vector<8x128xf32>
    tpu.vector_store %arg9[%c0_28, %c0_29], %53 {strides = array<i32>} : memref<8x128xf32, #tpu.memory_space<vmem>>, vector<8x128xf32>,
    %56 = arith.truncf %53 : vector<8x128xf32> to vector<8x128xbf16>
    %57 = arith.index_cast %20 : i32 to index
    %c0_30 = arith.constant 0 : index
    %c0_31 = arith.constant 0 : index
    %58 = vector.load %arg8[%57, %c0_30, %c0_31] : memref<8x8x128xbf16, #tpu.memory_space<vmem>>, vector<1x8x128xbf16>
    %59 = vector.shape_cast %58 : vector<1x8x128xbf16> to vector<8x128xbf16>
    %60 = vector.shape_cast %56 : vector<8x128xbf16> to vector<1x8x128xbf16>
    tpu.vector_store %arg8[%57, %c0_30, %c0_31], %60 {strides = array<i32>} : memref<8x8x128xbf16, #tpu.memory_space<vmem>>, vector<1x8x128xbf16>,
    %c1_i32_32 = arith.constant 1 : i32
    %c1_i32_33 = arith.constant 1 : i32
    %61 = arith.subi %c1_i32_33, %arg0 : i32
    %62 = arith.muli %61, %c1_i32_32 : i32
    %c7_i32_34 = arith.constant 7 : i32
    %63 = arith.subi %c7_i32_34, %c1_i32_32 : i32
    %64 = arith.muli %arg0, %63 : i32
    %65 = arith.addi %62, %64 : i32
    %66 = arith.index_cast %65 : i32 to index
    %c0_35 = arith.constant 0 : index
    %c0_36 = arith.constant 0 : index
    %67 = vector.load %arg11[%66, %c0_35, %c0_36] : memref<8x8x512xf32, #tpu.memory_space<vmem>>, vector<1x8x512xf32>
    %68 = vector.shape_cast %67 : vector<1x8x512xf32> to vector<8x512xf32>
    %c0_37 = arith.constant 0 : index
    %c0_38 = arith.constant 0 : index
    %69 = vector.load %arg9[%c0_37, %c0_38] : memref<8x128xf32, #tpu.memory_space<vmem>>, vector<8x128xf32>
    %c0_39 = arith.constant 0 : index
    %c0_40 = arith.constant 0 : index
    %70 = vector.load %arg10[%c0_39, %c0_40] : memref<8x128xf32, #tpu.memory_space<vmem>>, vector<8x128xf32>
    %71 = arith.truncf %69 : vector<8x128xf32> to vector<8x128xbf16>
    %cst_41 = arith.constant dense<0.000000e+00> : vector<8x512xf32>
    %72 = tpu.matmul %71, %15, %cst_41 {dimension_numbers = #tpu.dot_dimension_numbers<[1], [0], [0], [1], [0, 0, 1, 1], [], []>} : vector<8x128xbf16>, vector<128x512xbf16>, vector<8x512xf32> -> vector<8x512xf32>
    %73 = arith.addf %68, %72 : vector<8x512xf32>
    %74 = vector.extract_strided_slice %73 {offsets = [0, 0], sizes = [8, 128], strides = [1, 1]} : vector<8x512xf32> to vector<8x128xf32>
    %75 = arith.negf %74 : vector<8x128xf32>
    %76 = math.exp %75 : vector<8x128xf32>
    %cst_42 = arith.constant 1.000000e+00 : f32
    %77 = vector.broadcast %cst_42 : f32 to vector<8x128xf32>
    %78 = arith.addf %77, %76 : vector<8x128xf32>
    %79 = arith.divf %77, %78 : vector<8x128xf32>
    %80 = vector.extract_strided_slice %73 {offsets = [0, 128], sizes = [8, 128], strides = [1, 1]} : vector<8x512xf32> to vector<8x128xf32>
    %81 = arith.negf %80 : vector<8x128xf32>
    %82 = math.exp %81 : vector<8x128xf32>
    %cst_43 = arith.constant 1.000000e+00 : f32
    %83 = vector.broadcast %cst_43 : f32 to vector<8x128xf32>
    %84 = arith.addf %83, %82 : vector<8x128xf32>
    %85 = arith.divf %83, %84 : vector<8x128xf32>
    %86 = vector.extract_strided_slice %73 {offsets = [0, 256], sizes = [8, 128], strides = [1, 1]} : vector<8x512xf32> to vector<8x128xf32>
    %87 = math.tanh %86 : vector<8x128xf32>
    %88 = vector.extract_strided_slice %73 {offsets = [0, 384], sizes = [8, 128], strides = [1, 1]} : vector<8x512xf32> to vector<8x128xf32>
    %89 = arith.negf %88 : vector<8x128xf32>
    %90 = math.exp %89 : vector<8x128xf32>
    %cst_44 = arith.constant 1.000000e+00 : f32
    %91 = vector.broadcast %cst_44 : f32 to vector<8x128xf32>
    %92 = arith.addf %91, %90 : vector<8x128xf32>
    %93 = arith.divf %91, %92 : vector<8x128xf32>
    %94 = arith.mulf %85, %70 : vector<8x128xf32>
    %95 = arith.mulf %79, %87 : vector<8x128xf32>
    %96 = arith.addf %94, %95 : vector<8x128xf32>
    %97 = math.tanh %96 : vector<8x128xf32>
    %98 = arith.mulf %93, %97 : vector<8x128xf32>
    %c0_45 = arith.constant 0 : index
    %c0_46 = arith.constant 0 : index
    %99 = vector.load %arg10[%c0_45, %c0_46] : memref<8x128xf32, #tpu.memory_space<vmem>>, vector<8x128xf32>
    tpu.vector_store %arg10[%c0_45, %c0_46], %96 {strides = array<i32>} : memref<8x128xf32, #tpu.memory_space<vmem>>, vector<8x128xf32>,
    %c0_47 = arith.constant 0 : index
    %c0_48 = arith.constant 0 : index
    %100 = vector.load %arg9[%c0_47, %c0_48] : memref<8x128xf32, #tpu.memory_space<vmem>>, vector<8x128xf32>
    tpu.vector_store %arg9[%c0_47, %c0_48], %98 {strides = array<i32>} : memref<8x128xf32, #tpu.memory_space<vmem>>, vector<8x128xf32>,
    %101 = arith.truncf %98 : vector<8x128xf32> to vector<8x128xbf16>
    %102 = arith.index_cast %65 : i32 to index
    %c0_49 = arith.constant 0 : index
    %c0_50 = arith.constant 0 : index
    %103 = vector.load %arg8[%102, %c0_49, %c0_50] : memref<8x8x128xbf16, #tpu.memory_space<vmem>>, vector<1x8x128xbf16>
    %104 = vector.shape_cast %103 : vector<1x8x128xbf16> to vector<8x128xbf16>
    %105 = vector.shape_cast %101 : vector<8x128xbf16> to vector<1x8x128xbf16>
    tpu.vector_store %arg8[%102, %c0_49, %c0_50], %105 {strides = array<i32>} : memref<8x8x128xbf16, #tpu.memory_space<vmem>>, vector<1x8x128xbf16>,
    %c2_i32 = arith.constant 2 : i32
    %c1_i32_51 = arith.constant 1 : i32
    %106 = arith.subi %c1_i32_51, %arg0 : i32
    %107 = arith.muli %106, %c2_i32 : i32
    %c7_i32_52 = arith.constant 7 : i32
    %108 = arith.subi %c7_i32_52, %c2_i32 : i32
    %109 = arith.muli %arg0, %108 : i32
    %110 = arith.addi %107, %109 : i32
    %111 = arith.index_cast %110 : i32 to index
    %c0_53 = arith.constant 0 : index
    %c0_54 = arith.constant 0 : index
    %112 = vector.load %arg11[%111, %c0_53, %c0_54] : memref<8x8x512xf32, #tpu.memory_space<vmem>>, vector<1x8x512xf32>
    %113 = vector.shape_cast %112 : vector<1x8x512xf32> to vector<8x512xf32>
    %c0_55 = arith.constant 0 : index
    %c0_56 = arith.constant 0 : index
    %114 = vector.load %arg9[%c0_55, %c0_56] : memref<8x128xf32, #tpu.memory_space<vmem>>, vector<8x128xf32>
    %c0_57 = arith.constant 0 : index
    %c0_58 = arith.constant 0 : index
    %115 = vector.load %arg10[%c0_57, %c0_58] : memref<8x128xf32, #tpu.memory_space<vmem>>, vector<8x128xf32>
    %116 = arith.truncf %114 : vector<8x128xf32> to vector<8x128xbf16>
    %cst_59 = arith.constant dense<0.000000e+00> : vector<8x512xf32>
    %117 = tpu.matmul %116, %15, %cst_59 {dimension_numbers = #tpu.dot_dimension_numbers<[1], [0], [0], [1], [0, 0, 1, 1], [], []>} : vector<8x128xbf16>, vector<128x512xbf16>, vector<8x512xf32> -> vector<8x512xf32>
    %118 = arith.addf %113, %117 : vector<8x512xf32>
    %119 = vector.extract_strided_slice %118 {offsets = [0, 0], sizes = [8, 128], strides = [1, 1]} : vector<8x512xf32> to vector<8x128xf32>
    %120 = arith.negf %119 : vector<8x128xf32>
    %121 = math.exp %120 : vector<8x128xf32>
    %cst_60 = arith.constant 1.000000e+00 : f32
    %122 = vector.broadcast %cst_60 : f32 to vector<8x128xf32>
    %123 = arith.addf %122, %121 : vector<8x128xf32>
    %124 = arith.divf %122, %123 : vector<8x128xf32>
    %125 = vector.extract_strided_slice %118 {offsets = [0, 128], sizes = [8, 128], strides = [1, 1]} : vector<8x512xf32> to vector<8x128xf32>
    %126 = arith.negf %125 : vector<8x128xf32>
    %127 = math.exp %126 : vector<8x128xf32>
    %cst_61 = arith.constant 1.000000e+00 : f32
    %128 = vector.broadcast %cst_61 : f32 to vector<8x128xf32>
    %129 = arith.addf %128, %127 : vector<8x128xf32>
    %130 = arith.divf %128, %129 : vector<8x128xf32>
    %131 = vector.extract_strided_slice %118 {offsets = [0, 256], sizes = [8, 128], strides = [1, 1]} : vector<8x512xf32> to vector<8x128xf32>
    %132 = math.tanh %131 : vector<8x128xf32>
    %133 = vector.extract_strided_slice %118 {offsets = [0, 384], sizes = [8, 128], strides = [1, 1]} : vector<8x512xf32> to vector<8x128xf32>
    %134 = arith.negf %133 : vector<8x128xf32>
    %135 = math.exp %134 : vector<8x128xf32>
    %cst_62 = arith.constant 1.000000e+00 : f32
    %136 = vector.broadcast %cst_62 : f32 to vector<8x128xf32>
    %137 = arith.addf %136, %135 : vector<8x128xf32>
    %138 = arith.divf %136, %137 : vector<8x128xf32>
    %139 = arith.mulf %130, %115 : vector<8x128xf32>
    %140 = arith.mulf %124, %132 : vector<8x128xf32>
    %141 = arith.addf %139, %140 : vector<8x128xf32>
    %142 = math.tanh %141 : vector<8x128xf32>
    %143 = arith.mulf %138, %142 : vector<8x128xf32>
    %c0_63 = arith.constant 0 : index
    %c0_64 = arith.constant 0 : index
    %144 = vector.load %arg10[%c0_63, %c0_64] : memref<8x128xf32, #tpu.memory_space<vmem>>, vector<8x128xf32>
    tpu.vector_store %arg10[%c0_63, %c0_64], %141 {strides = array<i32>} : memref<8x128xf32, #tpu.memory_space<vmem>>, vector<8x128xf32>,
    %c0_65 = arith.constant 0 : index
    %c0_66 = arith.constant 0 : index
    %145 = vector.load %arg9[%c0_65, %c0_66] : memref<8x128xf32, #tpu.memory_space<vmem>>, vector<8x128xf32>
    tpu.vector_store %arg9[%c0_65, %c0_66], %143 {strides = array<i32>} : memref<8x128xf32, #tpu.memory_space<vmem>>, vector<8x128xf32>,
    %146 = arith.truncf %143 : vector<8x128xf32> to vector<8x128xbf16>
    %147 = arith.index_cast %110 : i32 to index
    %c0_67 = arith.constant 0 : index
    %c0_68 = arith.constant 0 : index
    %148 = vector.load %arg8[%147, %c0_67, %c0_68] : memref<8x8x128xbf16, #tpu.memory_space<vmem>>, vector<1x8x128xbf16>
    %149 = vector.shape_cast %148 : vector<1x8x128xbf16> to vector<8x128xbf16>
    %150 = vector.shape_cast %146 : vector<8x128xbf16> to vector<1x8x128xbf16>
    tpu.vector_store %arg8[%147, %c0_67, %c0_68], %150 {strides = array<i32>} : memref<8x8x128xbf16, #tpu.memory_space<vmem>>, vector<1x8x128xbf16>,
    %c3_i32 = arith.constant 3 : i32
    %c1_i32_69 = arith.constant 1 : i32
    %151 = arith.subi %c1_i32_69, %arg0 : i32
    %152 = arith.muli %151, %c3_i32 : i32
    %c7_i32_70 = arith.constant 7 : i32
    %153 = arith.subi %c7_i32_70, %c3_i32 : i32
    %154 = arith.muli %arg0, %153 : i32
    %155 = arith.addi %152, %154 : i32
    %156 = arith.index_cast %155 : i32 to index
    %c0_71 = arith.constant 0 : index
    %c0_72 = arith.constant 0 : index
    %157 = vector.load %arg11[%156, %c0_71, %c0_72] : memref<8x8x512xf32, #tpu.memory_space<vmem>>, vector<1x8x512xf32>
    %158 = vector.shape_cast %157 : vector<1x8x512xf32> to vector<8x512xf32>
    %c0_73 = arith.constant 0 : index
    %c0_74 = arith.constant 0 : index
    %159 = vector.load %arg9[%c0_73, %c0_74] : memref<8x128xf32, #tpu.memory_space<vmem>>, vector<8x128xf32>
    %c0_75 = arith.constant 0 : index
    %c0_76 = arith.constant 0 : index
    %160 = vector.load %arg10[%c0_75, %c0_76] : memref<8x128xf32, #tpu.memory_space<vmem>>, vector<8x128xf32>
    %161 = arith.truncf %159 : vector<8x128xf32> to vector<8x128xbf16>
    %cst_77 = arith.constant dense<0.000000e+00> : vector<8x512xf32>
    %162 = tpu.matmul %161, %15, %cst_77 {dimension_numbers = #tpu.dot_dimension_numbers<[1], [0], [0], [1], [0, 0, 1, 1], [], []>} : vector<8x128xbf16>, vector<128x512xbf16>, vector<8x512xf32> -> vector<8x512xf32>
    %163 = arith.addf %158, %162 : vector<8x512xf32>
    %164 = vector.extract_strided_slice %163 {offsets = [0, 0], sizes = [8, 128], strides = [1, 1]} : vector<8x512xf32> to vector<8x128xf32>
    %165 = arith.negf %164 : vector<8x128xf32>
    %166 = math.exp %165 : vector<8x128xf32>
    %cst_78 = arith.constant 1.000000e+00 : f32
    %167 = vector.broadcast %cst_78 : f32 to vector<8x128xf32>
    %168 = arith.addf %167, %166 : vector<8x128xf32>
    %169 = arith.divf %167, %168 : vector<8x128xf32>
    %170 = vector.extract_strided_slice %163 {offsets = [0, 128], sizes = [8, 128], strides = [1, 1]} : vector<8x512xf32> to vector<8x128xf32>
    %171 = arith.negf %170 : vector<8x128xf32>
    %172 = math.exp %171 : vector<8x128xf32>
    %cst_79 = arith.constant 1.000000e+00 : f32
    %173 = vector.broadcast %cst_79 : f32 to vector<8x128xf32>
    %174 = arith.addf %173, %172 : vector<8x128xf32>
    %175 = arith.divf %173, %174 : vector<8x128xf32>
    %176 = vector.extract_strided_slice %163 {offsets = [0, 256], sizes = [8, 128], strides = [1, 1]} : vector<8x512xf32> to vector<8x128xf32>
    %177 = math.tanh %176 : vector<8x128xf32>
    %178 = vector.extract_strided_slice %163 {offsets = [0, 384], sizes = [8, 128], strides = [1, 1]} : vector<8x512xf32> to vector<8x128xf32>
    %179 = arith.negf %178 : vector<8x128xf32>
    %180 = math.exp %179 : vector<8x128xf32>
    %cst_80 = arith.constant 1.000000e+00 : f32
    %181 = vector.broadcast %cst_80 : f32 to vector<8x128xf32>
    %182 = arith.addf %181, %180 : vector<8x128xf32>
    %183 = arith.divf %181, %182 : vector<8x128xf32>
    %184 = arith.mulf %175, %160 : vector<8x128xf32>
    %185 = arith.mulf %169, %177 : vector<8x128xf32>
    %186 = arith.addf %184, %185 : vector<8x128xf32>
    %187 = math.tanh %186 : vector<8x128xf32>
    %188 = arith.mulf %183, %187 : vector<8x128xf32>
    %c0_81 = arith.constant 0 : index
    %c0_82 = arith.constant 0 : index
    %189 = vector.load %arg10[%c0_81, %c0_82] : memref<8x128xf32, #tpu.memory_space<vmem>>, vector<8x128xf32>
    tpu.vector_store %arg10[%c0_81, %c0_82], %186 {strides = array<i32>} : memref<8x128xf32, #tpu.memory_space<vmem>>, vector<8x128xf32>,
    %c0_83 = arith.constant 0 : index
    %c0_84 = arith.constant 0 : index
    %190 = vector.load %arg9[%c0_83, %c0_84] : memref<8x128xf32, #tpu.memory_space<vmem>>, vector<8x128xf32>
    tpu.vector_store %arg9[%c0_83, %c0_84], %188 {strides = array<i32>} : memref<8x128xf32, #tpu.memory_space<vmem>>, vector<8x128xf32>,
    %191 = arith.truncf %188 : vector<8x128xf32> to vector<8x128xbf16>
    %192 = arith.index_cast %155 : i32 to index
    %c0_85 = arith.constant 0 : index
    %c0_86 = arith.constant 0 : index
    %193 = vector.load %arg8[%192, %c0_85, %c0_86] : memref<8x8x128xbf16, #tpu.memory_space<vmem>>, vector<1x8x128xbf16>
    %194 = vector.shape_cast %193 : vector<1x8x128xbf16> to vector<8x128xbf16>
    %195 = vector.shape_cast %191 : vector<8x128xbf16> to vector<1x8x128xbf16>
    tpu.vector_store %arg8[%192, %c0_85, %c0_86], %195 {strides = array<i32>} : memref<8x8x128xbf16, #tpu.memory_space<vmem>>, vector<1x8x128xbf16>,
    %c4_i32 = arith.constant 4 : i32
    %c1_i32_87 = arith.constant 1 : i32
    %196 = arith.subi %c1_i32_87, %arg0 : i32
    %197 = arith.muli %196, %c4_i32 : i32
    %c7_i32_88 = arith.constant 7 : i32
    %198 = arith.subi %c7_i32_88, %c4_i32 : i32
    %199 = arith.muli %arg0, %198 : i32
    %200 = arith.addi %197, %199 : i32
    %201 = arith.index_cast %200 : i32 to index
    %c0_89 = arith.constant 0 : index
    %c0_90 = arith.constant 0 : index
    %202 = vector.load %arg11[%201, %c0_89, %c0_90] : memref<8x8x512xf32, #tpu.memory_space<vmem>>, vector<1x8x512xf32>
    %203 = vector.shape_cast %202 : vector<1x8x512xf32> to vector<8x512xf32>
    %c0_91 = arith.constant 0 : index
    %c0_92 = arith.constant 0 : index
    %204 = vector.load %arg9[%c0_91, %c0_92] : memref<8x128xf32, #tpu.memory_space<vmem>>, vector<8x128xf32>
    %c0_93 = arith.constant 0 : index
    %c0_94 = arith.constant 0 : index
    %205 = vector.load %arg10[%c0_93, %c0_94] : memref<8x128xf32, #tpu.memory_space<vmem>>, vector<8x128xf32>
    %206 = arith.truncf %204 : vector<8x128xf32> to vector<8x128xbf16>
    %cst_95 = arith.constant dense<0.000000e+00> : vector<8x512xf32>
    %207 = tpu.matmul %206, %15, %cst_95 {dimension_numbers = #tpu.dot_dimension_numbers<[1], [0], [0], [1], [0, 0, 1, 1], [], []>} : vector<8x128xbf16>, vector<128x512xbf16>, vector<8x512xf32> -> vector<8x512xf32>
    %208 = arith.addf %203, %207 : vector<8x512xf32>
    %209 = vector.extract_strided_slice %208 {offsets = [0, 0], sizes = [8, 128], strides = [1, 1]} : vector<8x512xf32> to vector<8x128xf32>
    %210 = arith.negf %209 : vector<8x128xf32>
    %211 = math.exp %210 : vector<8x128xf32>
    %cst_96 = arith.constant 1.000000e+00 : f32
    %212 = vector.broadcast %cst_96 : f32 to vector<8x128xf32>
    %213 = arith.addf %212, %211 : vector<8x128xf32>
    %214 = arith.divf %212, %213 : vector<8x128xf32>
    %215 = vector.extract_strided_slice %208 {offsets = [0, 128], sizes = [8, 128], strides = [1, 1]} : vector<8x512xf32> to vector<8x128xf32>
    %216 = arith.negf %215 : vector<8x128xf32>
    %217 = math.exp %216 : vector<8x128xf32>
    %cst_97 = arith.constant 1.000000e+00 : f32
    %218 = vector.broadcast %cst_97 : f32 to vector<8x128xf32>
    %219 = arith.addf %218, %217 : vector<8x128xf32>
    %220 = arith.divf %218, %219 : vector<8x128xf32>
    %221 = vector.extract_strided_slice %208 {offsets = [0, 256], sizes = [8, 128], strides = [1, 1]} : vector<8x512xf32> to vector<8x128xf32>
    %222 = math.tanh %221 : vector<8x128xf32>
    %223 = vector.extract_strided_slice %208 {offsets = [0, 384], sizes = [8, 128], strides = [1, 1]} : vector<8x512xf32> to vector<8x128xf32>
    %224 = arith.negf %223 : vector<8x128xf32>
    %225 = math.exp %224 : vector<8x128xf32>
    %cst_98 = arith.constant 1.000000e+00 : f32
    %226 = vector.broadcast %cst_98 : f32 to vector<8x128xf32>
    %227 = arith.addf %226, %225 : vector<8x128xf32>
    %228 = arith.divf %226, %227 : vector<8x128xf32>
    %229 = arith.mulf %220, %205 : vector<8x128xf32>
    %230 = arith.mulf %214, %222 : vector<8x128xf32>
    %231 = arith.addf %229, %230 : vector<8x128xf32>
    %232 = math.tanh %231 : vector<8x128xf32>
    %233 = arith.mulf %228, %232 : vector<8x128xf32>
    %c0_99 = arith.constant 0 : index
    %c0_100 = arith.constant 0 : index
    %234 = vector.load %arg10[%c0_99, %c0_100] : memref<8x128xf32, #tpu.memory_space<vmem>>, vector<8x128xf32>
    tpu.vector_store %arg10[%c0_99, %c0_100], %231 {strides = array<i32>} : memref<8x128xf32, #tpu.memory_space<vmem>>, vector<8x128xf32>,
    %c0_101 = arith.constant 0 : index
    %c0_102 = arith.constant 0 : index
    %235 = vector.load %arg9[%c0_101, %c0_102] : memref<8x128xf32, #tpu.memory_space<vmem>>, vector<8x128xf32>
    tpu.vector_store %arg9[%c0_101, %c0_102], %233 {strides = array<i32>} : memref<8x128xf32, #tpu.memory_space<vmem>>, vector<8x128xf32>,
    %236 = arith.truncf %233 : vector<8x128xf32> to vector<8x128xbf16>
    %237 = arith.index_cast %200 : i32 to index
    %c0_103 = arith.constant 0 : index
    %c0_104 = arith.constant 0 : index
    %238 = vector.load %arg8[%237, %c0_103, %c0_104] : memref<8x8x128xbf16, #tpu.memory_space<vmem>>, vector<1x8x128xbf16>
    %239 = vector.shape_cast %238 : vector<1x8x128xbf16> to vector<8x128xbf16>
    %240 = vector.shape_cast %236 : vector<8x128xbf16> to vector<1x8x128xbf16>
    tpu.vector_store %arg8[%237, %c0_103, %c0_104], %240 {strides = array<i32>} : memref<8x8x128xbf16, #tpu.memory_space<vmem>>, vector<1x8x128xbf16>,
    %c5_i32 = arith.constant 5 : i32
    %c1_i32_105 = arith.constant 1 : i32
    %241 = arith.subi %c1_i32_105, %arg0 : i32
    %242 = arith.muli %241, %c5_i32 : i32
    %c7_i32_106 = arith.constant 7 : i32
    %243 = arith.subi %c7_i32_106, %c5_i32 : i32
    %244 = arith.muli %arg0, %243 : i32
    %245 = arith.addi %242, %244 : i32
    %246 = arith.index_cast %245 : i32 to index
    %c0_107 = arith.constant 0 : index
    %c0_108 = arith.constant 0 : index
    %247 = vector.load %arg11[%246, %c0_107, %c0_108] : memref<8x8x512xf32, #tpu.memory_space<vmem>>, vector<1x8x512xf32>
    %248 = vector.shape_cast %247 : vector<1x8x512xf32> to vector<8x512xf32>
    %c0_109 = arith.constant 0 : index
    %c0_110 = arith.constant 0 : index
    %249 = vector.load %arg9[%c0_109, %c0_110] : memref<8x128xf32, #tpu.memory_space<vmem>>, vector<8x128xf32>
    %c0_111 = arith.constant 0 : index
    %c0_112 = arith.constant 0 : index
    %250 = vector.load %arg10[%c0_111, %c0_112] : memref<8x128xf32, #tpu.memory_space<vmem>>, vector<8x128xf32>
    %251 = arith.truncf %249 : vector<8x128xf32> to vector<8x128xbf16>
    %cst_113 = arith.constant dense<0.000000e+00> : vector<8x512xf32>
    %252 = tpu.matmul %251, %15, %cst_113 {dimension_numbers = #tpu.dot_dimension_numbers<[1], [0], [0], [1], [0, 0, 1, 1], [], []>} : vector<8x128xbf16>, vector<128x512xbf16>, vector<8x512xf32> -> vector<8x512xf32>
    %253 = arith.addf %248, %252 : vector<8x512xf32>
    %254 = vector.extract_strided_slice %253 {offsets = [0, 0], sizes = [8, 128], strides = [1, 1]} : vector<8x512xf32> to vector<8x128xf32>
    %255 = arith.negf %254 : vector<8x128xf32>
    %256 = math.exp %255 : vector<8x128xf32>
    %cst_114 = arith.constant 1.000000e+00 : f32
    %257 = vector.broadcast %cst_114 : f32 to vector<8x128xf32>
    %258 = arith.addf %257, %256 : vector<8x128xf32>
    %259 = arith.divf %257, %258 : vector<8x128xf32>
    %260 = vector.extract_strided_slice %253 {offsets = [0, 128], sizes = [8, 128], strides = [1, 1]} : vector<8x512xf32> to vector<8x128xf32>
    %261 = arith.negf %260 : vector<8x128xf32>
    %262 = math.exp %261 : vector<8x128xf32>
    %cst_115 = arith.constant 1.000000e+00 : f32
    %263 = vector.broadcast %cst_115 : f32 to vector<8x128xf32>
    %264 = arith.addf %263, %262 : vector<8x128xf32>
    %265 = arith.divf %263, %264 : vector<8x128xf32>
    %266 = vector.extract_strided_slice %253 {offsets = [0, 256], sizes = [8, 128], strides = [1, 1]} : vector<8x512xf32> to vector<8x128xf32>
    %267 = math.tanh %266 : vector<8x128xf32>
    %268 = vector.extract_strided_slice %253 {offsets = [0, 384], sizes = [8, 128], strides = [1, 1]} : vector<8x512xf32> to vector<8x128xf32>
    %269 = arith.negf %268 : vector<8x128xf32>
    %270 = math.exp %269 : vector<8x128xf32>
    %cst_116 = arith.constant 1.000000e+00 : f32
    %271 = vector.broadcast %cst_116 : f32 to vector<8x128xf32>
    %272 = arith.addf %271, %270 : vector<8x128xf32>
    %273 = arith.divf %271, %272 : vector<8x128xf32>
    %274 = arith.mulf %265, %250 : vector<8x128xf32>
    %275 = arith.mulf %259, %267 : vector<8x128xf32>
    %276 = arith.addf %274, %275 : vector<8x128xf32>
    %277 = math.tanh %276 : vector<8x128xf32>
    %278 = arith.mulf %273, %277 : vector<8x128xf32>
    %c0_117 = arith.constant 0 : index
    %c0_118 = arith.constant 0 : index
    %279 = vector.load %arg10[%c0_117, %c0_118] : memref<8x128xf32, #tpu.memory_space<vmem>>, vector<8x128xf32>
    tpu.vector_store %arg10[%c0_117, %c0_118], %276 {strides = array<i32>} : memref<8x128xf32, #tpu.memory_space<vmem>>, vector<8x128xf32>,
    %c0_119 = arith.constant 0 : index
    %c0_120 = arith.constant 0 : index
    %280 = vector.load %arg9[%c0_119, %c0_120] : memref<8x128xf32, #tpu.memory_space<vmem>>, vector<8x128xf32>
    tpu.vector_store %arg9[%c0_119, %c0_120], %278 {strides = array<i32>} : memref<8x128xf32, #tpu.memory_space<vmem>>, vector<8x128xf32>,
    %281 = arith.truncf %278 : vector<8x128xf32> to vector<8x128xbf16>
    %282 = arith.index_cast %245 : i32 to index
    %c0_121 = arith.constant 0 : index
    %c0_122 = arith.constant 0 : index
    %283 = vector.load %arg8[%282, %c0_121, %c0_122] : memref<8x8x128xbf16, #tpu.memory_space<vmem>>, vector<1x8x128xbf16>
    %284 = vector.shape_cast %283 : vector<1x8x128xbf16> to vector<8x128xbf16>
    %285 = vector.shape_cast %281 : vector<8x128xbf16> to vector<1x8x128xbf16>
    tpu.vector_store %arg8[%282, %c0_121, %c0_122], %285 {strides = array<i32>} : memref<8x8x128xbf16, #tpu.memory_space<vmem>>, vector<1x8x128xbf16>,
    %c6_i32 = arith.constant 6 : i32
    %c1_i32_123 = arith.constant 1 : i32
    %286 = arith.subi %c1_i32_123, %arg0 : i32
    %287 = arith.muli %286, %c6_i32 : i32
    %c7_i32_124 = arith.constant 7 : i32
    %288 = arith.subi %c7_i32_124, %c6_i32 : i32
    %289 = arith.muli %arg0, %288 : i32
    %290 = arith.addi %287, %289 : i32
    %291 = arith.index_cast %290 : i32 to index
    %c0_125 = arith.constant 0 : index
    %c0_126 = arith.constant 0 : index
    %292 = vector.load %arg11[%291, %c0_125, %c0_126] : memref<8x8x512xf32, #tpu.memory_space<vmem>>, vector<1x8x512xf32>
    %293 = vector.shape_cast %292 : vector<1x8x512xf32> to vector<8x512xf32>
    %c0_127 = arith.constant 0 : index
    %c0_128 = arith.constant 0 : index
    %294 = vector.load %arg9[%c0_127, %c0_128] : memref<8x128xf32, #tpu.memory_space<vmem>>, vector<8x128xf32>
    %c0_129 = arith.constant 0 : index
    %c0_130 = arith.constant 0 : index
    %295 = vector.load %arg10[%c0_129, %c0_130] : memref<8x128xf32, #tpu.memory_space<vmem>>, vector<8x128xf32>
    %296 = arith.truncf %294 : vector<8x128xf32> to vector<8x128xbf16>
    %cst_131 = arith.constant dense<0.000000e+00> : vector<8x512xf32>
    %297 = tpu.matmul %296, %15, %cst_131 {dimension_numbers = #tpu.dot_dimension_numbers<[1], [0], [0], [1], [0, 0, 1, 1], [], []>} : vector<8x128xbf16>, vector<128x512xbf16>, vector<8x512xf32> -> vector<8x512xf32>
    %298 = arith.addf %293, %297 : vector<8x512xf32>
    %299 = vector.extract_strided_slice %298 {offsets = [0, 0], sizes = [8, 128], strides = [1, 1]} : vector<8x512xf32> to vector<8x128xf32>
    %300 = arith.negf %299 : vector<8x128xf32>
    %301 = math.exp %300 : vector<8x128xf32>
    %cst_132 = arith.constant 1.000000e+00 : f32
    %302 = vector.broadcast %cst_132 : f32 to vector<8x128xf32>
    %303 = arith.addf %302, %301 : vector<8x128xf32>
    %304 = arith.divf %302, %303 : vector<8x128xf32>
    %305 = vector.extract_strided_slice %298 {offsets = [0, 128], sizes = [8, 128], strides = [1, 1]} : vector<8x512xf32> to vector<8x128xf32>
    %306 = arith.negf %305 : vector<8x128xf32>
    %307 = math.exp %306 : vector<8x128xf32>
    %cst_133 = arith.constant 1.000000e+00 : f32
    %308 = vector.broadcast %cst_133 : f32 to vector<8x128xf32>
    %309 = arith.addf %308, %307 : vector<8x128xf32>
    %310 = arith.divf %308, %309 : vector<8x128xf32>
    %311 = vector.extract_strided_slice %298 {offsets = [0, 256], sizes = [8, 128], strides = [1, 1]} : vector<8x512xf32> to vector<8x128xf32>
    %312 = math.tanh %311 : vector<8x128xf32>
    %313 = vector.extract_strided_slice %298 {offsets = [0, 384], sizes = [8, 128], strides = [1, 1]} : vector<8x512xf32> to vector<8x128xf32>
    %314 = arith.negf %313 : vector<8x128xf32>
    %315 = math.exp %314 : vector<8x128xf32>
    %cst_134 = arith.constant 1.000000e+00 : f32
    %316 = vector.broadcast %cst_134 : f32 to vector<8x128xf32>
    %317 = arith.addf %316, %315 : vector<8x128xf32>
    %318 = arith.divf %316, %317 : vector<8x128xf32>
    %319 = arith.mulf %310, %295 : vector<8x128xf32>
    %320 = arith.mulf %304, %312 : vector<8x128xf32>
    %321 = arith.addf %319, %320 : vector<8x128xf32>
    %322 = math.tanh %321 : vector<8x128xf32>
    %323 = arith.mulf %318, %322 : vector<8x128xf32>
    %c0_135 = arith.constant 0 : index
    %c0_136 = arith.constant 0 : index
    %324 = vector.load %arg10[%c0_135, %c0_136] : memref<8x128xf32, #tpu.memory_space<vmem>>, vector<8x128xf32>
    tpu.vector_store %arg10[%c0_135, %c0_136], %321 {strides = array<i32>} : memref<8x128xf32, #tpu.memory_space<vmem>>, vector<8x128xf32>,
    %c0_137 = arith.constant 0 : index
    %c0_138 = arith.constant 0 : index
    %325 = vector.load %arg9[%c0_137, %c0_138] : memref<8x128xf32, #tpu.memory_space<vmem>>, vector<8x128xf32>
    tpu.vector_store %arg9[%c0_137, %c0_138], %323 {strides = array<i32>} : memref<8x128xf32, #tpu.memory_space<vmem>>, vector<8x128xf32>,
    %326 = arith.truncf %323 : vector<8x128xf32> to vector<8x128xbf16>
    %327 = arith.index_cast %290 : i32 to index
    %c0_139 = arith.constant 0 : index
    %c0_140 = arith.constant 0 : index
    %328 = vector.load %arg8[%327, %c0_139, %c0_140] : memref<8x8x128xbf16, #tpu.memory_space<vmem>>, vector<1x8x128xbf16>
    %329 = vector.shape_cast %328 : vector<1x8x128xbf16> to vector<8x128xbf16>
    %330 = vector.shape_cast %326 : vector<8x128xbf16> to vector<1x8x128xbf16>
    tpu.vector_store %arg8[%327, %c0_139, %c0_140], %330 {strides = array<i32>} : memref<8x8x128xbf16, #tpu.memory_space<vmem>>, vector<1x8x128xbf16>,
    %c7_i32_141 = arith.constant 7 : i32
    %c1_i32_142 = arith.constant 1 : i32
    %331 = arith.subi %c1_i32_142, %arg0 : i32
    %332 = arith.muli %331, %c7_i32_141 : i32
    %c7_i32_143 = arith.constant 7 : i32
    %333 = arith.subi %c7_i32_143, %c7_i32_141 : i32
    %334 = arith.muli %arg0, %333 : i32
    %335 = arith.addi %332, %334 : i32
    %336 = arith.index_cast %335 : i32 to index
    %c0_144 = arith.constant 0 : index
    %c0_145 = arith.constant 0 : index
    %337 = vector.load %arg11[%336, %c0_144, %c0_145] : memref<8x8x512xf32, #tpu.memory_space<vmem>>, vector<1x8x512xf32>
    %338 = vector.shape_cast %337 : vector<1x8x512xf32> to vector<8x512xf32>
    %c0_146 = arith.constant 0 : index
    %c0_147 = arith.constant 0 : index
    %339 = vector.load %arg9[%c0_146, %c0_147] : memref<8x128xf32, #tpu.memory_space<vmem>>, vector<8x128xf32>
    %c0_148 = arith.constant 0 : index
    %c0_149 = arith.constant 0 : index
    %340 = vector.load %arg10[%c0_148, %c0_149] : memref<8x128xf32, #tpu.memory_space<vmem>>, vector<8x128xf32>
    %341 = arith.truncf %339 : vector<8x128xf32> to vector<8x128xbf16>
    %cst_150 = arith.constant dense<0.000000e+00> : vector<8x512xf32>
    %342 = tpu.matmul %341, %15, %cst_150 {dimension_numbers = #tpu.dot_dimension_numbers<[1], [0], [0], [1], [0, 0, 1, 1], [], []>} : vector<8x128xbf16>, vector<128x512xbf16>, vector<8x512xf32> -> vector<8x512xf32>
    %343 = arith.addf %338, %342 : vector<8x512xf32>
    %344 = vector.extract_strided_slice %343 {offsets = [0, 0], sizes = [8, 128], strides = [1, 1]} : vector<8x512xf32> to vector<8x128xf32>
    %345 = arith.negf %344 : vector<8x128xf32>
    %346 = math.exp %345 : vector<8x128xf32>
    %cst_151 = arith.constant 1.000000e+00 : f32
    %347 = vector.broadcast %cst_151 : f32 to vector<8x128xf32>
    %348 = arith.addf %347, %346 : vector<8x128xf32>
    %349 = arith.divf %347, %348 : vector<8x128xf32>
    %350 = vector.extract_strided_slice %343 {offsets = [0, 128], sizes = [8, 128], strides = [1, 1]} : vector<8x512xf32> to vector<8x128xf32>
    %351 = arith.negf %350 : vector<8x128xf32>
    %352 = math.exp %351 : vector<8x128xf32>
    %cst_152 = arith.constant 1.000000e+00 : f32
    %353 = vector.broadcast %cst_152 : f32 to vector<8x128xf32>
    %354 = arith.addf %353, %352 : vector<8x128xf32>
    %355 = arith.divf %353, %354 : vector<8x128xf32>
    %356 = vector.extract_strided_slice %343 {offsets = [0, 256], sizes = [8, 128], strides = [1, 1]} : vector<8x512xf32> to vector<8x128xf32>
    %357 = math.tanh %356 : vector<8x128xf32>
    %358 = vector.extract_strided_slice %343 {offsets = [0, 384], sizes = [8, 128], strides = [1, 1]} : vector<8x512xf32> to vector<8x128xf32>
    %359 = arith.negf %358 : vector<8x128xf32>
    %360 = math.exp %359 : vector<8x128xf32>
    %cst_153 = arith.constant 1.000000e+00 : f32
    %361 = vector.broadcast %cst_153 : f32 to vector<8x128xf32>
    %362 = arith.addf %361, %360 : vector<8x128xf32>
    %363 = arith.divf %361, %362 : vector<8x128xf32>
    %364 = arith.mulf %355, %340 : vector<8x128xf32>
    %365 = arith.mulf %349, %357 : vector<8x128xf32>
    %366 = arith.addf %364, %365 : vector<8x128xf32>
    %367 = math.tanh %366 : vector<8x128xf32>
    %368 = arith.mulf %363, %367 : vector<8x128xf32>
    %c0_154 = arith.constant 0 : index
    %c0_155 = arith.constant 0 : index
    %369 = vector.load %arg10[%c0_154, %c0_155] : memref<8x128xf32, #tpu.memory_space<vmem>>, vector<8x128xf32>
    tpu.vector_store %arg10[%c0_154, %c0_155], %366 {strides = array<i32>} : memref<8x128xf32, #tpu.memory_space<vmem>>, vector<8x128xf32>,
    %c0_156 = arith.constant 0 : index
    %c0_157 = arith.constant 0 : index
    %370 = vector.load %arg9[%c0_156, %c0_157] : memref<8x128xf32, #tpu.memory_space<vmem>>, vector<8x128xf32>
    tpu.vector_store %arg9[%c0_156, %c0_157], %368 {strides = array<i32>} : memref<8x128xf32, #tpu.memory_space<vmem>>, vector<8x128xf32>,
    %371 = arith.truncf %368 : vector<8x128xf32> to vector<8x128xbf16>
    %372 = arith.index_cast %335 : i32 to index
    %c0_158 = arith.constant 0 : index
    %c0_159 = arith.constant 0 : index
    %373 = vector.load %arg8[%372, %c0_158, %c0_159] : memref<8x8x128xbf16, #tpu.memory_space<vmem>>, vector<1x8x128xbf16>
    %374 = vector.shape_cast %373 : vector<1x8x128xbf16> to vector<8x128xbf16>
    %375 = vector.shape_cast %371 : vector<8x128xbf16> to vector<1x8x128xbf16>
    tpu.vector_store %arg8[%372, %c0_158, %c0_159], %375 {strides = array<i32>} : memref<8x8x128xbf16, #tpu.memory_space<vmem>>, vector<1x8x128xbf16>,
    %c8_i32 = arith.constant 8 : i32
    return
  }
  func.func @transform_0(%arg0: i32, %arg1: i32) -> (i32, i32, i32) {
    %c1_i32 = arith.constant 1 : i32
    %0 = arith.subi %c1_i32, %arg0 : i32
    %1 = arith.muli %0, %arg1 : i32
    %c0_i32 = arith.constant 0 : i32
    %2 = arith.subi %c0_i32, %arg1 : i32
    %3 = arith.muli %arg0, %2 : i32
    %4 = arith.addi %1, %3 : i32
    %c0_i32_0 = arith.constant 0 : i32
    %c0_i32_1 = arith.constant 0 : i32
    %c0_i32_2 = arith.constant 0 : i32
    return %4, %c0_i32_0, %c0_i32_1 : i32, i32, i32
  }
  func.func @transform_1(%arg0: i32, %arg1: i32) -> (i32, i32, i32) {
    %c0_i32 = arith.constant 0 : i32
    %c0_i32_0 = arith.constant 0 : i32
    %c0_i32_1 = arith.constant 0 : i32
    return %arg0, %c0_i32, %c0_i32_0 : i32, i32, i32
  }
  func.func @transform_2(%arg0: i32, %arg1: i32) -> (i32, i32, i32) {
    %c0_i32 = arith.constant 0 : i32
    %c0_i32_0 = arith.constant 0 : i32
    %c0_i32_1 = arith.constant 0 : i32
    return %arg0, %c0_i32, %c0_i32_0 : i32, i32, i32
  }
  func.func @transform_3(%arg0: i32, %arg1: i32) -> (i32, i32, i32) {
    %c0_i32 = arith.constant 0 : i32
    %c0_i32_0 = arith.constant 0 : i32
    %c0_i32_1 = arith.constant 0 : i32
    return %arg0, %c0_i32, %c0_i32_0 : i32, i32, i32
  }
  func.func @transform_4(%arg0: i32, %arg1: i32) -> (i32, i32, i32) {
    %c0_i32 = arith.constant 0 : i32
    %c0_i32_0 = arith.constant 0 : i32
    %c0_i32_1 = arith.constant 0 : i32
    return %arg0, %c0_i32, %c0_i32_0 : i32, i32, i32
  }
  func.func @transform_5(%arg0: i32, %arg1: i32) -> (i32, i32, i32) {
    %c0_i32 = arith.constant 0 : i32
    %c0_i32_0 = arith.constant 0 : i32
    %c0_i32_1 = arith.constant 0 : i32
    return %arg0, %c0_i32, %c0_i32_0 : i32, i32, i32
  }
  func.func @transform_6(%arg0: i32, %arg1: i32) -> (i32, i32, i32) {
    %c1_i32 = arith.constant 1 : i32
    %0 = arith.subi %c1_i32, %arg0 : i32
    %1 = arith.muli %0, %arg1 : i32
    %c0_i32 = arith.constant 0 : i32
    %2 = arith.subi %c0_i32, %arg1 : i32
    %3 = arith.muli %arg0, %2 : i32
    %4 = arith.addi %1, %3 : i32
    %c0_i32_0 = arith.constant 0 : i32
    %c0_i32_1 = arith.constant 0 : i32
    return %4, %c0_i32_0, %arg0 : i32, i32, i32
  }
}

</mosaic_0001>

<llo_original>
// kernel: lstm_block_forward.2
$region0: #{lstm_block_forward.2}
  #allocation0 [shape = 'u32[]', space=smem, size = 0x4, offset = 0x4, fixed_abs, tag = 'smem constant byte address 0x4 - core index']
  #allocation1 [shape = 'u32[72,128]{1,0:T(1,128)}', space=vmem, size = 0x9000, scoped, tag = 'internal scratch']
  #allocation2 [shape = 'f32[8,128]{1,0:T(8,128)}', space=vmem, size = 0x1000, scoped, tag = 'scratch operand']
  #allocation3 [shape = 'f32[8,128]{1,0:T(8,128)}', space=vmem, size = 0x1000, scoped, tag = 'scratch operand']
  #allocation4 [shape = 'f32[8,8,512]{2,1,0:T(8,128)}', space=vmem, size = 0x20000, scoped, tag = 'scratch operand']
  %s0 = inlined_call_operand.vmem [shape: bf16[8,8,4], index: 0, kind: input, shape index: {}]
  %s1 = inlined_call_operand.vmem [shape: bf16[2,4,512], index: 1, kind: input, shape index: {}]
  %s2 = inlined_call_operand.hbm [shape: bf16[2,128,512], index: 2, kind: input, shape index: {}]
  %s3 = inlined_call_operand.vmem [shape: f32[2,1,512], index: 3, kind: input, shape index: {}]
  %s4 = inlined_call_operand.vmem [shape: f32[2,8,128], index: 4, kind: input, shape index: {}]
  %s5 = inlined_call_operand.vmem [shape: f32[2,8,128], index: 5, kind: input, shape index: {}]
  %s6 = inlined_call_operand.vmem [shape: bf16[8,8,256], index: 6, kind: output, shape index: {}]
  %s7 = sld [smem:[#allocation0]]
  $region102: #{lstm_block_forward.2} parent=0
    _
  %s9 = ssub.s32 1, %s7
  %s10 = scalar_select 0, %s9, %s7
  $region1: #{lstm_block_forward.2} parent=0
    #allocation5 [shape = 'u8[262144]{0}', space=vmem, size = 0x40000, scoped, tag = 'input window, operand 2']
    #allocation6 [shape = 's32[2]{0}', space=sflag, size = 0x8, scoped, tag = 'scoped memory for lstm_block_forward.2']
    #allocation7 [shape = 'u8[32768]{0}', space=vmem, size = 0x8000, scoped, tag = 'output window, operand 0']
    %11 = vsyncpa [#allocation6], 0
    %s12 = scalar_lea.sflag [#allocation6], 1
    %13 = vsyncpa %s12, 0
    loop: start=0, step=1, limit=4
    $region2: #{lstm_block_forward.2} parent=1 // loop_pre_header
      _
    $region3: #{lstm_block_forward.2} parent=1 // loop_header
      %s15 = sphi 0, %s19
      %p16 = scmp.ge.s32.totalorder %s15, 4
      %s22 = sphi 0, %s34
      %s23 = sphi 0, %s30
      %s24 = sphi 0, %s22
      %s25 = sphi 0, %s23
      %s26 = sphi 0, %s24
      %s27 = sphi 0, %s25
      %s47 = sphi 0, %s49
      %s50 = sphi 0, %s47
      %s51 = sphi 0, %s50
      %s67 = sphi 0, %s51
      %s73 = sphi 0, %s75
      %s76 = sphi 0, %s73
      %s77 = sphi 0, %s76
      %s93 = sphi 0, %s77
      %s99 = sphi 0, %s101
      %s102 = sphi 0, %s99
      %s103 = sphi 0, %s102
      %s119 = sphi 0, %s103
      %s125 = sphi 0, %s127
      %s128 = sphi 0, %s125
      %s129 = sphi 0, %s128
      %s145 = sphi 0, %s129
      %s151 = sphi 0, %s153
      %s154 = sphi 0, %s151
      %s155 = sphi 0, %s154
      %s171 = sphi 0, %s155
      %s177 = sphi 0, %s179
      %s180 = sphi 0, %s177
      %s181 = sphi 0, %s180
      %s197 = sphi 0, %s181
      %s215 = sphi 0, %s217
      %s218 = sphi 0, %s215
      %s219 = sphi 0, %s218
      %s235 = sphi 0, %s219
    $region4: #{lstm_block_forward.2} parent=1 // loop_header_branch
      %18 = sbr.rel (%p16) target = $region8
    $region5: #{lstm_block_forward.2} parent=1 // loop_body
      %s20 = ssub.s32 %s15, 1
      %s21 = ssub.s32 %s15, 2
      %s28 = sadd.s32 1, %s23
      %p29 = scmp.ge.s32.totalorder %s28, 1
      %s30 = scalar_select %p29, 0, %s28
      %s31 = sadd.s32 1, %s22
      %s32 = scalar_select %p29, %s31, %s22
      %p33 = scmp.ge.s32.totalorder %s32, 2
      %s34 = scalar_select %p33, 0, %s32
      %s35 = ssub.s32 1, %s22
      %s36 = smul.u32 %s35, %s23
      %s37 = ssub.s32 0, %s23
      %s38 = smul.u32 %s22, %s37
      %s39 = sadd.s32 %s36, %s38
      %s40 = ssub.s32 1, %s34
      %s41 = smul.u32 %s40, %s30
      %s42 = ssub.s32 0, %s30
      %s43 = smul.u32 %s34, %s42
      %s44 = sadd.s32 %s41, %s43
      %s45 = ssub.s32 %s39, %s44
      %p46 = scmp.eq.s32.totalorder %s45, 0
      %s48 = sadd.s32 %s47, 1
      %s49 = scalar_select %p46, %s47, %s48
      %p52 = pneg %p46
      %p53 = scmp.eq.s32.totalorder %s15, 1
      %p54 = por %p52, %p53
      %p55 = scmp.ne.s32.totalorder %s47, %s50
      %p56 = scmp.eq.s32.totalorder %s15, 0
      %p57 = por %p55, %p56
      %p58 = scmp.ne.s32.totalorder %s47, %s50
      %p59 = scmp.eq.s32.totalorder %s20, 1
      %p60 = por %p58, %p59
      %p61 = scmp.ne.s32.totalorder %s50, %s51
      %p62 = scmp.eq.s32.totalorder %s20, 0
      %p63 = por %p61, %p62
      %p64 = scmp.ne.s32.totalorder %s50, %s51
      %p65 = scmp.eq.s32.totalorder %s21, 1
      %p66 = por %p64, %p65
      %p68 = scmp.ne.s32.totalorder %s51, %s67
      %p69 = scmp.eq.s32.totalorder %s21, 0
      %p70 = por %p68, %p69
      %s71 = ssub.s32 %s22, %s34
      %p72 = scmp.eq.s32.totalorder %s71, 0
      %s74 = sadd.s32 %s73, 1
      %s75 = scalar_select %p72, %s73, %s74
      %p78 = pneg %p72
      %p79 = scmp.eq.s32.totalorder %s15, 1
      %p80 = por %p78, %p79
      %p81 = scmp.ne.s32.totalorder %s73, %s76
      %p82 = scmp.eq.s32.totalorder %s15, 0
      %p83 = por %p81, %p82
      %p84 = scmp.ne.s32.totalorder %s73, %s76
      %p85 = scmp.eq.s32.totalorder %s20, 1
      %p86 = por %p84, %p85
      %p87 = scmp.ne.s32.totalorder %s76, %s77
      %p88 = scmp.eq.s32.totalorder %s20, 0
      %p89 = por %p87, %p88
      %p90 = scmp.ne.s32.totalorder %s76, %s77
      %p91 = scmp.eq.s32.totalorder %s21, 1
      %p92 = por %p90, %p91
      %p94 = scmp.ne.s32.totalorder %s77, %s93
      %p95 = scmp.eq.s32.totalorder %s21, 0
      %p96 = por %p94, %p95
      %s97 = ssub.s32 %s22, %s34
      %p98 = scmp.eq.s32.totalorder %s97, 0
      %s100 = sadd.s32 %s99, 1
      %s101 = scalar_select %p98, %s99, %s100
      %p104 = pneg %p98
      %p105 = scmp.eq.s32.totalorder %s15, 1
      %p106 = por %p104, %p105
      %p107 = scmp.ne.s32.totalorder %s99, %s102
      %p108 = scmp.eq.s32.totalorder %s15, 0
      %p109 = por %p107, %p108
      %p110 = scmp.ne.s32.totalorder %s99, %s102
      %p111 = scmp.eq.s32.totalorder %s20, 1
      %p112 = por %p110, %p111
      %p113 = scmp.ne.s32.totalorder %s102, %s103
      %p114 = scmp.eq.s32.totalorder %s20, 0
      %p115 = por %p113, %p114
      %p116 = scmp.ne.s32.totalorder %s102, %s103
      %p117 = scmp.eq.s32.totalorder %s21, 1
      %p118 = por %p116, %p117
      %p120 = scmp.ne.s32.totalorder %s103, %s119
      %p121 = scmp.eq.s32.totalorder %s21, 0
      %p122 = por %p120, %p121
      %s123 = ssub.s32 %s22, %s34
      %p124 = scmp.eq.s32.totalorder %s123, 0
      %s126 = sadd.s32 %s125, 1
      %s127 = scalar_select %p124, %s125, %s126
      %p130 = pneg %p124
      %p131 = scmp.eq.s32.totalorder %s15, 1
      %p132 = por %p130, %p131
      %p133 = scmp.ne.s32.totalorder %s125, %s128
      %p134 = scmp.eq.s32.totalorder %s15, 0
      %p135 = por %p133, %p134
      %p136 = scmp.ne.s32.totalorder %s125, %s128
      %p137 = scmp.eq.s32.totalorder %s20, 1
      %p138 = por %p136, %p137
      %p139 = scmp.ne.s32.totalorder %s128, %s129
      %p140 = scmp.eq.s32.totalorder %s20, 0
      %p141 = por %p139, %p140
      %p142 = scmp.ne.s32.totalorder %s128, %s129
      %p143 = scmp.eq.s32.totalorder %s21, 1
      %p144 = por %p142, %p143
      %p146 = scmp.ne.s32.totalorder %s129, %s145
      %p147 = scmp.eq.s32.totalorder %s21, 0
      %p148 = por %p146, %p147
      %s149 = ssub.s32 %s22, %s34
      %p150 = scmp.eq.s32.totalorder %s149, 0
      %s152 = sadd.s32 %s151, 1
      %s153 = scalar_select %p150, %s151, %s152
      %p156 = pneg %p150
      %p157 = scmp.eq.s32.totalorder %s15, 1
      %p158 = por %p156, %p157
      %p159 = scmp.ne.s32.totalorder %s151, %s154
      %p160 = scmp.eq.s32.totalorder %s15, 0
      %p161 = por %p159, %p160
      %p162 = scmp.ne.s32.totalorder %s151, %s154
      %p163 = scmp.eq.s32.totalorder %s20, 1
      %p164 = por %p162, %p163
      %p165 = scmp.ne.s32.totalorder %s154, %s155
      %p166 = scmp.eq.s32.totalorder %s20, 0
      %p167 = por %p165, %p166
      %p168 = scmp.ne.s32.totalorder %s154, %s155
      %p169 = scmp.eq.s32.totalorder %s21, 1
      %p170 = por %p168, %p169
      %p172 = scmp.ne.s32.totalorder %s155, %s171
      %p173 = scmp.eq.s32.totalorder %s21, 0
      %p174 = por %p172, %p173
      %s175 = ssub.s32 %s22, %s34
      %p176 = scmp.eq.s32.totalorder %s175, 0
      %s178 = sadd.s32 %s177, 1
      %s179 = scalar_select %p176, %s177, %s178
      %p182 = pneg %p176
      %p183 = scmp.eq.s32.totalorder %s15, 1
      %p184 = por %p182, %p183
      %p185 = scmp.ne.s32.totalorder %s177, %s180
      %p186 = scmp.eq.s32.totalorder %s15, 0
      %p187 = por %p185, %p186
      %p188 = scmp.ne.s32.totalorder %s177, %s180
      %p189 = scmp.eq.s32.totalorder %s20, 1
      %p190 = por %p188, %p189
      %p191 = scmp.ne.s32.totalorder %s180, %s181
      %p192 = scmp.eq.s32.totalorder %s20, 0
      %p193 = por %p191, %p192
      %p194 = scmp.ne.s32.totalorder %s180, %s181
      %p195 = scmp.eq.s32.totalorder %s21, 1
      %p196 = por %p194, %p195
      %p198 = scmp.ne.s32.totalorder %s181, %s197
      %p199 = scmp.eq.s32.totalorder %s21, 0
      %p200 = por %p198, %p199
      %s201 = ssub.s32 1, %s22
      %s202 = smul.u32 %s201, %s23
      %s203 = ssub.s32 0, %s23
      %s204 = smul.u32 %s22, %s203
      %s205 = sadd.s32 %s202, %s204
      %s206 = ssub.s32 1, %s34
      %s207 = smul.u32 %s206, %s30
      %s208 = ssub.s32 0, %s30
      %s209 = smul.u32 %s34, %s208
      %s210 = sadd.s32 %s207, %s209
      %s211 = ssub.s32 %s205, %s210
      %s212 = ssub.s32 %s22, %s34
      %s213 = sor.u32 %s211, %s212
      %p214 = scmp.eq.s32.totalorder %s213, 0
      %s216 = sadd.s32 %s215, 1
      %s217 = scalar_select %p214, %s215, %s216
      %p220 = pneg %p214
      %p221 = scmp.eq.s32.totalorder %s15, 1
      %p222 = por %p220, %p221
      %p223 = scmp.ne.s32.totalorder %s215, %s218
      %p224 = scmp.eq.s32.totalorder %s15, 0
      %p225 = por %p223, %p224
      %p226 = scmp.ne.s32.totalorder %s215, %s218
      %p227 = scmp.eq.s32.totalorder %s20, 1
      %p228 = por %p226, %p227
      %p229 = scmp.ne.s32.totalorder %s218, %s219
      %p230 = scmp.eq.s32.totalorder %s20, 0
      %p231 = por %p229, %p230
      %p232 = scmp.ne.s32.totalorder %s218, %s219
      %p233 = scmp.eq.s32.totalorder %s21, 1
      %p234 = por %p232, %p233
      %p236 = scmp.ne.s32.totalorder %s219, %s235
      %p237 = scmp.eq.s32.totalorder %s21, 0
      %p238 = por %p236, %p237
      %p239 = scmp.le.s32.totalorder 1, %s15
      %p240 = scmp.lt.s32.totalorder %s15, 3
      %p241 = pnand %p239, %p240
      %p242 = pneg %p241
      // Predicated region
      $region9: #{lstm_block_forward.2} parent=5 // pred_check
        _
      $region10: #{lstm_block_forward.2} parent=5 // pred_check_branch
        %244 = sbr.rel (%p241) target = $region12
      $region11: #{lstm_block_forward.2} parent=5 // pred_region
        %s245 = ssub.s32 %s15, 1
      $region12: #{lstm_block_forward.2} parent=5 // pred_fallthru
        _
      %p246 = scmp.lt.s32.totalorder %s15, 2
      // Predicated region
      $region13: #{lstm_block_forward.2} parent=5 // pred_check
        %p247 = pneg %p246
      $region14: #{lstm_block_forward.2} parent=5 // pred_check_branch
        %249 = sbr.rel (%p247) target = $region16
      $region15: #{lstm_block_forward.2} parent=5 // pred_region
        // Predicated region
        $region17: #{lstm_block_forward.2} parent=15 // pred_check
          %p250 = pneg %p57
        $region18: #{lstm_block_forward.2} parent=15 // pred_check_branch
          %252 = sbr.rel (%p250) target = $region20
        $region19: #{lstm_block_forward.2} parent=15 // pred_region
          %s253 = ssub.s32 1, %s22
          %s254 = smul.u32 %s253, %s23
          %s255 = ssub.s32 0, %s23
          %s256 = smul.u32 %s22, %s255
          %s257 = sadd.s32 %s254, %s256
          %s258 = smul.u32 8, %s257
          %p259 = scmp.lt.s32.totalorder %s258, 7
          %s260 = scalar_select %p259, %s258, 7
          %s261 = smul.addr %s260, 4
          %s262 = scalar_lea.vmem %s0, %s261
          %s263 = ssub.s32 1, %s22
          %s264 = smul.u32 %s263, %s23
          %s265 = ssub.s32 0, %s23
          %s266 = smul.u32 %s22, %s265
          %s267 = sadd.s32 %s264, %s266
          %s268 = smul.u32 8, %s267
        $region20: #{lstm_block_forward.2} parent=15 // pred_fallthru
          _
        // Predicated region
        $region21: #{lstm_block_forward.2} parent=15 // pred_check
          %p269 = pneg %p83
        $region22: #{lstm_block_forward.2} parent=15 // pred_check_branch
          %271 = sbr.rel (%p269) target = $region24
        $region23: #{lstm_block_forward.2} parent=15 // pred_region
          %p272 = scmp.lt.s32.totalorder %s22, 1
          %s273 = scalar_select %p272, %s22, 1
          %s274 = smul.addr %s273, 4
          %s275 = smul.addr %s274, 2
          %s276 = scalar_lea.vmem %s1, %s275
        $region24: #{lstm_block_forward.2} parent=15 // pred_fallthru
          _
        // Predicated region
        $region25: #{lstm_block_forward.2} parent=15 // pred_check
          %p277 = pneg %p109
        $region26: #{lstm_block_forward.2} parent=15 // pred_check_branch
          %279 = sbr.rel (%p277) target = $region28
        $region27: #{lstm_block_forward.2} parent=15 // pred_region
          %s280 = sand.u32 %s99, 1
          %s281 = scalar_lea.sflag [#allocation6], %s280
          %s282 = sand.u32 %s99, 1
          %s283 = smul.addr %s282, 256
          %s284 = scalar_lea.vmem [#allocation5], %s283
          %286 = vsyncadd %s281, 0
          %s287 = smul.addr %s22, 64
          %s288 = smul.addr %s287, 4
          %s289 = scalar_lea.hbm %s2, %s288
          %s290 = sshll.u32 %s289, 4
          %s291 = int_to_ptr.hbm [resolvable:$true] %s290
          %s292 = sshll.u32 %s284, 4
          %s293 = int_to_ptr.vmem [resolvable:$true] %s292
          %298 = dma.hbm_to_vmem [thread:$0]  %s291, 4096, %s293, %s281, 256, 256, 16
        $region28: #{lstm_block_forward.2} parent=15 // pred_fallthru
          _
        // Predicated region
        $region29: #{lstm_block_forward.2} parent=15 // pred_check
          %p299 = pneg %p135
        $region30: #{lstm_block_forward.2} parent=15 // pred_check_branch
          %301 = sbr.rel (%p299) target = $region32
        $region31: #{lstm_block_forward.2} parent=15 // pred_region
          %p302 = scmp.lt.s32.totalorder %s22, 1
          %s303 = scalar_select %p302, %s22, 1
          %s304 = smul.addr %s303, 4
          %s305 = scalar_lea.vmem %s3, %s304
        $region32: #{lstm_block_forward.2} parent=15 // pred_fallthru
          _
        // Predicated region
        $region33: #{lstm_block_forward.2} parent=15 // pred_check
          %p306 = pneg %p161
        $region34: #{lstm_block_forward.2} parent=15 // pred_check_branch
          %308 = sbr.rel (%p306) target = $region36
        $region35: #{lstm_block_forward.2} parent=15 // pred_region
          %p309 = scmp.lt.s32.totalorder %s22, 1
          %s310 = scalar_select %p309, %s22, 1
          %s311 = smul.addr %s310, 8
          %s312 = scalar_lea.vmem %s4, %s311
        $region36: #{lstm_block_forward.2} parent=15 // pred_fallthru
          _
        // Predicated region
        $region37: #{lstm_block_forward.2} parent=15 // pred_check
          %p313 = pneg %p187
        $region38: #{lstm_block_forward.2} parent=15 // pred_check_branch
          %315 = sbr.rel (%p313) target = $region40
        $region39: #{lstm_block_forward.2} parent=15 // pred_region
          %p316 = scmp.lt.s32.totalorder %s22, 1
          %s317 = scalar_select %p316, %s22, 1
          %s318 = smul.addr %s317, 8
          %s319 = scalar_lea.vmem %s5, %s318
        $region40: #{lstm_block_forward.2} parent=15 // pred_fallthru
          _
      $region16: #{lstm_block_forward.2} parent=5 // pred_fallthru
        _
      %p320 = scmp.le.s32.totalorder 1, %s15
      %p321 = scmp.lt.s32.totalorder %s15, 3
      %p322 = pnand %p320, %p321
      %p323 = pneg %p322
      // Predicated region
      $region41: #{lstm_block_forward.2} parent=5 // pred_check
        _
      $region42: #{lstm_block_forward.2} parent=5 // pred_check_branch
        %325 = sbr.rel (%p322) target = $region44
      $region43: #{lstm_block_forward.2} parent=5 // pred_region
        %s326 = ssub.s32 %s15, 1
        %s327 = sand.u32 %s102, 1
        %s328 = scalar_lea.sflag [#allocation6], %s327
        %s329 = sand.u32 %s102, 1
        %s330 = smul.addr %s329, 256
        %s331 = scalar_lea.vmem [#allocation5], %s330
        // Predicated region
        $region45: #{lstm_block_forward.2} parent=43 // pred_check
          %p332 = pneg %p115
        $region46: #{lstm_block_forward.2} parent=43 // pred_check_branch
          %334 = sbr.rel (%p332) target = $region48
        $region47: #{lstm_block_forward.2} parent=43 // pred_region
          %336 = dma.done %s328, 4096
        $region48: #{lstm_block_forward.2} parent=43 // pred_fallthru
          _
        %s337 = ssub.s32 1, %s24
        %s338 = smul.u32 %s337, %s25
        %s339 = ssub.s32 0, %s25
        %s340 = smul.u32 %s24, %s339
        %s341 = sadd.s32 %s338, %s340
        %s342 = smul.u32 8, %s341
        %p343 = scmp.lt.s32.totalorder %s342, 7
        %s344 = scalar_select %p343, %s342, 7
        %s345 = smul.addr %s344, 4
        %s346 = scalar_lea.vmem %s0, %s345
        %p347 = pneg %p63
        %p348 = pneg %p60
        %p349 = scmp.lt.s32.totalorder %s24, 1
        %s350 = scalar_select %p349, %s24, 1
        %s351 = smul.addr %s350, 4
        %s352 = smul.addr %s351, 2
        %s353 = scalar_lea.vmem %s1, %s352
        %p354 = pneg %p89
        %p355 = pneg %p86
        %s356 = sand.u32 %s102, 1
        %s357 = scalar_lea.sflag [#allocation6], %s356
        %s358 = sand.u32 %s102, 1
        %s359 = smul.addr %s358, 256
        %s360 = scalar_lea.vmem [#allocation5], %s359
        %p361 = pneg %p115
        %p362 = pneg %p112
        %p363 = scmp.lt.s32.totalorder %s24, 1
        %s364 = scalar_select %p363, %s24, 1
        %s365 = smul.addr %s364, 4
        %s366 = scalar_lea.vmem %s3, %s365
        %p367 = pneg %p141
        %p368 = pneg %p138
        %p369 = scmp.lt.s32.totalorder %s24, 1
        %s370 = scalar_select %p369, %s24, 1
        %s371 = smul.addr %s370, 8
        %s372 = scalar_lea.vmem %s4, %s371
        %p373 = pneg %p167
        %p374 = pneg %p164
        %p375 = scmp.lt.s32.totalorder %s24, 1
        %s376 = scalar_select %p375, %s24, 1
        %s377 = smul.addr %s376, 8
        %s378 = scalar_lea.vmem %s5, %s377
        %p379 = pneg %p193
        %p380 = pneg %p190
        %p381 = pneg %p231
        %p382 = pneg %p228
        %s383 = sand.u32 %s218, 1
        %s384 = sand.u32 %s218, 1
        %s385 = smul.addr %s384, 32
        %s386 = scalar_lea.vmem [#allocation7], %s385
        %s387 = ssub.s32 1, %s24
        %s388 = smul.u32 %s387, %s25
        %s389 = ssub.s32 0, %s25
        %s390 = smul.u32 %s24, %s389
        %s391 = sadd.s32 %s388, %s390
        %s392 = smul.u32 8, %s391
        %p393 = scmp.lt.s32.totalorder %s392, 7
        %s394 = scalar_select %p393, %s392, 7
        %s395 = smul.addr %s394, 4
        %s396 = scalar_lea.vmem %s0, %s395
        %s397 = ssub.s32 1, %s24
        %s398 = smul.u32 %s397, %s25
        %s399 = ssub.s32 0, %s25
        %s400 = smul.u32 %s24, %s399
        %s401 = sadd.s32 %s398, %s400
        %s402 = smul.u32 8, %s401
        %p403 = scmp.lt.s32.totalorder %s24, 1
        %s404 = scalar_select %p403, %s24, 1
        %s405 = smul.addr %s404, 4
        %s406 = smul.addr %s405, 2
        %s407 = scalar_lea.vmem %s1, %s406
        %p408 = scmp.lt.s32.totalorder %s24, 1
        %s409 = scalar_select %p408, %s24, 1
        %s410 = smul.addr %s409, 4
        %s411 = scalar_lea.vmem %s3, %s410
        %p412 = scmp.lt.s32.totalorder %s24, 1
        %s413 = scalar_select %p412, %s24, 1
        %s414 = smul.addr %s413, 8
        %s415 = scalar_lea.vmem %s4, %s414
        %p416 = scmp.lt.s32.totalorder %s24, 1
        %s417 = scalar_select %p416, %s24, 1
        %s418 = smul.addr %s417, 8
        %s419 = scalar_lea.vmem %s5, %s418
        %s420 = ssub.s32 1, %s24
        %s421 = smul.u32 %s420, %s25
        %s422 = ssub.s32 0, %s25
        %s423 = smul.u32 %s24, %s422
        %s424 = sadd.s32 %s421, %s423
        %s425 = smul.u32 8, %s424
        %p427 = scmp.eq.s32.totalorder %s25, 0
        // Predicated region
        $region49: #{lstm_block_forward.2} parent=43 // pred_check
          %p428 = pneg %p427
        $region50: #{lstm_block_forward.2} parent=43 // pred_check_branch
          %430 = sbr.rel (%p428) target = $region52
        $region51: #{lstm_block_forward.2} parent=43 // pred_region
          %v431 = vld [vmem:[%s415] sm:$0xff]
          %432 = vst [vmem:[#allocation2] sm:$0xff] %v431
          %v433 = vld [vmem:[%s419] sm:$0xff]
          %434 = vst [vmem:[#allocation3] sm:$0xff] %v433
        $region52: #{lstm_block_forward.2} parent=43 // pred_fallthru
          _
        %v435 = vld [vmem:[%s396] sm:$0xf]
        %v436 = vld [vmem:[%s396 + $0x4] sm:$0xf]
        %v437 = vld [vmem:[%s396 + $0x8] sm:$0xf]
        %v438 = vld [vmem:[%s396 + $0xc] sm:$0xf]
        %v439 = vld [vmem:[%s396 + $0x10] sm:$0xf]
        %v440 = vld [vmem:[%s396 + $0x14] sm:$0xf]
        %v441 = vld [vmem:[%s396 + $0x18] sm:$0xf]
        %v442 = vld [vmem:[%s396 + $0x1c] sm:$0xf]
        %v443 = vld [vmem:[%s407] sm:$0xff]
        %v444 = vld [vmem:[%s411] sm:$0xf]
        %v446 = vperm.slane %v444, 0
        %v447 = vperm.slane %v444, 1
        %v448 = vperm.slane %v444, 2
        %v449 = vperm.slane %v444, 3
        %v462 = vunpack.c.l.b16 %v435
        %v463 = vunpack.c.l.b16 %v436
        %v464 = vunpack.c.l.b16 %v437
        %v465 = vunpack.c.l.b16 %v438
        %v466 = vunpack.c.l.b16 %v439
        %v467 = vunpack.c.l.b16 %v440
        %v468 = vunpack.c.l.b16 %v441
        %v469 = vunpack.c.l.b16 %v442
        %v470 = vpack.c.b16 %v463, %v462
        %v471 = vpack.c.b16 %v465, %v464
        %v472 = vpack.c.b16 %v467, %v466
        %v473 = vpack.c.b16 %v469, %v468
        %475 = vst [vmem:[#allocation1] ss:$4 sm:$0xff] %v443
        %v476 = vld.sshfl [vmem:[#allocation1] sm:$0xff pattern:$0x73625140]
        %v477 = vld.sshfl [vmem:[#allocation1 + $0x8] sm:$0xff pattern:$0x73625140]
        %v478 = vld.sshfl [vmem:[#allocation1 + $0x10] sm:$0xff pattern:$0x73625140]
        %v479 = vld.sshfl [vmem:[#allocation1 + $0x18] sm:$0xff pattern:$0x73625140]
        %vm480 = vcmask 31744
        %v482 = vsel %vm480, %v470, 0
        %v485 = vsel %vm480, %v471, 0
        %v488 = vsel %vm480, %v472, 0
        %v491 = vsel %vm480, %v473, 0
        %vm493 = vcmask 1041408
        %v494 = vsel %vm493, %v476, 0
        %v496 = vsel %vm493, %v477, 0
        %v498 = vsel %vm493, %v478, 0
        %v500 = vsel %vm493, %v479, 0
        %502 = vmatpush.bf16.msra.mxu0 0
        %503 = vmatpush.bf16.msra.mxu0 0
        %504 = vmatpush.bf16.msra.mxu0 0
        %505 = vmatpush.bf16.msra.mxu0 0
        %506 = vmatpush.bf16.msra.mxu0 0
        %507 = vmatpush.bf16.msra.mxu0 0
        %508 = vmatpush.bf16.msra.mxu0 0
        %509 = vmatpush.bf16.msra.mxu0 %v494
        %510 = vmatmul.bf16.gmra.mxu0 %v482
        %v511 = vpop.f32.mrf.mxu0
        %v512 = vadd.f32 %v446, %v511
        %v513 = vpop.f32.mrf.mxu0
        %v514 = vadd.f32 %v446, %v513
        %515 = vmatmul.bf16.gmra.mxu0 %v485
        %v516 = vpop.f32.mrf.mxu0
        %v517 = vadd.f32 %v446, %v516
        %v518 = vpop.f32.mrf.mxu0
        %v519 = vadd.f32 %v446, %v518
        %520 = vmatmul.bf16.gmra.mxu0 %v488
        %v521 = vpop.f32.mrf.mxu0
        %v522 = vadd.f32 %v446, %v521
        %v523 = vpop.f32.mrf.mxu0
        %v524 = vadd.f32 %v446, %v523
        %525 = vmatmul.bf16.gmra.mxu0 %v491
        %v526 = vpop.f32.mrf.mxu0
        %v527 = vadd.f32 %v446, %v526
        %v528 = vpop.f32.mrf.mxu0
        %v529 = vadd.f32 %v446, %v528
        %530 = vdwg.mxu0
        %531 = vmatpush.bf16.msra.mxu0 0
        %532 = vmatpush.bf16.msra.mxu0 0
        %533 = vmatpush.bf16.msra.mxu0 0
        %534 = vmatpush.bf16.msra.mxu0 0
        %535 = vmatpush.bf16.msra.mxu0 0
        %536 = vmatpush.bf16.msra.mxu0 0
        %537 = vmatpush.bf16.msra.mxu0 0
        %538 = vmatpush.bf16.msra.mxu0 %v496
        %539 = vmatmul.bf16.gmra.mxu0 %v482
        %v540 = vpop.f32.mrf.mxu0
        %v541 = vadd.f32 %v447, %v540
        %v542 = vpop.f32.mrf.mxu0
        %v543 = vadd.f32 %v447, %v542
        %544 = vmatmul.bf16.gmra.mxu0 %v485
        %v545 = vpop.f32.mrf.mxu0
        %v546 = vadd.f32 %v447, %v545
        %v547 = vpop.f32.mrf.mxu0
        %v548 = vadd.f32 %v447, %v547
        %549 = vmatmul.bf16.gmra.mxu0 %v488
        %v550 = vpop.f32.mrf.mxu0
        %v551 = vadd.f32 %v447, %v550
        %v552 = vpop.f32.mrf.mxu0
        %v553 = vadd.f32 %v447, %v552
        %554 = vmatmul.bf16.gmra.mxu0 %v491
        %v555 = vpop.f32.mrf.mxu0
        %v556 = vadd.f32 %v447, %v555
        %v557 = vpop.f32.mrf.mxu0
        %v558 = vadd.f32 %v447, %v557
        %559 = vdwg.mxu0
        %560 = vmatpush.bf16.msra.mxu0 0
        %561 = vmatpush.bf16.msra.mxu0 0
        %562 = vmatpush.bf16.msra.mxu0 0
        %563 = vmatpush.bf16.msra.mxu0 0
        %564 = vmatpush.bf16.msra.mxu0 0
        %565 = vmatpush.bf16.msra.mxu0 0
        %566 = vmatpush.bf16.msra.mxu0 0
        %567 = vmatpush.bf16.msra.mxu0 %v498
        %568 = vmatmul.bf16.gmra.mxu0 %v482
        %v569 = vpop.f32.mrf.mxu0
        %v570 = vadd.f32 %v448, %v569
        %v571 = vpop.f32.mrf.mxu0
        %v572 = vadd.f32 %v448, %v571
        %573 = vmatmul.bf16.gmra.mxu0 %v485
        %v574 = vpop.f32.mrf.mxu0
        %v575 = vadd.f32 %v448, %v574
        %v576 = vpop.f32.mrf.mxu0
        %v577 = vadd.f32 %v448, %v576
        %578 = vmatmul.bf16.gmra.mxu0 %v488
        %v579 = vpop.f32.mrf.mxu0
        %v580 = vadd.f32 %v448, %v579
        %v581 = vpop.f32.mrf.mxu0
        %v582 = vadd.f32 %v448, %v581
        %583 = vmatmul.bf16.gmra.mxu0 %v491
        %v584 = vpop.f32.mrf.mxu0
        %v585 = vadd.f32 %v448, %v584
        %v586 = vpop.f32.mrf.mxu0
        %v587 = vadd.f32 %v448, %v586
        %588 = vdwg.mxu0
        %589 = vmatpush.bf16.msra.mxu0 0
        %590 = vmatpush.bf16.msra.mxu0 0
        %591 = vmatpush.bf16.msra.mxu0 0
        %592 = vmatpush.bf16.msra.mxu0 0
        %593 = vmatpush.bf16.msra.mxu0 0
        %594 = vmatpush.bf16.msra.mxu0 0
        %595 = vmatpush.bf16.msra.mxu0 0
        %596 = vmatpush.bf16.msra.mxu0 %v500
        %597 = vmatmul.bf16.gmra.mxu0 %v482
        %v598 = vpop.f32.mrf.mxu0
        %v599 = vadd.f32 %v449, %v598
        %v600 = vpop.f32.mrf.mxu0
        %v601 = vadd.f32 %v449, %v600
        %602 = vmatmul.bf16.gmra.mxu0 %v485
        %v603 = vpop.f32.mrf.mxu0
        %v604 = vadd.f32 %v449, %v603
        %v605 = vpop.f32.mrf.mxu0
        %v606 = vadd.f32 %v449, %v605
        %607 = vmatmul.bf16.gmra.mxu0 %v488
        %v608 = vpop.f32.mrf.mxu0
        %v609 = vadd.f32 %v449, %v608
        %v610 = vpop.f32.mrf.mxu0
        %v611 = vadd.f32 %v449, %v610
        %612 = vmatmul.bf16.gmra.mxu0 %v491
        %v613 = vpop.f32.mrf.mxu0
        %v614 = vadd.f32 %v449, %v613
        %v615 = vpop.f32.mrf.mxu0
        %v616 = vadd.f32 %v449, %v615
        %617 = vdwg.mxu0
        %618 = vst [vmem:[#allocation4] sm:$0xff] %v512
        %619 = vst [vmem:[#allocation4 + $0x8] sm:$0xff] %v541
        %620 = vst [vmem:[#allocation4 + $0x10] sm:$0xff] %v570
        %621 = vst [vmem:[#allocation4 + $0x18] sm:$0xff] %v599
        %622 = vst [vmem:[#allocation4 + $0x20] sm:$0xff] %v514
        %623 = vst [vmem:[#allocation4 + $0x28] sm:$0xff] %v543
        %624 = vst [vmem:[#allocation4 + $0x30] sm:$0xff] %v572
        %625 = vst [vmem:[#allocation4 + $0x38] sm:$0xff] %v601
        %626 = vst [vmem:[#allocation4 + $0x40] sm:$0xff] %v517
        %627 = vst [vmem:[#allocation4 + $0x48] sm:$0xff] %v546
        %628 = vst [vmem:[#allocation4 + $0x50] sm:$0xff] %v575
        %629 = vst [vmem:[#allocation4 + $0x58] sm:$0xff] %v604
        %630 = vst [vmem:[#allocation4 + $0x60] sm:$0xff] %v519
        %631 = vst [vmem:[#allocation4 + $0x68] sm:$0xff] %v548
        %632 = vst [vmem:[#allocation4 + $0x70] sm:$0xff] %v577
        %633 = vst [vmem:[#allocation4 + $0x78] sm:$0xff] %v606
        %634 = vst [vmem:[#allocation4 + $0x80] sm:$0xff] %v522
        %635 = vst [vmem:[#allocation4 + $0x88] sm:$0xff] %v551
        %636 = vst [vmem:[#allocation4 + $0x90] sm:$0xff] %v580
        %637 = vst [vmem:[#allocation4 + $0x98] sm:$0xff] %v609
        %638 = vst [vmem:[#allocation4 + $0xa0] sm:$0xff] %v524
        %639 = vst [vmem:[#allocation4 + $0xa8] sm:$0xff] %v553
        %640 = vst [vmem:[#allocation4 + $0xb0] sm:$0xff] %v582
        %641 = vst [vmem:[#allocation4 + $0xb8] sm:$0xff] %v611
        %642 = vst [vmem:[#allocation4 + $0xc0] sm:$0xff] %v527
        %643 = vst [vmem:[#allocation4 + $0xc8] sm:$0xff] %v556
        %644 = vst [vmem:[#allocation4 + $0xd0] sm:$0xff] %v585
        %645 = vst [vmem:[#allocation4 + $0xd8] sm:$0xff] %v614
        %646 = vst [vmem:[#allocation4 + $0xe0] sm:$0xff] %v529
        %647 = vst [vmem:[#allocation4 + $0xe8] sm:$0xff] %v558
        %648 = vst [vmem:[#allocation4 + $0xf0] sm:$0xff] %v587
        %649 = vst [vmem:[#allocation4 + $0xf8] sm:$0xff] %v616
        %v650 = vld [vmem:[%s331] sm:$0xff]
        %v651 = vld [vmem:[%s331 + $0x8] sm:$0xff]
        %v652 = vld [vmem:[%s331 + $0x10] sm:$0xff]
        %v653 = vld [vmem:[%s331 + $0x18] sm:$0xff]
        %v654 = vld [vmem:[%s331 + $0x20] sm:$0xff]
        %v655 = vld [vmem:[%s331 + $0x28] sm:$0xff]
        %v656 = vld [vmem:[%s331 + $0x30] sm:$0xff]
        %v657 = vld [vmem:[%s331 + $0x38] sm:$0xff]
        %v658 = vld [vmem:[%s331 + $0x40] sm:$0xff]
        %v659 = vld [vmem:[%s331 + $0x48] sm:$0xff]
        %v660 = vld [vmem:[%s331 + $0x50] sm:$0xff]
        %v661 = vld [vmem:[%s331 + $0x58] sm:$0xff]
        %v662 = vld [vmem:[%s331 + $0x60] sm:$0xff]
        %v663 = vld [vmem:[%s331 + $0x68] sm:$0xff]
        %v664 = vld [vmem:[%s331 + $0x70] sm:$0xff]
        %v665 = vld [vmem:[%s331 + $0x78] sm:$0xff]
        %v666 = vld [vmem:[%s331 + $0x80] sm:$0xff]
        %v667 = vld [vmem:[%s331 + $0x88] sm:$0xff]
        %v668 = vld [vmem:[%s331 + $0x90] sm:$0xff]
        %v669 = vld [vmem:[%s331 + $0x98] sm:$0xff]
        %v670 = vld [vmem:[%s331 + $0xa0] sm:$0xff]
        %v671 = vld [vmem:[%s331 + $0xa8] sm:$0xff]
        %v672 = vld [vmem:[%s331 + $0xb0] sm:$0xff]
        %v673 = vld [vmem:[%s331 + $0xb8] sm:$0xff]
        %v674 = vld [vmem:[%s331 + $0xc0] sm:$0xff]
        %v675 = vld [vmem:[%s331 + $0xc8] sm:$0xff]
        %v676 = vld [vmem:[%s331 + $0xd0] sm:$0xff]
        %v677 = vld [vmem:[%s331 + $0xd8] sm:$0xff]
        %v678 = vld [vmem:[%s331 + $0xe0] sm:$0xff]
        %v679 = vld [vmem:[%s331 + $0xe8] sm:$0xff]
        %v680 = vld [vmem:[%s331 + $0xf0] sm:$0xff]
        %v681 = vld [vmem:[%s331 + $0xf8] sm:$0xff]
        %s682 = smul.u32 %s24, 7
        %s683 = smul.u32 %s682, 4
        %s684 = smul.addr %s683, 8
        %s685 = scalar_lea.vmem [#allocation4], %s684
        %v686 = vld [vmem:[%s685] sm:$0xff]
        %v687 = vld [vmem:[%s685 + $0x8] sm:$0xff]
        %v688 = vld [vmem:[%s685 + $0x10] sm:$0xff]
        %v689 = vld [vmem:[%s685 + $0x18] sm:$0xff]
        %v690 = vld [vmem:[#allocation2] sm:$0xff]
        %v691 = vld [vmem:[#allocation3] sm:$0xff]
        %v692 = vpack.c.bf16 %v690, %v690
        %v725 = vunpack.c.l.b16 %v650
        %v726 = vunpack.c.h.b16 %v650
        %v727 = vunpack.c.l.b16 %v651
        %v728 = vunpack.c.h.b16 %v651
        %v729 = vunpack.c.l.b16 %v652
        %v730 = vunpack.c.h.b16 %v652
        %v731 = vunpack.c.l.b16 %v653
        %v732 = vunpack.c.h.b16 %v653
        %v733 = vunpack.c.l.b16 %v654
        %v734 = vunpack.c.h.b16 %v654
        %v735 = vunpack.c.l.b16 %v655
        %v736 = vunpack.c.h.b16 %v655
        %v737 = vunpack.c.l.b16 %v656
        %v738 = vunpack.c.h.b16 %v656
        %v739 = vunpack.c.l.b16 %v657
        %v740 = vunpack.c.h.b16 %v657
        %v741 = vunpack.c.l.b16 %v658
        %v742 = vunpack.c.h.b16 %v658
        %v743 = vunpack.c.l.b16 %v659
        %v744 = vunpack.c.h.b16 %v659
        %v745 = vunpack.c.l.b16 %v660
        %v746 = vunpack.c.h.b16 %v660
        %v747 = vunpack.c.l.b16 %v661
        %v748 = vunpack.c.h.b16 %v661
        %v749 = vunpack.c.l.b16 %v662
        %v750 = vunpack.c.h.b16 %v662
        %v751 = vunpack.c.l.b16 %v663
        %v752 = vunpack.c.h.b16 %v663
        %v753 = vunpack.c.l.b16 %v664
        %v754 = vunpack.c.h.b16 %v664
        %v755 = vunpack.c.l.b16 %v665
        %v756 = vunpack.c.h.b16 %v665
        %v757 = vunpack.c.l.b16 %v666
        %v758 = vunpack.c.h.b16 %v666
        %v759 = vunpack.c.l.b16 %v667
        %v760 = vunpack.c.h.b16 %v667
        %v761 = vunpack.c.l.b16 %v668
        %v762 = vunpack.c.h.b16 %v668
        %v763 = vunpack.c.l.b16 %v669
        %v764 = vunpack.c.h.b16 %v669
        %v765 = vunpack.c.l.b16 %v670
        %v766 = vunpack.c.h.b16 %v670
        %v767 = vunpack.c.l.b16 %v671
        %v768 = vunpack.c.h.b16 %v671
        %v769 = vunpack.c.l.b16 %v672
        %v770 = vunpack.c.h.b16 %v672
        %v771 = vunpack.c.l.b16 %v673
        %v772 = vunpack.c.h.b16 %v673
        %v773 = vunpack.c.l.b16 %v674
        %v774 = vunpack.c.h.b16 %v674
        %v775 = vunpack.c.l.b16 %v675
        %v776 = vunpack.c.h.b16 %v675
        %v777 = vunpack.c.l.b16 %v676
        %v778 = vunpack.c.h.b16 %v676
        %v779 = vunpack.c.l.b16 %v677
        %v780 = vunpack.c.h.b16 %v677
        %v781 = vunpack.c.l.b16 %v678
        %v782 = vunpack.c.h.b16 %v678
        %v783 = vunpack.c.l.b16 %v679
        %v784 = vunpack.c.h.b16 %v679
        %v785 = vunpack.c.l.b16 %v680
        %v786 = vunpack.c.h.b16 %v680
        %v787 = vunpack.c.l.b16 %v681
        %v788 = vunpack.c.h.b16 %v681
        %v789 = vpack.c.b16 %v729, %v725
        %v790 = vpack.c.b16 %v730, %v726
        %v791 = vpack.c.b16 %v731, %v727
        %v792 = vpack.c.b16 %v732, %v728
        %v793 = vpack.c.b16 %v737, %v733
        %v794 = vpack.c.b16 %v738, %v734
        %v795 = vpack.c.b16 %v739, %v735
        %v796 = vpack.c.b16 %v740, %v736
        %v797 = vpack.c.b16 %v745, %v741
        %v798 = vpack.c.b16 %v746, %v742
        %v799 = vpack.c.b16 %v747, %v743
        %v800 = vpack.c.b16 %v748, %v744
        %v801 = vpack.c.b16 %v753, %v749
        %v802 = vpack.c.b16 %v754, %v750
        %v803 = vpack.c.b16 %v755, %v751
        %v804 = vpack.c.b16 %v756, %v752
        %v805 = vpack.c.b16 %v761, %v757
        %v806 = vpack.c.b16 %v762, %v758
        %v807 = vpack.c.b16 %v763, %v759
        %v808 = vpack.c.b16 %v764, %v760
        %v809 = vpack.c.b16 %v769, %v765
        %v810 = vpack.c.b16 %v770, %v766
        %v811 = vpack.c.b16 %v771, %v767
        %v812 = vpack.c.b16 %v772, %v768
        %v813 = vpack.c.b16 %v777, %v773
        %v814 = vpack.c.b16 %v778, %v774
        %v815 = vpack.c.b16 %v779, %v775
        %v816 = vpack.c.b16 %v780, %v776
        %v817 = vpack.c.b16 %v785, %v781
        %v818 = vpack.c.b16 %v786, %v782
        %v819 = vpack.c.b16 %v787, %v783
        %v820 = vpack.c.b16 %v788, %v784
        %853 = vmatpush.bf16.msra.mxu0 %v817
        %854 = vmatpush.bf16.msra.mxu0 %v813
        %855 = vmatpush.bf16.msra.mxu0 %v809
        %856 = vmatpush.bf16.msra.mxu0 %v805
        %857 = vmatpush.bf16.msra.mxu0 %v801
        %858 = vmatpush.bf16.msra.mxu0 %v797
        %859 = vmatpush.bf16.msra.mxu0 %v793
        %860 = vmatpush.bf16.msra.mxu0 %v789
        %861 = vmatmul.bf16.gmra.mxu0 %v692
        %v862 = vpop.f32.mrf.mxu0
        %v863 = vadd.f32 0.0, %v862
        %v864 = vpop.f32.mrf.mxu0
        %865 = vdwg.mxu0
        %866 = vmatpush.bf16.msra.mxu0 %v818
        %867 = vmatpush.bf16.msra.mxu0 %v814
        %868 = vmatpush.bf16.msra.mxu0 %v810
        %869 = vmatpush.bf16.msra.mxu0 %v806
        %870 = vmatpush.bf16.msra.mxu0 %v802
        %871 = vmatpush.bf16.msra.mxu0 %v798
        %872 = vmatpush.bf16.msra.mxu0 %v794
        %873 = vmatpush.bf16.msra.mxu0 %v790
        %874 = vmatmul.bf16.gmra.mxu0 %v692
        %v875 = vpop.f32.mrf.mxu0
        %v876 = vadd.f32 0.0, %v875
        %v877 = vpop.f32.mrf.mxu0
        %878 = vdwg.mxu0
        %879 = vmatpush.bf16.msra.mxu0 %v819
        %880 = vmatpush.bf16.msra.mxu0 %v815
        %881 = vmatpush.bf16.msra.mxu0 %v811
        %882 = vmatpush.bf16.msra.mxu0 %v807
        %883 = vmatpush.bf16.msra.mxu0 %v803
        %884 = vmatpush.bf16.msra.mxu0 %v799
        %885 = vmatpush.bf16.msra.mxu0 %v795
        %886 = vmatpush.bf16.msra.mxu0 %v791
        %887 = vmatmul.bf16.gmra.mxu0 %v692
        %v888 = vpop.f32.mrf.mxu0
        %v889 = vadd.f32 0.0, %v888
        %v890 = vpop.f32.mrf.mxu0
        %891 = vdwg.mxu0
        %892 = vmatpush.bf16.msra.mxu0 %v820
        %893 = vmatpush.bf16.msra.mxu0 %v816
        %894 = vmatpush.bf16.msra.mxu0 %v812
        %895 = vmatpush.bf16.msra.mxu0 %v808
        %896 = vmatpush.bf16.msra.mxu0 %v804
        %897 = vmatpush.bf16.msra.mxu0 %v800
        %898 = vmatpush.bf16.msra.mxu0 %v796
        %899 = vmatpush.bf16.msra.mxu0 %v792
        %900 = vmatmul.bf16.gmra.mxu0 %v692
        %v901 = vpop.f32.mrf.mxu0
        %v902 = vadd.f32 0.0, %v901
        %v903 = vpop.f32.mrf.mxu0
        %904 = vdwg.mxu0
        %v905 = vadd.f32 %v686, %v863
        %v906 = vadd.f32 %v687, %v876
        %v907 = vadd.f32 %v688, %v889
        %v908 = vadd.f32 %v689, %v902
        %v909 = vxor.u32 %v905, 2147483648
        %v910 = vmul.f32 %v909, 1.442695
        %v911 = vpow.pop %v910
        %v912 = vadd.f32 %v911, 1.0
        %v913 = vrcp.pop %v912
        %v914 = vmul.f32 %v912, %v913
        %v915 = vsub.f32 1.0, %v914
        %v916 = vmul.f32 %v913, %v915
        %v917 = vadd.f32 %v913, %v916
        %vm918 = vweird.f32 %v912
        %vm919 = vweird.f32 %v913
        %vm920 = vmor %vm918, %vm919
        %v921 = vsel %vm920, %v913, %v917
        %v922 = vand.u32 2147483647, %v912
        %vm923 = vcmp.eq.f32.partialorder %v922, 8.507059e+37
        %v924 = vand.u32 %v912, 2147483648
        %v925 = vor.u32 1.1754944e-38, %v924
        %v926 = vsel %vm923, %v925, %v921
        %v927 = vmul.f32 1.0, %v926
        %v928 = vxor.u32 %v906, 2147483648
        %v929 = vmul.f32 %v928, 1.442695
        %v930 = vpow.pop %v929
        %v931 = vadd.f32 %v930, 1.0
        %v932 = vrcp.pop %v931
        %v933 = vmul.f32 %v931, %v932
        %v934 = vsub.f32 1.0, %v933
        %v935 = vmul.f32 %v932, %v934
        %v936 = vadd.f32 %v932, %v935
        %vm937 = vweird.f32 %v931
        %vm938 = vweird.f32 %v932
        %vm939 = vmor %vm937, %vm938
        %v940 = vsel %vm939, %v932, %v936
        %v941 = vand.u32 2147483647, %v931
        %vm942 = vcmp.eq.f32.partialorder %v941, 8.507059e+37
        %v943 = vand.u32 %v931, 2147483648
        %v944 = vor.u32 1.1754944e-38, %v943
        %v945 = vsel %vm942, %v944, %v940
        %v946 = vmul.f32 1.0, %v945
        %v947 = vtanh.pop %v907
        %v948 = vxor.u32 %v908, 2147483648
        %v949 = vmul.f32 %v948, 1.442695
        %v950 = vpow.pop %v949
        %v951 = vadd.f32 %v950, 1.0
        %v952 = vrcp.pop %v951
        %v953 = vmul.f32 %v951, %v952
        %v954 = vsub.f32 1.0, %v953
        %v955 = vmul.f32 %v952, %v954
        %v956 = vadd.f32 %v952, %v955
        %vm957 = vweird.f32 %v951
        %vm958 = vweird.f32 %v952
        %vm959 = vmor %vm957, %vm958
        %v960 = vsel %vm959, %v952, %v956
        %v961 = vand.u32 2147483647, %v951
        %vm962 = vcmp.eq.f32.partialorder %v961, 8.507059e+37
        %v963 = vand.u32 %v951, 2147483648
        %v964 = vor.u32 1.1754944e-38, %v963
        %v965 = vsel %vm962, %v964, %v960
        %v966 = vmul.f32 1.0, %v965
        %v967 = vmul.f32 %v946, %v691
        %v968 = vmul.f32 %v927, %v947
        %v969 = vadd.f32 %v967, %v968
        %v970 = vtanh.pop %v969
        %v971 = vmul.f32 %v966, %v970
        %972 = vst [vmem:[#allocation3] sm:$0xff] %v969
        %973 = vst [vmem:[#allocation2] sm:$0xff] %v971
        %v974 = vpack.c.bf16 %v971, %v971
        %s975 = smul.addr %s682, 4
        %s976 = scalar_lea.vmem %s386, %s975 [#allocation7]
        %977 = vst [vmem:[%s976] sm:$0xf] %v974
        %s978 = ssub.s32 1, %s24
        %s979 = smul.u32 %s24, 6
        %s980 = sadd.s32 %s978, %s979
        %s981 = smul.u32 %s980, 4
        %s982 = smul.addr %s981, 8
        %s983 = scalar_lea.vmem [#allocation4], %s982
        %v984 = vld [vmem:[%s983] sm:$0xff]
        %v985 = vld [vmem:[%s983 + $0x8] sm:$0xff]
        %v986 = vld [vmem:[%s983 + $0x10] sm:$0xff]
        %v987 = vld [vmem:[%s983 + $0x18] sm:$0xff]
        %v988 = vld [vmem:[#allocation2] sm:$0xff]
        %v989 = vld [vmem:[#allocation3] sm:$0xff]
        %v990 = vpack.c.bf16 %v988, %v988
        %991 = vmatpush.bf16.msra.mxu0 %v817
        %992 = vmatpush.bf16.msra.mxu0 %v813
        %993 = vmatpush.bf16.msra.mxu0 %v809
        %994 = vmatpush.bf16.msra.mxu0 %v805
        %995 = vmatpush.bf16.msra.mxu0 %v801
        %996 = vmatpush.bf16.msra.mxu0 %v797
        %997 = vmatpush.bf16.msra.mxu0 %v793
        %998 = vmatpush.bf16.msra.mxu0 %v789
        %999 = vmatmul.bf16.gmra.mxu0 %v990
        %v1000 = vpop.f32.mrf.mxu0
        %v1001 = vadd.f32 0.0, %v1000
        %v1002 = vpop.f32.mrf.mxu0
        %1003 = vdwg.mxu0
        %1004 = vmatpush.bf16.msra.mxu0 %v818
        %1005 = vmatpush.bf16.msra.mxu0 %v814
        %1006 = vmatpush.bf16.msra.mxu0 %v810
        %1007 = vmatpush.bf16.msra.mxu0 %v806
        %1008 = vmatpush.bf16.msra.mxu0 %v802
        %1009 = vmatpush.bf16.msra.mxu0 %v798
        %1010 = vmatpush.bf16.msra.mxu0 %v794
        %1011 = vmatpush.bf16.msra.mxu0 %v790
        %1012 = vmatmul.bf16.gmra.mxu0 %v990
        %v1013 = vpop.f32.mrf.mxu0
        %v1014 = vadd.f32 0.0, %v1013
        %v1015 = vpop.f32.mrf.mxu0
        %1016 = vdwg.mxu0
        %1017 = vmatpush.bf16.msra.mxu0 %v819
        %1018 = vmatpush.bf16.msra.mxu0 %v815
        %1019 = vmatpush.bf16.msra.mxu0 %v811
        %1020 = vmatpush.bf16.msra.mxu0 %v807
        %1021 = vmatpush.bf16.msra.mxu0 %v803
        %1022 = vmatpush.bf16.msra.mxu0 %v799
        %1023 = vmatpush.bf16.msra.mxu0 %v795
        %1024 = vmatpush.bf16.msra.mxu0 %v791
        %1025 = vmatmul.bf16.gmra.mxu0 %v990
        %v1026 = vpop.f32.mrf.mxu0
        %v1027 = vadd.f32 0.0, %v1026
        %v1028 = vpop.f32.mrf.mxu0
        %1029 = vdwg.mxu0
        %1030 = vmatpush.bf16.msra.mxu0 %v820
        %1031 = vmatpush.bf16.msra.mxu0 %v816
        %1032 = vmatpush.bf16.msra.mxu0 %v812
        %1033 = vmatpush.bf16.msra.mxu0 %v808
        %1034 = vmatpush.bf16.msra.mxu0 %v804
        %1035 = vmatpush.bf16.msra.mxu0 %v800
        %1036 = vmatpush.bf16.msra.mxu0 %v796
        %1037 = vmatpush.bf16.msra.mxu0 %v792
        %1038 = vmatmul.bf16.gmra.mxu0 %v990
        %v1039 = vpop.f32.mrf.mxu0
        %v1040 = vadd.f32 0.0, %v1039
        %v1041 = vpop.f32.mrf.mxu0
        %1042 = vdwg.mxu0
        %v1043 = vadd.f32 %v984, %v1001
        %v1044 = vadd.f32 %v985, %v1014
        %v1045 = vadd.f32 %v986, %v1027
        %v1046 = vadd.f32 %v987, %v1040
        %v1047 = vxor.u32 %v1043, 2147483648
        %v1048 = vmul.f32 %v1047, 1.442695
        %v1049 = vpow.pop %v1048
        %v1050 = vadd.f32 %v1049, 1.0
        %v1051 = vrcp.pop %v1050
        %v1052 = vmul.f32 %v1050, %v1051
        %v1053 = vsub.f32 1.0, %v1052
        %v1054 = vmul.f32 %v1051, %v1053
        %v1055 = vadd.f32 %v1051, %v1054
        %vm1056 = vweird.f32 %v1050
        %vm1057 = vweird.f32 %v1051
        %vm1058 = vmor %vm1056, %vm1057
        %v1059 = vsel %vm1058, %v1051, %v1055
        %v1060 = vand.u32 2147483647, %v1050
        %vm1061 = vcmp.eq.f32.partialorder %v1060, 8.507059e+37
        %v1062 = vand.u32 %v1050, 2147483648
        %v1063 = vor.u32 1.1754944e-38, %v1062
        %v1064 = vsel %vm1061, %v1063, %v1059
        %v1065 = vmul.f32 1.0, %v1064
        %v1066 = vxor.u32 %v1044, 2147483648
        %v1067 = vmul.f32 %v1066, 1.442695
        %v1068 = vpow.pop %v1067
        %v1069 = vadd.f32 %v1068, 1.0
        %v1070 = vrcp.pop %v1069
        %v1071 = vmul.f32 %v1069, %v1070
        %v1072 = vsub.f32 1.0, %v1071
        %v1073 = vmul.f32 %v1070, %v1072
        %v1074 = vadd.f32 %v1070, %v1073
        %vm1075 = vweird.f32 %v1069
        %vm1076 = vweird.f32 %v1070
        %vm1077 = vmor %vm1075, %vm1076
        %v1078 = vsel %vm1077, %v1070, %v1074
        %v1079 = vand.u32 2147483647, %v1069
        %vm1080 = vcmp.eq.f32.partialorder %v1079, 8.507059e+37
        %v1081 = vand.u32 %v1069, 2147483648
        %v1082 = vor.u32 1.1754944e-38, %v1081
        %v1083 = vsel %vm1080, %v1082, %v1078
        %v1084 = vmul.f32 1.0, %v1083
        %v1085 = vtanh.pop %v1045
        %v1086 = vxor.u32 %v1046, 2147483648
        %v1087 = vmul.f32 %v1086, 1.442695
        %v1088 = vpow.pop %v1087
        %v1089 = vadd.f32 %v1088, 1.0
        %v1090 = vrcp.pop %v1089
        %v1091 = vmul.f32 %v1089, %v1090
        %v1092 = vsub.f32 1.0, %v1091
        %v1093 = vmul.f32 %v1090, %v1092
        %v1094 = vadd.f32 %v1090, %v1093
        %vm1095 = vweird.f32 %v1089
        %vm1096 = vweird.f32 %v1090
        %vm1097 = vmor %vm1095, %vm1096
        %v1098 = vsel %vm1097, %v1090, %v1094
        %v1099 = vand.u32 2147483647, %v1089
        %vm1100 = vcmp.eq.f32.partialorder %v1099, 8.507059e+37
        %v1101 = vand.u32 %v1089, 2147483648
        %v1102 = vor.u32 1.1754944e-38, %v1101
        %v1103 = vsel %vm1100, %v1102, %v1098
        %v1104 = vmul.f32 1.0, %v1103
        %v1105 = vmul.f32 %v1084, %v989
        %v1106 = vmul.f32 %v1065, %v1085
        %v1107 = vadd.f32 %v1105, %v1106
        %v1108 = vtanh.pop %v1107
        %v1109 = vmul.f32 %v1104, %v1108
        %1110 = vst [vmem:[#allocation3] sm:$0xff] %v1107
        %1111 = vst [vmem:[#allocation2] sm:$0xff] %v1109
        %v1112 = vpack.c.bf16 %v1109, %v1109
        %s1113 = smul.addr %s980, 4
        %s1114 = scalar_lea.vmem %s386, %s1113 [#allocation7]
        %1115 = vst [vmem:[%s1114] sm:$0xf] %v1112
        %s1116 = smul.u32 %s978, 2
        %s1117 = smul.u32 %s24, 5
        %s1118 = sadd.s32 %s1116, %s1117
        %s1119 = smul.u32 %s1118, 4
        %s1120 = smul.addr %s1119, 8
        %s1121 = scalar_lea.vmem [#allocation4], %s1120
        %v1122 = vld [vmem:[%s1121] sm:$0xff]
        %v1123 = vld [vmem:[%s1121 + $0x8] sm:$0xff]
        %v1124 = vld [vmem:[%s1121 + $0x10] sm:$0xff]
        %v1125 = vld [vmem:[%s1121 + $0x18] sm:$0xff]
        %v1126 = vld [vmem:[#allocation2] sm:$0xff]
        %v1127 = vld [vmem:[#allocation3] sm:$0xff]
        %v1128 = vpack.c.bf16 %v1126, %v1126
        %1129 = vmatpush.bf16.msra.mxu0 %v817
        %1130 = vmatpush.bf16.msra.mxu0 %v813
        %1131 = vmatpush.bf16.msra.mxu0 %v809
        %1132 = vmatpush.bf16.msra.mxu0 %v805
        %1133 = vmatpush.bf16.msra.mxu0 %v801
        %1134 = vmatpush.bf16.msra.mxu0 %v797
        %1135 = vmatpush.bf16.msra.mxu0 %v793
        %1136 = vmatpush.bf16.msra.mxu0 %v789
        %1137 = vmatmul.bf16.gmra.mxu0 %v1128
        %v1138 = vpop.f32.mrf.mxu0
        %v1139 = vadd.f32 0.0, %v1138
        %v1140 = vpop.f32.mrf.mxu0
        %1141 = vdwg.mxu0
        %1142 = vmatpush.bf16.msra.mxu0 %v818
        %1143 = vmatpush.bf16.msra.mxu0 %v814
        %1144 = vmatpush.bf16.msra.mxu0 %v810
        %1145 = vmatpush.bf16.msra.mxu0 %v806
        %1146 = vmatpush.bf16.msra.mxu0 %v802
        %1147 = vmatpush.bf16.msra.mxu0 %v798
        %1148 = vmatpush.bf16.msra.mxu0 %v794
        %1149 = vmatpush.bf16.msra.mxu0 %v790
        %1150 = vmatmul.bf16.gmra.mxu0 %v1128
        %v1151 = vpop.f32.mrf.mxu0
        %v1152 = vadd.f32 0.0, %v1151
        %v1153 = vpop.f32.mrf.mxu0
        %1154 = vdwg.mxu0
        %1155 = vmatpush.bf16.msra.mxu0 %v819
        %1156 = vmatpush.bf16.msra.mxu0 %v815
        %1157 = vmatpush.bf16.msra.mxu0 %v811
        %1158 = vmatpush.bf16.msra.mxu0 %v807
        %1159 = vmatpush.bf16.msra.mxu0 %v803
        %1160 = vmatpush.bf16.msra.mxu0 %v799
        %1161 = vmatpush.bf16.msra.mxu0 %v795
        %1162 = vmatpush.bf16.msra.mxu0 %v791
        %1163 = vmatmul.bf16.gmra.mxu0 %v1128
        %v1164 = vpop.f32.mrf.mxu0
        %v1165 = vadd.f32 0.0, %v1164
        %v1166 = vpop.f32.mrf.mxu0
        %1167 = vdwg.mxu0
        %1168 = vmatpush.bf16.msra.mxu0 %v820
        %1169 = vmatpush.bf16.msra.mxu0 %v816
        %1170 = vmatpush.bf16.msra.mxu0 %v812
        %1171 = vmatpush.bf16.msra.mxu0 %v808
        %1172 = vmatpush.bf16.msra.mxu0 %v804
        %1173 = vmatpush.bf16.msra.mxu0 %v800
        %1174 = vmatpush.bf16.msra.mxu0 %v796
        %1175 = vmatpush.bf16.msra.mxu0 %v792
        %1176 = vmatmul.bf16.gmra.mxu0 %v1128
        %v1177 = vpop.f32.mrf.mxu0
        %v1178 = vadd.f32 0.0, %v1177
        %v1179 = vpop.f32.mrf.mxu0
        %1180 = vdwg.mxu0
        %v1181 = vadd.f32 %v1122, %v1139
        %v1182 = vadd.f32 %v1123, %v1152
        %v1183 = vadd.f32 %v1124, %v1165
        %v1184 = vadd.f32 %v1125, %v1178
        %v1185 = vxor.u32 %v1181, 2147483648
        %v1186 = vmul.f32 %v1185, 1.442695
        %v1187 = vpow.pop %v1186
        %v1188 = vadd.f32 %v1187, 1.0
        %v1189 = vrcp.pop %v1188
        %v1190 = vmul.f32 %v1188, %v1189
        %v1191 = vsub.f32 1.0, %v1190
        %v1192 = vmul.f32 %v1189, %v1191
        %v1193 = vadd.f32 %v1189, %v1192
        %vm1194 = vweird.f32 %v1188
        %vm1195 = vweird.f32 %v1189
        %vm1196 = vmor %vm1194, %vm1195
        %v1197 = vsel %vm1196, %v1189, %v1193
        %v1198 = vand.u32 2147483647, %v1188
        %vm1199 = vcmp.eq.f32.partialorder %v1198, 8.507059e+37
        %v1200 = vand.u32 %v1188, 2147483648
        %v1201 = vor.u32 1.1754944e-38, %v1200
        %v1202 = vsel %vm1199, %v1201, %v1197
        %v1203 = vmul.f32 1.0, %v1202
        %v1204 = vxor.u32 %v1182, 2147483648
        %v1205 = vmul.f32 %v1204, 1.442695
        %v1206 = vpow.pop %v1205
        %v1207 = vadd.f32 %v1206, 1.0
        %v1208 = vrcp.pop %v1207
        %v1209 = vmul.f32 %v1207, %v1208
        %v1210 = vsub.f32 1.0, %v1209
        %v1211 = vmul.f32 %v1208, %v1210
        %v1212 = vadd.f32 %v1208, %v1211
        %vm1213 = vweird.f32 %v1207
        %vm1214 = vweird.f32 %v1208
        %vm1215 = vmor %vm1213, %vm1214
        %v1216 = vsel %vm1215, %v1208, %v1212
        %v1217 = vand.u32 2147483647, %v1207
        %vm1218 = vcmp.eq.f32.partialorder %v1217, 8.507059e+37
        %v1219 = vand.u32 %v1207, 2147483648
        %v1220 = vor.u32 1.1754944e-38, %v1219
        %v1221 = vsel %vm1218, %v1220, %v1216
        %v1222 = vmul.f32 1.0, %v1221
        %v1223 = vtanh.pop %v1183
        %v1224 = vxor.u32 %v1184, 2147483648
        %v1225 = vmul.f32 %v1224, 1.442695
        %v1226 = vpow.pop %v1225
        %v1227 = vadd.f32 %v1226, 1.0
        %v1228 = vrcp.pop %v1227
        %v1229 = vmul.f32 %v1227, %v1228
        %v1230 = vsub.f32 1.0, %v1229
        %v1231 = vmul.f32 %v1228, %v1230
        %v1232 = vadd.f32 %v1228, %v1231
        %vm1233 = vweird.f32 %v1227
        %vm1234 = vweird.f32 %v1228
        %vm1235 = vmor %vm1233, %vm1234
        %v1236 = vsel %vm1235, %v1228, %v1232
        %v1237 = vand.u32 2147483647, %v1227
        %vm1238 = vcmp.eq.f32.partialorder %v1237, 8.507059e+37
        %v1239 = vand.u32 %v1227, 2147483648
        %v1240 = vor.u32 1.1754944e-38, %v1239
        %v1241 = vsel %vm1238, %v1240, %v1236
        %v1242 = vmul.f32 1.0, %v1241
        %v1243 = vmul.f32 %v1222, %v1127
        %v1244 = vmul.f32 %v1203, %v1223
        %v1245 = vadd.f32 %v1243, %v1244
        %v1246 = vtanh.pop %v1245
        %v1247 = vmul.f32 %v1242, %v1246
        %1248 = vst [vmem:[#allocation3] sm:$0xff] %v1245
        %1249 = vst [vmem:[#allocation2] sm:$0xff] %v1247
        %v1250 = vpack.c.bf16 %v1247, %v1247
        %s1251 = smul.addr %s1118, 4
        %s1252 = scalar_lea.vmem %s386, %s1251 [#allocation7]
        %1253 = vst [vmem:[%s1252] sm:$0xf] %v1250
        %s1254 = smul.u32 %s978, 3
        %s1255 = smul.u32 %s24, 4
        %s1256 = sadd.s32 %s1254, %s1255
        %s1257 = smul.u32 %s1256, 4
        %s1258 = smul.addr %s1257, 8
        %s1259 = scalar_lea.vmem [#allocation4], %s1258
        %v1260 = vld [vmem:[%s1259] sm:$0xff]
        %v1261 = vld [vmem:[%s1259 + $0x8] sm:$0xff]
        %v1262 = vld [vmem:[%s1259 + $0x10] sm:$0xff]
        %v1263 = vld [vmem:[%s1259 + $0x18] sm:$0xff]
        %v1264 = vld [vmem:[#allocation2] sm:$0xff]
        %v1265 = vld [vmem:[#allocation3] sm:$0xff]
        %v1266 = vpack.c.bf16 %v1264, %v1264
        %1267 = vmatpush.bf16.msra.mxu0 %v817
        %1268 = vmatpush.bf16.msra.mxu0 %v813
        %1269 = vmatpush.bf16.msra.mxu0 %v809
        %1270 = vmatpush.bf16.msra.mxu0 %v805
        %1271 = vmatpush.bf16.msra.mxu0 %v801
        %1272 = vmatpush.bf16.msra.mxu0 %v797
        %1273 = vmatpush.bf16.msra.mxu0 %v793
        %1274 = vmatpush.bf16.msra.mxu0 %v789
        %1275 = vmatmul.bf16.gmra.mxu0 %v1266
        %v1276 = vpop.f32.mrf.mxu0
        %v1277 = vadd.f32 0.0, %v1276
        %v1278 = vpop.f32.mrf.mxu0
        %1279 = vdwg.mxu0
        %1280 = vmatpush.bf16.msra.mxu0 %v818
        %1281 = vmatpush.bf16.msra.mxu0 %v814
        %1282 = vmatpush.bf16.msra.mxu0 %v810
        %1283 = vmatpush.bf16.msra.mxu0 %v806
        %1284 = vmatpush.bf16.msra.mxu0 %v802
        %1285 = vmatpush.bf16.msra.mxu0 %v798
        %1286 = vmatpush.bf16.msra.mxu0 %v794
        %1287 = vmatpush.bf16.msra.mxu0 %v790
        %1288 = vmatmul.bf16.gmra.mxu0 %v1266
        %v1289 = vpop.f32.mrf.mxu0
        %v1290 = vadd.f32 0.0, %v1289
        %v1291 = vpop.f32.mrf.mxu0
        %1292 = vdwg.mxu0
        %1293 = vmatpush.bf16.msra.mxu0 %v819
        %1294 = vmatpush.bf16.msra.mxu0 %v815
        %1295 = vmatpush.bf16.msra.mxu0 %v811
        %1296 = vmatpush.bf16.msra.mxu0 %v807
        %1297 = vmatpush.bf16.msra.mxu0 %v803
        %1298 = vmatpush.bf16.msra.mxu0 %v799
        %1299 = vmatpush.bf16.msra.mxu0 %v795
        %1300 = vmatpush.bf16.msra.mxu0 %v791
        %1301 = vmatmul.bf16.gmra.mxu0 %v1266
        %v1302 = vpop.f32.mrf.mxu0
        %v1303 = vadd.f32 0.0, %v1302
        %v1304 = vpop.f32.mrf.mxu0
        %1305 = vdwg.mxu0
        %1306 = vmatpush.bf16.msra.mxu0 %v820
        %1307 = vmatpush.bf16.msra.mxu0 %v816
        %1308 = vmatpush.bf16.msra.mxu0 %v812
        %1309 = vmatpush.bf16.msra.mxu0 %v808
        %1310 = vmatpush.bf16.msra.mxu0 %v804
        %1311 = vmatpush.bf16.msra.mxu0 %v800
        %1312 = vmatpush.bf16.msra.mxu0 %v796
        %1313 = vmatpush.bf16.msra.mxu0 %v792
        %1314 = vmatmul.bf16.gmra.mxu0 %v1266
        %v1315 = vpop.f32.mrf.mxu0
        %v1316 = vadd.f32 0.0, %v1315
        %v1317 = vpop.f32.mrf.mxu0
        %1318 = vdwg.mxu0
        %v1319 = vadd.f32 %v1260, %v1277
        %v1320 = vadd.f32 %v1261, %v1290
        %v1321 = vadd.f32 %v1262, %v1303
        %v1322 = vadd.f32 %v1263, %v1316
        %v1323 = vxor.u32 %v1319, 2147483648
        %v1324 = vmul.f32 %v1323, 1.442695
        %v1325 = vpow.pop %v1324
        %v1326 = vadd.f32 %v1325, 1.0
        %v1327 = vrcp.pop %v1326
        %v1328 = vmul.f32 %v1326, %v1327
        %v1329 = vsub.f32 1.0, %v1328
        %v1330 = vmul.f32 %v1327, %v1329
        %v1331 = vadd.f32 %v1327, %v1330
        %vm1332 = vweird.f32 %v1326
        %vm1333 = vweird.f32 %v1327
        %vm1334 = vmor %vm1332, %vm1333
        %v1335 = vsel %vm1334, %v1327, %v1331
        %v1336 = vand.u32 2147483647, %v1326
        %vm1337 = vcmp.eq.f32.partialorder %v1336, 8.507059e+37
        %v1338 = vand.u32 %v1326, 2147483648
        %v1339 = vor.u32 1.1754944e-38, %v1338
        %v1340 = vsel %vm1337, %v1339, %v1335
        %v1341 = vmul.f32 1.0, %v1340
        %v1342 = vxor.u32 %v1320, 2147483648
        %v1343 = vmul.f32 %v1342, 1.442695
        %v1344 = vpow.pop %v1343
        %v1345 = vadd.f32 %v1344, 1.0
        %v1346 = vrcp.pop %v1345
        %v1347 = vmul.f32 %v1345, %v1346
        %v1348 = vsub.f32 1.0, %v1347
        %v1349 = vmul.f32 %v1346, %v1348
        %v1350 = vadd.f32 %v1346, %v1349
        %vm1351 = vweird.f32 %v1345
        %vm1352 = vweird.f32 %v1346
        %vm1353 = vmor %vm1351, %vm1352
        %v1354 = vsel %vm1353, %v1346, %v1350
        %v1355 = vand.u32 2147483647, %v1345
        %vm1356 = vcmp.eq.f32.partialorder %v1355, 8.507059e+37
        %v1357 = vand.u32 %v1345, 2147483648
        %v1358 = vor.u32 1.1754944e-38, %v1357
        %v1359 = vsel %vm1356, %v1358, %v1354
        %v1360 = vmul.f32 1.0, %v1359
        %v1361 = vtanh.pop %v1321
        %v1362 = vxor.u32 %v1322, 2147483648
        %v1363 = vmul.f32 %v1362, 1.442695
        %v1364 = vpow.pop %v1363
        %v1365 = vadd.f32 %v1364, 1.0
        %v1366 = vrcp.pop %v1365
        %v1367 = vmul.f32 %v1365, %v1366
        %v1368 = vsub.f32 1.0, %v1367
        %v1369 = vmul.f32 %v1366, %v1368
        %v1370 = vadd.f32 %v1366, %v1369
        %vm1371 = vweird.f32 %v1365
        %vm1372 = vweird.f32 %v1366
        %vm1373 = vmor %vm1371, %vm1372
        %v1374 = vsel %vm1373, %v1366, %v1370
        %v1375 = vand.u32 2147483647, %v1365
        %vm1376 = vcmp.eq.f32.partialorder %v1375, 8.507059e+37
        %v1377 = vand.u32 %v1365, 2147483648
        %v1378 = vor.u32 1.1754944e-38, %v1377
        %v1379 = vsel %vm1376, %v1378, %v1374
        %v1380 = vmul.f32 1.0, %v1379
        %v1381 = vmul.f32 %v1360, %v1265
        %v1382 = vmul.f32 %v1341, %v1361
        %v1383 = vadd.f32 %v1381, %v1382
        %v1384 = vtanh.pop %v1383
        %v1385 = vmul.f32 %v1380, %v1384
        %1386 = vst [vmem:[#allocation3] sm:$0xff] %v1383
        %1387 = vst [vmem:[#allocation2] sm:$0xff] %v1385
        %v1388 = vpack.c.bf16 %v1385, %v1385
        %s1389 = smul.addr %s1256, 4
        %s1390 = scalar_lea.vmem %s386, %s1389 [#allocation7]
        %1391 = vst [vmem:[%s1390] sm:$0xf] %v1388
        %s1392 = smul.u32 %s978, 4
        %s1393 = smul.u32 %s24, 3
        %s1394 = sadd.s32 %s1392, %s1393
        %s1395 = smul.u32 %s1394, 4
        %s1396 = smul.addr %s1395, 8
        %s1397 = scalar_lea.vmem [#allocation4], %s1396
        %v1398 = vld [vmem:[%s1397] sm:$0xff]
        %v1399 = vld [vmem:[%s1397 + $0x8] sm:$0xff]
        %v1400 = vld [vmem:[%s1397 + $0x10] sm:$0xff]
        %v1401 = vld [vmem:[%s1397 + $0x18] sm:$0xff]
        %v1402 = vld [vmem:[#allocation2] sm:$0xff]
        %v1403 = vld [vmem:[#allocation3] sm:$0xff]
        %v1404 = vpack.c.bf16 %v1402, %v1402
        %1405 = vmatpush.bf16.msra.mxu0 %v817
        %1406 = vmatpush.bf16.msra.mxu0 %v813
        %1407 = vmatpush.bf16.msra.mxu0 %v809
        %1408 = vmatpush.bf16.msra.mxu0 %v805
        %1409 = vmatpush.bf16.msra.mxu0 %v801
        %1410 = vmatpush.bf16.msra.mxu0 %v797
        %1411 = vmatpush.bf16.msra.mxu0 %v793
        %1412 = vmatpush.bf16.msra.mxu0 %v789
        %1413 = vmatmul.bf16.gmra.mxu0 %v1404
        %v1414 = vpop.f32.mrf.mxu0
        %v1415 = vadd.f32 0.0, %v1414
        %v1416 = vpop.f32.mrf.mxu0
        %1417 = vdwg.mxu0
        %1418 = vmatpush.bf16.msra.mxu0 %v818
        %1419 = vmatpush.bf16.msra.mxu0 %v814
        %1420 = vmatpush.bf16.msra.mxu0 %v810
        %1421 = vmatpush.bf16.msra.mxu0 %v806
        %1422 = vmatpush.bf16.msra.mxu0 %v802
        %1423 = vmatpush.bf16.msra.mxu0 %v798
        %1424 = vmatpush.bf16.msra.mxu0 %v794
        %1425 = vmatpush.bf16.msra.mxu0 %v790
        %1426 = vmatmul.bf16.gmra.mxu0 %v1404
        %v1427 = vpop.f32.mrf.mxu0
        %v1428 = vadd.f32 0.0, %v1427
        %v1429 = vpop.f32.mrf.mxu0
        %1430 = vdwg.mxu0
        %1431 = vmatpush.bf16.msra.mxu0 %v819
        %1432 = vmatpush.bf16.msra.mxu0 %v815
        %1433 = vmatpush.bf16.msra.mxu0 %v811
        %1434 = vmatpush.bf16.msra.mxu0 %v807
        %1435 = vmatpush.bf16.msra.mxu0 %v803
        %1436 = vmatpush.bf16.msra.mxu0 %v799
        %1437 = vmatpush.bf16.msra.mxu0 %v795
        %1438 = vmatpush.bf16.msra.mxu0 %v791
        %1439 = vmatmul.bf16.gmra.mxu0 %v1404
        %v1440 = vpop.f32.mrf.mxu0
        %v1441 = vadd.f32 0.0, %v1440
        %v1442 = vpop.f32.mrf.mxu0
        %1443 = vdwg.mxu0
        %1444 = vmatpush.bf16.msra.mxu0 %v820
        %1445 = vmatpush.bf16.msra.mxu0 %v816
        %1446 = vmatpush.bf16.msra.mxu0 %v812
        %1447 = vmatpush.bf16.msra.mxu0 %v808
        %1448 = vmatpush.bf16.msra.mxu0 %v804
        %1449 = vmatpush.bf16.msra.mxu0 %v800
        %1450 = vmatpush.bf16.msra.mxu0 %v796
        %1451 = vmatpush.bf16.msra.mxu0 %v792
        %1452 = vmatmul.bf16.gmra.mxu0 %v1404
        %v1453 = vpop.f32.mrf.mxu0
        %v1454 = vadd.f32 0.0, %v1453
        %v1455 = vpop.f32.mrf.mxu0
        %1456 = vdwg.mxu0
        %v1457 = vadd.f32 %v1398, %v1415
        %v1458 = vadd.f32 %v1399, %v1428
        %v1459 = vadd.f32 %v1400, %v1441
        %v1460 = vadd.f32 %v1401, %v1454
        %v1461 = vxor.u32 %v1457, 2147483648
        %v1462 = vmul.f32 %v1461, 1.442695
        %v1463 = vpow.pop %v1462
        %v1464 = vadd.f32 %v1463, 1.0
        %v1465 = vrcp.pop %v1464
        %v1466 = vmul.f32 %v1464, %v1465
        %v1467 = vsub.f32 1.0, %v1466
        %v1468 = vmul.f32 %v1465, %v1467
        %v1469 = vadd.f32 %v1465, %v1468
        %vm1470 = vweird.f32 %v1464
        %vm1471 = vweird.f32 %v1465
        %vm1472 = vmor %vm1470, %vm1471
        %v1473 = vsel %vm1472, %v1465, %v1469
        %v1474 = vand.u32 2147483647, %v1464
        %vm1475 = vcmp.eq.f32.partialorder %v1474, 8.507059e+37
        %v1476 = vand.u32 %v1464, 2147483648
        %v1477 = vor.u32 1.1754944e-38, %v1476
        %v1478 = vsel %vm1475, %v1477, %v1473
        %v1479 = vmul.f32 1.0, %v1478
        %v1480 = vxor.u32 %v1458, 2147483648
        %v1481 = vmul.f32 %v1480, 1.442695
        %v1482 = vpow.pop %v1481
        %v1483 = vadd.f32 %v1482, 1.0
        %v1484 = vrcp.pop %v1483
        %v1485 = vmul.f32 %v1483, %v1484
        %v1486 = vsub.f32 1.0, %v1485
        %v1487 = vmul.f32 %v1484, %v1486
        %v1488 = vadd.f32 %v1484, %v1487
        %vm1489 = vweird.f32 %v1483
        %vm1490 = vweird.f32 %v1484
        %vm1491 = vmor %vm1489, %vm1490
        %v1492 = vsel %vm1491, %v1484, %v1488
        %v1493 = vand.u32 2147483647, %v1483
        %vm1494 = vcmp.eq.f32.partialorder %v1493, 8.507059e+37
        %v1495 = vand.u32 %v1483, 2147483648
        %v1496 = vor.u32 1.1754944e-38, %v1495
        %v1497 = vsel %vm1494, %v1496, %v1492
        %v1498 = vmul.f32 1.0, %v1497
        %v1499 = vtanh.pop %v1459
        %v1500 = vxor.u32 %v1460, 2147483648
        %v1501 = vmul.f32 %v1500, 1.442695
        %v1502 = vpow.pop %v1501
        %v1503 = vadd.f32 %v1502, 1.0
        %v1504 = vrcp.pop %v1503
        %v1505 = vmul.f32 %v1503, %v1504
        %v1506 = vsub.f32 1.0, %v1505
        %v1507 = vmul.f32 %v1504, %v1506
        %v1508 = vadd.f32 %v1504, %v1507
        %vm1509 = vweird.f32 %v1503
        %vm1510 = vweird.f32 %v1504
        %vm1511 = vmor %vm1509, %vm1510
        %v1512 = vsel %vm1511, %v1504, %v1508
        %v1513 = vand.u32 2147483647, %v1503
        %vm1514 = vcmp.eq.f32.partialorder %v1513, 8.507059e+37
        %v1515 = vand.u32 %v1503, 2147483648
        %v1516 = vor.u32 1.1754944e-38, %v1515
        %v1517 = vsel %vm1514, %v1516, %v1512
        %v1518 = vmul.f32 1.0, %v1517
        %v1519 = vmul.f32 %v1498, %v1403
        %v1520 = vmul.f32 %v1479, %v1499
        %v1521 = vadd.f32 %v1519, %v1520
        %v1522 = vtanh.pop %v1521
        %v1523 = vmul.f32 %v1518, %v1522
        %1524 = vst [vmem:[#allocation3] sm:$0xff] %v1521
        %1525 = vst [vmem:[#allocation2] sm:$0xff] %v1523
        %v1526 = vpack.c.bf16 %v1523, %v1523
        %s1527 = smul.addr %s1394, 4
        %s1528 = scalar_lea.vmem %s386, %s1527 [#allocation7]
        %1529 = vst [vmem:[%s1528] sm:$0xf] %v1526
        %s1530 = smul.u32 %s978, 5
        %s1531 = smul.u32 %s24, 2
        %s1532 = sadd.s32 %s1530, %s1531
        %s1533 = smul.u32 %s1532, 4
        %s1534 = smul.addr %s1533, 8
        %s1535 = scalar_lea.vmem [#allocation4], %s1534
        %v1536 = vld [vmem:[%s1535] sm:$0xff]
        %v1537 = vld [vmem:[%s1535 + $0x8] sm:$0xff]
        %v1538 = vld [vmem:[%s1535 + $0x10] sm:$0xff]
        %v1539 = vld [vmem:[%s1535 + $0x18] sm:$0xff]
        %v1540 = vld [vmem:[#allocation2] sm:$0xff]
        %v1541 = vld [vmem:[#allocation3] sm:$0xff]
        %v1542 = vpack.c.bf16 %v1540, %v1540
        %1543 = vmatpush.bf16.msra.mxu0 %v817
        %1544 = vmatpush.bf16.msra.mxu0 %v813
        %1545 = vmatpush.bf16.msra.mxu0 %v809
        %1546 = vmatpush.bf16.msra.mxu0 %v805
        %1547 = vmatpush.bf16.msra.mxu0 %v801
        %1548 = vmatpush.bf16.msra.mxu0 %v797
        %1549 = vmatpush.bf16.msra.mxu0 %v793
        %1550 = vmatpush.bf16.msra.mxu0 %v789
        %1551 = vmatmul.bf16.gmra.mxu0 %v1542
        %v1552 = vpop.f32.mrf.mxu0
        %v1553 = vadd.f32 0.0, %v1552
        %v1554 = vpop.f32.mrf.mxu0
        %1555 = vdwg.mxu0
        %1556 = vmatpush.bf16.msra.mxu0 %v818
        %1557 = vmatpush.bf16.msra.mxu0 %v814
        %1558 = vmatpush.bf16.msra.mxu0 %v810
        %1559 = vmatpush.bf16.msra.mxu0 %v806
        %1560 = vmatpush.bf16.msra.mxu0 %v802
        %1561 = vmatpush.bf16.msra.mxu0 %v798
        %1562 = vmatpush.bf16.msra.mxu0 %v794
        %1563 = vmatpush.bf16.msra.mxu0 %v790
        %1564 = vmatmul.bf16.gmra.mxu0 %v1542
        %v1565 = vpop.f32.mrf.mxu0
        %v1566 = vadd.f32 0.0, %v1565
        %v1567 = vpop.f32.mrf.mxu0
        %1568 = vdwg.mxu0
        %1569 = vmatpush.bf16.msra.mxu0 %v819
        %1570 = vmatpush.bf16.msra.mxu0 %v815
        %1571 = vmatpush.bf16.msra.mxu0 %v811
        %1572 = vmatpush.bf16.msra.mxu0 %v807
        %1573 = vmatpush.bf16.msra.mxu0 %v803
        %1574 = vmatpush.bf16.msra.mxu0 %v799
        %1575 = vmatpush.bf16.msra.mxu0 %v795
        %1576 = vmatpush.bf16.msra.mxu0 %v791
        %1577 = vmatmul.bf16.gmra.mxu0 %v1542
        %v1578 = vpop.f32.mrf.mxu0
        %v1579 = vadd.f32 0.0, %v1578
        %v1580 = vpop.f32.mrf.mxu0
        %1581 = vdwg.mxu0
        %1582 = vmatpush.bf16.msra.mxu0 %v820
        %1583 = vmatpush.bf16.msra.mxu0 %v816
        %1584 = vmatpush.bf16.msra.mxu0 %v812
        %1585 = vmatpush.bf16.msra.mxu0 %v808
        %1586 = vmatpush.bf16.msra.mxu0 %v804
        %1587 = vmatpush.bf16.msra.mxu0 %v800
        %1588 = vmatpush.bf16.msra.mxu0 %v796
        %1589 = vmatpush.bf16.msra.mxu0 %v792
        %1590 = vmatmul.bf16.gmra.mxu0 %v1542
        %v1591 = vpop.f32.mrf.mxu0
        %v1592 = vadd.f32 0.0, %v1591
        %v1593 = vpop.f32.mrf.mxu0
        %1594 = vdwg.mxu0
        %v1595 = vadd.f32 %v1536, %v1553
        %v1596 = vadd.f32 %v1537, %v1566
        %v1597 = vadd.f32 %v1538, %v1579
        %v1598 = vadd.f32 %v1539, %v1592
        %v1599 = vxor.u32 %v1595, 2147483648
        %v1600 = vmul.f32 %v1599, 1.442695
        %v1601 = vpow.pop %v1600
        %v1602 = vadd.f32 %v1601, 1.0
        %v1603 = vrcp.pop %v1602
        %v1604 = vmul.f32 %v1602, %v1603
        %v1605 = vsub.f32 1.0, %v1604
        %v1606 = vmul.f32 %v1603, %v1605
        %v1607 = vadd.f32 %v1603, %v1606
        %vm1608 = vweird.f32 %v1602
        %vm1609 = vweird.f32 %v1603
        %vm1610 = vmor %vm1608, %vm1609
        %v1611 = vsel %vm1610, %v1603, %v1607
        %v1612 = vand.u32 2147483647, %v1602
        %vm1613 = vcmp.eq.f32.partialorder %v1612, 8.507059e+37
        %v1614 = vand.u32 %v1602, 2147483648
        %v1615 = vor.u32 1.1754944e-38, %v1614
        %v1616 = vsel %vm1613, %v1615, %v1611
        %v1617 = vmul.f32 1.0, %v1616
        %v1618 = vxor.u32 %v1596, 2147483648
        %v1619 = vmul.f32 %v1618, 1.442695
        %v1620 = vpow.pop %v1619
        %v1621 = vadd.f32 %v1620, 1.0
        %v1622 = vrcp.pop %v1621
        %v1623 = vmul.f32 %v1621, %v1622
        %v1624 = vsub.f32 1.0, %v1623
        %v1625 = vmul.f32 %v1622, %v1624
        %v1626 = vadd.f32 %v1622, %v1625
        %vm1627 = vweird.f32 %v1621
        %vm1628 = vweird.f32 %v1622
        %vm1629 = vmor %vm1627, %vm1628
        %v1630 = vsel %vm1629, %v1622, %v1626
        %v1631 = vand.u32 2147483647, %v1621
        %vm1632 = vcmp.eq.f32.partialorder %v1631, 8.507059e+37
        %v1633 = vand.u32 %v1621, 2147483648
        %v1634 = vor.u32 1.1754944e-38, %v1633
        %v1635 = vsel %vm1632, %v1634, %v1630
        %v1636 = vmul.f32 1.0, %v1635
        %v1637 = vtanh.pop %v1597
        %v1638 = vxor.u32 %v1598, 2147483648
        %v1639 = vmul.f32 %v1638, 1.442695
        %v1640 = vpow.pop %v1639
        %v1641 = vadd.f32 %v1640, 1.0
        %v1642 = vrcp.pop %v1641
        %v1643 = vmul.f32 %v1641, %v1642
        %v1644 = vsub.f32 1.0, %v1643
        %v1645 = vmul.f32 %v1642, %v1644
        %v1646 = vadd.f32 %v1642, %v1645
        %vm1647 = vweird.f32 %v1641
        %vm1648 = vweird.f32 %v1642
        %vm1649 = vmor %vm1647, %vm1648
        %v1650 = vsel %vm1649, %v1642, %v1646
        %v1651 = vand.u32 2147483647, %v1641
        %vm1652 = vcmp.eq.f32.partialorder %v1651, 8.507059e+37
        %v1653 = vand.u32 %v1641, 2147483648
        %v1654 = vor.u32 1.1754944e-38, %v1653
        %v1655 = vsel %vm1652, %v1654, %v1650
        %v1656 = vmul.f32 1.0, %v1655
        %v1657 = vmul.f32 %v1636, %v1541
        %v1658 = vmul.f32 %v1617, %v1637
        %v1659 = vadd.f32 %v1657, %v1658
        %v1660 = vtanh.pop %v1659
        %v1661 = vmul.f32 %v1656, %v1660
        %1662 = vst [vmem:[#allocation3] sm:$0xff] %v1659
        %1663 = vst [vmem:[#allocation2] sm:$0xff] %v1661
        %v1664 = vpack.c.bf16 %v1661, %v1661
        %s1665 = smul.addr %s1532, 4
        %s1666 = scalar_lea.vmem %s386, %s1665 [#allocation7]
        %1667 = vst [vmem:[%s1666] sm:$0xf] %v1664
        %s1668 = smul.u32 %s978, 6
        %s1669 = sadd.s32 %s1668, %s24
        %s1670 = smul.u32 %s1669, 4
        %s1671 = smul.addr %s1670, 8
        %s1672 = scalar_lea.vmem [#allocation4], %s1671
        %v1673 = vld [vmem:[%s1672] sm:$0xff]
        %v1674 = vld [vmem:[%s1672 + $0x8] sm:$0xff]
        %v1675 = vld [vmem:[%s1672 + $0x10] sm:$0xff]
        %v1676 = vld [vmem:[%s1672 + $0x18] sm:$0xff]
        %v1677 = vld [vmem:[#allocation2] sm:$0xff]
        %v1678 = vld [vmem:[#allocation3] sm:$0xff]
        %v1679 = vpack.c.bf16 %v1677, %v1677
        %1680 = vmatpush.bf16.msra.mxu0 %v817
        %1681 = vmatpush.bf16.msra.mxu0 %v813
        %1682 = vmatpush.bf16.msra.mxu0 %v809
        %1683 = vmatpush.bf16.msra.mxu0 %v805
        %1684 = vmatpush.bf16.msra.mxu0 %v801
        %1685 = vmatpush.bf16.msra.mxu0 %v797
        %1686 = vmatpush.bf16.msra.mxu0 %v793
        %1687 = vmatpush.bf16.msra.mxu0 %v789
        %1688 = vmatmul.bf16.gmra.mxu0 %v1679
        %v1689 = vpop.f32.mrf.mxu0
        %v1690 = vadd.f32 0.0, %v1689
        %v1691 = vpop.f32.mrf.mxu0
        %1692 = vdwg.mxu0
        %1693 = vmatpush.bf16.msra.mxu0 %v818
        %1694 = vmatpush.bf16.msra.mxu0 %v814
        %1695 = vmatpush.bf16.msra.mxu0 %v810
        %1696 = vmatpush.bf16.msra.mxu0 %v806
        %1697 = vmatpush.bf16.msra.mxu0 %v802
        %1698 = vmatpush.bf16.msra.mxu0 %v798
        %1699 = vmatpush.bf16.msra.mxu0 %v794
        %1700 = vmatpush.bf16.msra.mxu0 %v790
        %1701 = vmatmul.bf16.gmra.mxu0 %v1679
        %v1702 = vpop.f32.mrf.mxu0
        %v1703 = vadd.f32 0.0, %v1702
        %v1704 = vpop.f32.mrf.mxu0
        %1705 = vdwg.mxu0
        %1706 = vmatpush.bf16.msra.mxu0 %v819
        %1707 = vmatpush.bf16.msra.mxu0 %v815
        %1708 = vmatpush.bf16.msra.mxu0 %v811
        %1709 = vmatpush.bf16.msra.mxu0 %v807
        %1710 = vmatpush.bf16.msra.mxu0 %v803
        %1711 = vmatpush.bf16.msra.mxu0 %v799
        %1712 = vmatpush.bf16.msra.mxu0 %v795
        %1713 = vmatpush.bf16.msra.mxu0 %v791
        %1714 = vmatmul.bf16.gmra.mxu0 %v1679
        %v1715 = vpop.f32.mrf.mxu0
        %v1716 = vadd.f32 0.0, %v1715
        %v1717 = vpop.f32.mrf.mxu0
        %1718 = vdwg.mxu0
        %1719 = vmatpush.bf16.msra.mxu0 %v820
        %1720 = vmatpush.bf16.msra.mxu0 %v816
        %1721 = vmatpush.bf16.msra.mxu0 %v812
        %1722 = vmatpush.bf16.msra.mxu0 %v808
        %1723 = vmatpush.bf16.msra.mxu0 %v804
        %1724 = vmatpush.bf16.msra.mxu0 %v800
        %1725 = vmatpush.bf16.msra.mxu0 %v796
        %1726 = vmatpush.bf16.msra.mxu0 %v792
        %1727 = vmatmul.bf16.gmra.mxu0 %v1679
        %v1728 = vpop.f32.mrf.mxu0
        %v1729 = vadd.f32 0.0, %v1728
        %v1730 = vpop.f32.mrf.mxu0
        %1731 = vdwg.mxu0
        %v1732 = vadd.f32 %v1673, %v1690
        %v1733 = vadd.f32 %v1674, %v1703
        %v1734 = vadd.f32 %v1675, %v1716
        %v1735 = vadd.f32 %v1676, %v1729
        %v1736 = vxor.u32 %v1732, 2147483648
        %v1737 = vmul.f32 %v1736, 1.442695
        %v1738 = vpow.pop %v1737
        %v1739 = vadd.f32 %v1738, 1.0
        %v1740 = vrcp.pop %v1739
        %v1741 = vmul.f32 %v1739, %v1740
        %v1742 = vsub.f32 1.0, %v1741
        %v1743 = vmul.f32 %v1740, %v1742
        %v1744 = vadd.f32 %v1740, %v1743
        %vm1745 = vweird.f32 %v1739
        %vm1746 = vweird.f32 %v1740
        %vm1747 = vmor %vm1745, %vm1746
        %v1748 = vsel %vm1747, %v1740, %v1744
        %v1749 = vand.u32 2147483647, %v1739
        %vm1750 = vcmp.eq.f32.partialorder %v1749, 8.507059e+37
        %v1751 = vand.u32 %v1739, 2147483648
        %v1752 = vor.u32 1.1754944e-38, %v1751
        %v1753 = vsel %vm1750, %v1752, %v1748
        %v1754 = vmul.f32 1.0, %v1753
        %v1755 = vxor.u32 %v1733, 2147483648
        %v1756 = vmul.f32 %v1755, 1.442695
        %v1757 = vpow.pop %v1756
        %v1758 = vadd.f32 %v1757, 1.0
        %v1759 = vrcp.pop %v1758
        %v1760 = vmul.f32 %v1758, %v1759
        %v1761 = vsub.f32 1.0, %v1760
        %v1762 = vmul.f32 %v1759, %v1761
        %v1763 = vadd.f32 %v1759, %v1762
        %vm1764 = vweird.f32 %v1758
        %vm1765 = vweird.f32 %v1759
        %vm1766 = vmor %vm1764, %vm1765
        %v1767 = vsel %vm1766, %v1759, %v1763
        %v1768 = vand.u32 2147483647, %v1758
        %vm1769 = vcmp.eq.f32.partialorder %v1768, 8.507059e+37
        %v1770 = vand.u32 %v1758, 2147483648
        %v1771 = vor.u32 1.1754944e-38, %v1770
        %v1772 = vsel %vm1769, %v1771, %v1767
        %v1773 = vmul.f32 1.0, %v1772
        %v1774 = vtanh.pop %v1734
        %v1775 = vxor.u32 %v1735, 2147483648
        %v1776 = vmul.f32 %v1775, 1.442695
        %v1777 = vpow.pop %v1776
        %v1778 = vadd.f32 %v1777, 1.0
        %v1779 = vrcp.pop %v1778
        %v1780 = vmul.f32 %v1778, %v1779
        %v1781 = vsub.f32 1.0, %v1780
        %v1782 = vmul.f32 %v1779, %v1781
        %v1783 = vadd.f32 %v1779, %v1782
        %vm1784 = vweird.f32 %v1778
        %vm1785 = vweird.f32 %v1779
        %vm1786 = vmor %vm1784, %vm1785
        %v1787 = vsel %vm1786, %v1779, %v1783
        %v1788 = vand.u32 2147483647, %v1778
        %vm1789 = vcmp.eq.f32.partialorder %v1788, 8.507059e+37
        %v1790 = vand.u32 %v1778, 2147483648
        %v1791 = vor.u32 1.1754944e-38, %v1790
        %v1792 = vsel %vm1789, %v1791, %v1787
        %v1793 = vmul.f32 1.0, %v1792
        %v1794 = vmul.f32 %v1773, %v1678
        %v1795 = vmul.f32 %v1754, %v1774
        %v1796 = vadd.f32 %v1794, %v1795
        %v1797 = vtanh.pop %v1796
        %v1798 = vmul.f32 %v1793, %v1797
        %1799 = vst [vmem:[#allocation3] sm:$0xff] %v1796
        %1800 = vst [vmem:[#allocation2] sm:$0xff] %v1798
        %v1801 = vpack.c.bf16 %v1798, %v1798
        %s1802 = smul.addr %s1669, 4
        %s1803 = scalar_lea.vmem %s386, %s1802 [#allocation7]
        %1804 = vst [vmem:[%s1803] sm:$0xf] %v1801
        %s1805 = smul.u32 %s978, 7
        %s1806 = smul.u32 %s1805, 4
        %s1807 = smul.addr %s1806, 8
        %s1808 = scalar_lea.vmem [#allocation4], %s1807
        %v1809 = vld [vmem:[%s1808] sm:$0xff]
        %v1810 = vld [vmem:[%s1808 + $0x8] sm:$0xff]
        %v1811 = vld [vmem:[%s1808 + $0x10] sm:$0xff]
        %v1812 = vld [vmem:[%s1808 + $0x18] sm:$0xff]
        %v1813 = vld [vmem:[#allocation2] sm:$0xff]
        %v1814 = vld [vmem:[#allocation3] sm:$0xff]
        %v1815 = vpack.c.bf16 %v1813, %v1813
        %1816 = vmatpush.bf16.msra.mxu0 %v817
        %1817 = vmatpush.bf16.msra.mxu0 %v813
        %1818 = vmatpush.bf16.msra.mxu0 %v809
        %1819 = vmatpush.bf16.msra.mxu0 %v805
        %1820 = vmatpush.bf16.msra.mxu0 %v801
        %1821 = vmatpush.bf16.msra.mxu0 %v797
        %1822 = vmatpush.bf16.msra.mxu0 %v793
        %1823 = vmatpush.bf16.msra.mxu0 %v789
        %1824 = vmatmul.bf16.gmra.mxu0 %v1815
        %v1825 = vpop.f32.mrf.mxu0
        %v1826 = vadd.f32 0.0, %v1825
        %v1827 = vpop.f32.mrf.mxu0
        %1828 = vdwg.mxu0
        %1829 = vmatpush.bf16.msra.mxu0 %v818
        %1830 = vmatpush.bf16.msra.mxu0 %v814
        %1831 = vmatpush.bf16.msra.mxu0 %v810
        %1832 = vmatpush.bf16.msra.mxu0 %v806
        %1833 = vmatpush.bf16.msra.mxu0 %v802
        %1834 = vmatpush.bf16.msra.mxu0 %v798
        %1835 = vmatpush.bf16.msra.mxu0 %v794
        %1836 = vmatpush.bf16.msra.mxu0 %v790
        %1837 = vmatmul.bf16.gmra.mxu0 %v1815
        %v1838 = vpop.f32.mrf.mxu0
        %v1839 = vadd.f32 0.0, %v1838
        %v1840 = vpop.f32.mrf.mxu0
        %1841 = vdwg.mxu0
        %1842 = vmatpush.bf16.msra.mxu0 %v819
        %1843 = vmatpush.bf16.msra.mxu0 %v815
        %1844 = vmatpush.bf16.msra.mxu0 %v811
        %1845 = vmatpush.bf16.msra.mxu0 %v807
        %1846 = vmatpush.bf16.msra.mxu0 %v803
        %1847 = vmatpush.bf16.msra.mxu0 %v799
        %1848 = vmatpush.bf16.msra.mxu0 %v795
        %1849 = vmatpush.bf16.msra.mxu0 %v791
        %1850 = vmatmul.bf16.gmra.mxu0 %v1815
        %v1851 = vpop.f32.mrf.mxu0
        %v1852 = vadd.f32 0.0, %v1851
        %v1853 = vpop.f32.mrf.mxu0
        %1854 = vdwg.mxu0
        %1855 = vmatpush.bf16.msra.mxu0 %v820
        %1856 = vmatpush.bf16.msra.mxu0 %v816
        %1857 = vmatpush.bf16.msra.mxu0 %v812
        %1858 = vmatpush.bf16.msra.mxu0 %v808
        %1859 = vmatpush.bf16.msra.mxu0 %v804
        %1860 = vmatpush.bf16.msra.mxu0 %v800
        %1861 = vmatpush.bf16.msra.mxu0 %v796
        %1862 = vmatpush.bf16.msra.mxu0 %v792
        %1863 = vmatmul.bf16.gmra.mxu0 %v1815
        %v1864 = vpop.f32.mrf.mxu0
        %v1865 = vadd.f32 0.0, %v1864
        %v1866 = vpop.f32.mrf.mxu0
        %1867 = vdwg.mxu0
        %v1868 = vadd.f32 %v1809, %v1826
        %v1869 = vadd.f32 %v1810, %v1839
        %v1870 = vadd.f32 %v1811, %v1852
        %v1871 = vadd.f32 %v1812, %v1865
        %v1872 = vxor.u32 %v1868, 2147483648
        %v1873 = vmul.f32 %v1872, 1.442695
        %v1874 = vpow.pop %v1873
        %v1875 = vadd.f32 %v1874, 1.0
        %v1876 = vrcp.pop %v1875
        %v1877 = vmul.f32 %v1875, %v1876
        %v1878 = vsub.f32 1.0, %v1877
        %v1879 = vmul.f32 %v1876, %v1878
        %v1880 = vadd.f32 %v1876, %v1879
        %vm1881 = vweird.f32 %v1875
        %vm1882 = vweird.f32 %v1876
        %vm1883 = vmor %vm1881, %vm1882
        %v1884 = vsel %vm1883, %v1876, %v1880
        %v1885 = vand.u32 2147483647, %v1875
        %vm1886 = vcmp.eq.f32.partialorder %v1885, 8.507059e+37
        %v1887 = vand.u32 %v1875, 2147483648
        %v1888 = vor.u32 1.1754944e-38, %v1887
        %v1889 = vsel %vm1886, %v1888, %v1884
        %v1890 = vmul.f32 1.0, %v1889
        %v1891 = vxor.u32 %v1869, 2147483648
        %v1892 = vmul.f32 %v1891, 1.442695
        %v1893 = vpow.pop %v1892
        %v1894 = vadd.f32 %v1893, 1.0
        %v1895 = vrcp.pop %v1894
        %v1896 = vmul.f32 %v1894, %v1895
        %v1897 = vsub.f32 1.0, %v1896
        %v1898 = vmul.f32 %v1895, %v1897
        %v1899 = vadd.f32 %v1895, %v1898
        %vm1900 = vweird.f32 %v1894
        %vm1901 = vweird.f32 %v1895
        %vm1902 = vmor %vm1900, %vm1901
        %v1903 = vsel %vm1902, %v1895, %v1899
        %v1904 = vand.u32 2147483647, %v1894
        %vm1905 = vcmp.eq.f32.partialorder %v1904, 8.507059e+37
        %v1906 = vand.u32 %v1894, 2147483648
        %v1907 = vor.u32 1.1754944e-38, %v1906
        %v1908 = vsel %vm1905, %v1907, %v1903
        %v1909 = vmul.f32 1.0, %v1908
        %v1910 = vtanh.pop %v1870
        %v1911 = vxor.u32 %v1871, 2147483648
        %v1912 = vmul.f32 %v1911, 1.442695
        %v1913 = vpow.pop %v1912
        %v1914 = vadd.f32 %v1913, 1.0
        %v1915 = vrcp.pop %v1914
        %v1916 = vmul.f32 %v1914, %v1915
        %v1917 = vsub.f32 1.0, %v1916
        %v1918 = vmul.f32 %v1915, %v1917
        %v1919 = vadd.f32 %v1915, %v1918
        %vm1920 = vweird.f32 %v1914
        %vm1921 = vweird.f32 %v1915
        %vm1922 = vmor %vm1920, %vm1921
        %v1923 = vsel %vm1922, %v1915, %v1919
        %v1924 = vand.u32 2147483647, %v1914
        %vm1925 = vcmp.eq.f32.partialorder %v1924, 8.507059e+37
        %v1926 = vand.u32 %v1914, 2147483648
        %v1927 = vor.u32 1.1754944e-38, %v1926
        %v1928 = vsel %vm1925, %v1927, %v1923
        %v1929 = vmul.f32 1.0, %v1928
        %v1930 = vmul.f32 %v1909, %v1814
        %v1931 = vmul.f32 %v1890, %v1910
        %v1932 = vadd.f32 %v1930, %v1931
        %v1933 = vtanh.pop %v1932
        %v1934 = vmul.f32 %v1929, %v1933
        %1935 = vst [vmem:[#allocation3] sm:$0xff] %v1932
        %1936 = vst [vmem:[#allocation2] sm:$0xff] %v1934
        %v1937 = vpack.c.bf16 %v1934, %v1934
        %s1938 = smul.addr %s1805, 4
        %s1939 = scalar_lea.vmem %s386, %s1938 [#allocation7]
        %1940 = vst [vmem:[%s1939] sm:$0xf] %v1937
        %s1941 = sand.u32 %s218, 1
        %s1942 = sand.u32 %s218, 1
        %s1943 = smul.addr %s1942, 32
        %s1944 = scalar_lea.vmem [#allocation7], %s1943
        // Predicated region
        $region53: #{lstm_block_forward.2} parent=43 // pred_check
          %p1945 = pneg %p228
        $region54: #{lstm_block_forward.2} parent=43 // pred_check_branch
          %1947 = sbr.rel (%p1945) target = $region56
        $region55: #{lstm_block_forward.2} parent=43 // pred_region
          %s1948 = ssub.s32 1, %s24
          %s1949 = smul.u32 %s1948, %s25
          %s1950 = ssub.s32 0, %s25
          %s1951 = smul.u32 %s24, %s1950
          %s1952 = sadd.s32 %s1949, %s1951
          %s1953 = smul.u32 8, %s1952
          %s1954 = smul.addr %s1953, 2
          %s1955 = sadd.s32 %s24, %s1954
          %s1956 = smul.addr %s1955, 4
          %s1957 = scalar_lea.vmem %s6, %s1956
          // Predicated region
          $region57: #{lstm_block_forward.2} parent=55 // pred_check
            _
          $region58: #{lstm_block_forward.2} parent=55 // pred_check_branch
            %1959 = sbr.rel (0) target = $region60
          $region59: #{lstm_block_forward.2} parent=55 // pred_region
            // Predicated region
            $region61: #{lstm_block_forward.2} parent=59 // pred_check
              _
            $region62: #{lstm_block_forward.2} parent=59 // pred_check_branch
              %1961 = sbr.rel target = $region64
            $region63: #{lstm_block_forward.2} parent=59 // pred_region
              // Predicated region
              $region76: #{lstm_block_forward.2} parent=63 // pred_check
                _
              $region77: #{lstm_block_forward.2} parent=63 // pred_check_branch
                %1991 = sbr.rel (0) target = $region79
              $region78: #{lstm_block_forward.2} parent=63 // pred_region
                loop: start=0, step=1, limit=1
                $region80: #{lstm_block_forward.2} parent=78 // loop_pre_header
                  _
                $region81: #{lstm_block_forward.2} parent=78 // loop_header
                  %s1993 = sphi 0, %s1997
                  %p1994 = scmp.ge.s32.totalorder %s1993, 1
                  %s1998 = sphi %s1944, %s1944
                  %s1999 = sphi %s1957, %s1957
                $region82: #{lstm_block_forward.2} parent=78 // loop_header_branch
                  %1996 = sbr.rel (%p1994) target = $region86
                $region83: #{lstm_block_forward.2} parent=78 // loop_body
                  _
                $region84: #{lstm_block_forward.2} parent=78 // loop_footer
                  %s1997 = sadd.s32 1, %s1993
                $region85: #{lstm_block_forward.2} parent=78 // loop_footer_branch
                  %1992 = sbr.rel target = $region81
                $region86: #{lstm_block_forward.2} parent=78 // loop_exit
                  _
                %s2001 = ssub.s32 16, 1
                loop: start=0, step=1, limit=1
                $region87: #{lstm_block_forward.2} parent=78 // loop_pre_header
                  _
                $region88: #{lstm_block_forward.2} parent=78 // loop_header
                  %s2003 = sphi 0, %s2007
                  %p2004 = scmp.ge.s32.totalorder %s2003, 1
                  %s2008 = sphi %s1944, %s1944
                  %s2009 = sphi %s1957, %s1957
                $region89: #{lstm_block_forward.2} parent=78 // loop_header_branch
                  %2006 = sbr.rel (%p2004) target = $region93
                $region90: #{lstm_block_forward.2} parent=78 // loop_body
                  %v2010 = vld [vmem:[%s2008] sm:%s2001]
                  %2011 = vst [vmem:[%s2009] sm:%s2001] %v2010
                  %v2012 = vld [vmem:[%s2008 + $0x4] sm:%s2001]
                  %2013 = vst [vmem:[%s2009 + $0x8] sm:%s2001] %v2012
                  %v2014 = vld [vmem:[%s2008 + $0x8] sm:%s2001]
                  %2015 = vst [vmem:[%s2009 + $0x10] sm:%s2001] %v2014
                  %v2016 = vld [vmem:[%s2008 + $0xc] sm:%s2001]
                  %2017 = vst [vmem:[%s2009 + $0x18] sm:%s2001] %v2016
                  %v2018 = vld [vmem:[%s2008 + $0x10] sm:%s2001]
                  %2019 = vst [vmem:[%s2009 + $0x20] sm:%s2001] %v2018
                  %v2020 = vld [vmem:[%s2008 + $0x14] sm:%s2001]
                  %2021 = vst [vmem:[%s2009 + $0x28] sm:%s2001] %v2020
                  %v2022 = vld [vmem:[%s2008 + $0x18] sm:%s2001]
                  %2023 = vst [vmem:[%s2009 + $0x30] sm:%s2001] %v2022
                  %v2024 = vld [vmem:[%s2008 + $0x1c] sm:%s2001]
                  %2025 = vst [vmem:[%s2009 + $0x38] sm:%s2001] %v2024
                $region91: #{lstm_block_forward.2} parent=78 // loop_footer
                  %s2007 = sadd.s32 1, %s2003
                $region92: #{lstm_block_forward.2} parent=78 // loop_footer_branch
                  %2002 = sbr.rel target = $region88
                $region93: #{lstm_block_forward.2} parent=78 // loop_exit
                  _
              $region79: #{lstm_block_forward.2} parent=63 // pred_fallthru
                _
            $region64: #{lstm_block_forward.2} parent=59 // pred_fallthru
              _
            // Predicated region
            $region65: #{lstm_block_forward.2} parent=59 // pred_check
              _
            $region66: #{lstm_block_forward.2} parent=59 // pred_check_branch
              %1963 = sbr.rel (0) target = $region68
            $region67: #{lstm_block_forward.2} parent=59 // pred_region
              %s1965 = ssub.s32 16, 1
              loop: start=0, step=1, limit=1
              $region69: #{lstm_block_forward.2} parent=67 // loop_pre_header
                _
              $region70: #{lstm_block_forward.2} parent=67 // loop_header
                %s1967 = sphi 0, %s1971
                %p1968 = scmp.ge.s32.totalorder %s1967, 1
                %s1972 = sphi %s1944, %s1944
                %s1973 = sphi %s1957, %s1957
              $region71: #{lstm_block_forward.2} parent=67 // loop_header_branch
                %1970 = sbr.rel (%p1968) target = $region75
              $region72: #{lstm_block_forward.2} parent=67 // loop_body
                %v1974 = vld [vmem:[%s1972] sm:%s1965]
                %1975 = vst [vmem:[%s1973] sm:%s1965] %v1974
                %v1976 = vld [vmem:[%s1972 + $0x4] sm:%s1965]
                %1977 = vst [vmem:[%s1973 + $0x8] sm:%s1965] %v1976
                %v1978 = vld [vmem:[%s1972 + $0x8] sm:%s1965]
                %1979 = vst [vmem:[%s1973 + $0x10] sm:%s1965] %v1978
                %v1980 = vld [vmem:[%s1972 + $0xc] sm:%s1965]
                %1981 = vst [vmem:[%s1973 + $0x18] sm:%s1965] %v1980
                %v1982 = vld [vmem:[%s1972 + $0x10] sm:%s1965]
                %1983 = vst [vmem:[%s1973 + $0x20] sm:%s1965] %v1982
                %v1984 = vld [vmem:[%s1972 + $0x14] sm:%s1965]
                %1985 = vst [vmem:[%s1973 + $0x28] sm:%s1965] %v1984
                %v1986 = vld [vmem:[%s1972 + $0x18] sm:%s1965]
                %1987 = vst [vmem:[%s1973 + $0x30] sm:%s1965] %v1986
                %v1988 = vld [vmem:[%s1972 + $0x1c] sm:%s1965]
                %1989 = vst [vmem:[%s1973 + $0x38] sm:%s1965] %v1988
              $region73: #{lstm_block_forward.2} parent=67 // loop_footer
                %s1971 = sadd.s32 1, %s1967
              $region74: #{lstm_block_forward.2} parent=67 // loop_footer_branch
                %1966 = sbr.rel target = $region70
              $region75: #{lstm_block_forward.2} parent=67 // loop_exit
                _
            $region68: #{lstm_block_forward.2} parent=59 // pred_fallthru
              _
          $region60: #{lstm_block_forward.2} parent=55 // pred_fallthru
            _
          %2026 = vnop
        $region56: #{lstm_block_forward.2} parent=43 // pred_fallthru
          _
      $region44: #{lstm_block_forward.2} parent=5 // pred_fallthru
        _
      %p2027 = scmp.le.s32.totalorder 2, %s15
      // Predicated region
      $region94: #{lstm_block_forward.2} parent=5 // pred_check
        %p2028 = pneg %p2027
      $region95: #{lstm_block_forward.2} parent=5 // pred_check_branch
        %2030 = sbr.rel (%p2028) target = $region97
      $region96: #{lstm_block_forward.2} parent=5 // pred_region
        %s2031 = ssub.s32 %s15, 2
        // Predicated region
        $region98: #{lstm_block_forward.2} parent=96 // pred_check
          %p2032 = pneg %p234
        $region99: #{lstm_block_forward.2} parent=96 // pred_check_branch
          %2034 = sbr.rel (%p2032) target = $region101
        $region100: #{lstm_block_forward.2} parent=96 // pred_region
          %s2035 = sand.u32 %s219, 1
          %s2036 = sand.u32 %s219, 1
          %s2037 = smul.addr %s2036, 32
          %s2038 = scalar_lea.vmem [#allocation7], %s2037
        $region101: #{lstm_block_forward.2} parent=96 // pred_fallthru
          _
      $region97: #{lstm_block_forward.2} parent=5 // pred_fallthru
        _
    $region6: #{lstm_block_forward.2} parent=1 // loop_footer
      %s19 = sadd.s32 1, %s15
    $region7: #{lstm_block_forward.2} parent=1 // loop_footer_branch
      %14 = sbr.rel target = $region3
    $region8: #{lstm_block_forward.2} parent=1 // loop_exit
      _
    %2039 = vsyncpa [#allocation6], 1
    %s2040 = scalar_lea.sflag [#allocation6], 1
    %2041 = vsyncpa %s2040, 1

// kernel: lstm_block_forward.3
$region0: #{lstm_block_forward.3}
  #allocation0 [shape = 'u32[]', space=smem, size = 0x4, offset = 0x4, fixed_abs, tag = 'smem constant byte address 0x4 - core index']
  #allocation1 [shape = 'u32[72,128]{1,0:T(1,128)}', space=vmem, size = 0x9000, scoped, tag = 'internal scratch']
  #allocation2 [shape = 'f32[8,128]{1,0:T(8,128)}', space=vmem, size = 0x1000, scoped, tag = 'scratch operand']
  #allocation3 [shape = 'f32[8,128]{1,0:T(8,128)}', space=vmem, size = 0x1000, scoped, tag = 'scratch operand']
  #allocation4 [shape = 'f32[8,8,512]{2,1,0:T(8,128)}', space=vmem, size = 0x20000, scoped, tag = 'scratch operand']
  %s0 = inlined_call_operand.vmem [shape: bf16[8,8,256], index: 0, kind: input, shape index: {}]
  %s1 = inlined_call_operand.hbm [shape: bf16[2,256,512], index: 1, kind: input, shape index: {}]
  %s2 = inlined_call_operand.hbm [shape: bf16[2,128,512], index: 2, kind: input, shape index: {}]
  %s3 = inlined_call_operand.vmem [shape: f32[2,1,512], index: 3, kind: input, shape index: {}]
  %s4 = inlined_call_operand.vmem [shape: f32[2,8,128], index: 4, kind: input, shape index: {}]
  %s5 = inlined_call_operand.vmem [shape: f32[2,8,128], index: 5, kind: input, shape index: {}]
  %s6 = inlined_call_operand.vmem [shape: f32[8,8,256], index: 6, kind: output, shape index: {}]
  %s7 = sld [smem:[#allocation0]]
  $region103: #{lstm_block_forward.3} parent=0
    _
  %s9 = ssub.s32 1, %s7
  %s10 = scalar_select 0, %s9, %s7
  $region1: #{lstm_block_forward.3} parent=0
    #allocation5 [shape = 'u8[524288]{0}', space=vmem, size = 0x80000, scoped, tag = 'input window, operand 1']
    #allocation6 [shape = 's32[2]{0}', space=sflag, size = 0x8, scoped, tag = 'scoped memory for lstm_block_forward.3']
    #allocation7 [shape = 'u8[262144]{0}', space=vmem, size = 0x40000, scoped, tag = 'input window, operand 2']
    #allocation8 [shape = 's32[2]{0}', space=sflag, size = 0x8, scoped, tag = 'scoped memory for lstm_block_forward.3']
    #allocation9 [shape = 'u8[65536]{0}', space=vmem, size = 0x10000, scoped, tag = 'output window, operand 0']
    %11 = vsyncpa [#allocation6], 0
    %s12 = scalar_lea.sflag [#allocation6], 1
    %13 = vsyncpa %s12, 0
    %14 = vsyncpa [#allocation8], 0
    %s15 = scalar_lea.sflag [#allocation8], 1
    %16 = vsyncpa %s15, 0
    loop: start=0, step=1, limit=4
    $region2: #{lstm_block_forward.3} parent=1 // loop_pre_header
      _
    $region3: #{lstm_block_forward.3} parent=1 // loop_header
      %s18 = sphi 0, %s22
      %p19 = scmp.ge.s32.totalorder %s18, 4
      %s25 = sphi 0, %s37
      %s26 = sphi 0, %s33
      %s27 = sphi 0, %s25
      %s28 = sphi 0, %s26
      %s29 = sphi 0, %s27
      %s30 = sphi 0, %s28
      %s50 = sphi 0, %s52
      %s53 = sphi 0, %s50
      %s54 = sphi 0, %s53
      %s70 = sphi 0, %s54
      %s76 = sphi 0, %s78
      %s79 = sphi 0, %s76
      %s80 = sphi 0, %s79
      %s96 = sphi 0, %s80
      %s102 = sphi 0, %s104
      %s105 = sphi 0, %s102
      %s106 = sphi 0, %s105
      %s122 = sphi 0, %s106
      %s128 = sphi 0, %s130
      %s131 = sphi 0, %s128
      %s132 = sphi 0, %s131
      %s148 = sphi 0, %s132
      %s154 = sphi 0, %s156
      %s157 = sphi 0, %s154
      %s158 = sphi 0, %s157
      %s174 = sphi 0, %s158
      %s180 = sphi 0, %s182
      %s183 = sphi 0, %s180
      %s184 = sphi 0, %s183
      %s200 = sphi 0, %s184
      %s218 = sphi 0, %s220
      %s221 = sphi 0, %s218
      %s222 = sphi 0, %s221
      %s238 = sphi 0, %s222
    $region4: #{lstm_block_forward.3} parent=1 // loop_header_branch
      %21 = sbr.rel (%p19) target = $region8
    $region5: #{lstm_block_forward.3} parent=1 // loop_body
      %s23 = ssub.s32 %s18, 1
      %s24 = ssub.s32 %s18, 2
      %s31 = sadd.s32 1, %s26
      %p32 = scmp.ge.s32.totalorder %s31, 1
      %s33 = scalar_select %p32, 0, %s31
      %s34 = sadd.s32 1, %s25
      %s35 = scalar_select %p32, %s34, %s25
      %p36 = scmp.ge.s32.totalorder %s35, 2
      %s37 = scalar_select %p36, 0, %s35
      %s38 = ssub.s32 1, %s25
      %s39 = smul.u32 %s38, %s26
      %s40 = ssub.s32 0, %s26
      %s41 = smul.u32 %s25, %s40
      %s42 = sadd.s32 %s39, %s41
      %s43 = ssub.s32 1, %s37
      %s44 = smul.u32 %s43, %s33
      %s45 = ssub.s32 0, %s33
      %s46 = smul.u32 %s37, %s45
      %s47 = sadd.s32 %s44, %s46
      %s48 = ssub.s32 %s42, %s47
      %p49 = scmp.eq.s32.totalorder %s48, 0
      %s51 = sadd.s32 %s50, 1
      %s52 = scalar_select %p49, %s50, %s51
      %p55 = pneg %p49
      %p56 = scmp.eq.s32.totalorder %s18, 1
      %p57 = por %p55, %p56
      %p58 = scmp.ne.s32.totalorder %s50, %s53
      %p59 = scmp.eq.s32.totalorder %s18, 0
      %p60 = por %p58, %p59
      %p61 = scmp.ne.s32.totalorder %s50, %s53
      %p62 = scmp.eq.s32.totalorder %s23, 1
      %p63 = por %p61, %p62
      %p64 = scmp.ne.s32.totalorder %s53, %s54
      %p65 = scmp.eq.s32.totalorder %s23, 0
      %p66 = por %p64, %p65
      %p67 = scmp.ne.s32.totalorder %s53, %s54
      %p68 = scmp.eq.s32.totalorder %s24, 1
      %p69 = por %p67, %p68
      %p71 = scmp.ne.s32.totalorder %s54, %s70
      %p72 = scmp.eq.s32.totalorder %s24, 0
      %p73 = por %p71, %p72
      %s74 = ssub.s32 %s25, %s37
      %p75 = scmp.eq.s32.totalorder %s74, 0
      %s77 = sadd.s32 %s76, 1
      %s78 = scalar_select %p75, %s76, %s77
      %p81 = pneg %p75
      %p82 = scmp.eq.s32.totalorder %s18, 1
      %p83 = por %p81, %p82
      %p84 = scmp.ne.s32.totalorder %s76, %s79
      %p85 = scmp.eq.s32.totalorder %s18, 0
      %p86 = por %p84, %p85
      %p87 = scmp.ne.s32.totalorder %s76, %s79
      %p88 = scmp.eq.s32.totalorder %s23, 1
      %p89 = por %p87, %p88
      %p90 = scmp.ne.s32.totalorder %s79, %s80
      %p91 = scmp.eq.s32.totalorder %s23, 0
      %p92 = por %p90, %p91
      %p93 = scmp.ne.s32.totalorder %s79, %s80
      %p94 = scmp.eq.s32.totalorder %s24, 1
      %p95 = por %p93, %p94
      %p97 = scmp.ne.s32.totalorder %s80, %s96
      %p98 = scmp.eq.s32.totalorder %s24, 0
      %p99 = por %p97, %p98
      %s100 = ssub.s32 %s25, %s37
      %p101 = scmp.eq.s32.totalorder %s100, 0
      %s103 = sadd.s32 %s102, 1
      %s104 = scalar_select %p101, %s102, %s103
      %p107 = pneg %p101
      %p108 = scmp.eq.s32.totalorder %s18, 1
      %p109 = por %p107, %p108
      %p110 = scmp.ne.s32.totalorder %s102, %s105
      %p111 = scmp.eq.s32.totalorder %s18, 0
      %p112 = por %p110, %p111
      %p113 = scmp.ne.s32.totalorder %s102, %s105
      %p114 = scmp.eq.s32.totalorder %s23, 1
      %p115 = por %p113, %p114
      %p116 = scmp.ne.s32.totalorder %s105, %s106
      %p117 = scmp.eq.s32.totalorder %s23, 0
      %p118 = por %p116, %p117
      %p119 = scmp.ne.s32.totalorder %s105, %s106
      %p120 = scmp.eq.s32.totalorder %s24, 1
      %p121 = por %p119, %p120
      %p123 = scmp.ne.s32.totalorder %s106, %s122
      %p124 = scmp.eq.s32.totalorder %s24, 0
      %p125 = por %p123, %p124
      %s126 = ssub.s32 %s25, %s37
      %p127 = scmp.eq.s32.totalorder %s126, 0
      %s129 = sadd.s32 %s128, 1
      %s130 = scalar_select %p127, %s128, %s129
      %p133 = pneg %p127
      %p134 = scmp.eq.s32.totalorder %s18, 1
      %p135 = por %p133, %p134
      %p136 = scmp.ne.s32.totalorder %s128, %s131
      %p137 = scmp.eq.s32.totalorder %s18, 0
      %p138 = por %p136, %p137
      %p139 = scmp.ne.s32.totalorder %s128, %s131
      %p140 = scmp.eq.s32.totalorder %s23, 1
      %p141 = por %p139, %p140
      %p142 = scmp.ne.s32.totalorder %s131, %s132
      %p143 = scmp.eq.s32.totalorder %s23, 0
      %p144 = por %p142, %p143
      %p145 = scmp.ne.s32.totalorder %s131, %s132
      %p146 = scmp.eq.s32.totalorder %s24, 1
      %p147 = por %p145, %p146
      %p149 = scmp.ne.s32.totalorder %s132, %s148
      %p150 = scmp.eq.s32.totalorder %s24, 0
      %p151 = por %p149, %p150
      %s152 = ssub.s32 %s25, %s37
      %p153 = scmp.eq.s32.totalorder %s152, 0
      %s155 = sadd.s32 %s154, 1
      %s156 = scalar_select %p153, %s154, %s155
      %p159 = pneg %p153
      %p160 = scmp.eq.s32.totalorder %s18, 1
      %p161 = por %p159, %p160
      %p162 = scmp.ne.s32.totalorder %s154, %s157
      %p163 = scmp.eq.s32.totalorder %s18, 0
      %p164 = por %p162, %p163
      %p165 = scmp.ne.s32.totalorder %s154, %s157
      %p166 = scmp.eq.s32.totalorder %s23, 1
      %p167 = por %p165, %p166
      %p168 = scmp.ne.s32.totalorder %s157, %s158
      %p169 = scmp.eq.s32.totalorder %s23, 0
      %p170 = por %p168, %p169
      %p171 = scmp.ne.s32.totalorder %s157, %s158
      %p172 = scmp.eq.s32.totalorder %s24, 1
      %p173 = por %p171, %p172
      %p175 = scmp.ne.s32.totalorder %s158, %s174
      %p176 = scmp.eq.s32.totalorder %s24, 0
      %p177 = por %p175, %p176
      %s178 = ssub.s32 %s25, %s37
      %p179 = scmp.eq.s32.totalorder %s178, 0
      %s181 = sadd.s32 %s180, 1
      %s182 = scalar_select %p179, %s180, %s181
      %p185 = pneg %p179
      %p186 = scmp.eq.s32.totalorder %s18, 1
      %p187 = por %p185, %p186
      %p188 = scmp.ne.s32.totalorder %s180, %s183
      %p189 = scmp.eq.s32.totalorder %s18, 0
      %p190 = por %p188, %p189
      %p191 = scmp.ne.s32.totalorder %s180, %s183
      %p192 = scmp.eq.s32.totalorder %s23, 1
      %p193 = por %p191, %p192
      %p194 = scmp.ne.s32.totalorder %s183, %s184
      %p195 = scmp.eq.s32.totalorder %s23, 0
      %p196 = por %p194, %p195
      %p197 = scmp.ne.s32.totalorder %s183, %s184
      %p198 = scmp.eq.s32.totalorder %s24, 1
      %p199 = por %p197, %p198
      %p201 = scmp.ne.s32.totalorder %s184, %s200
      %p202 = scmp.eq.s32.totalorder %s24, 0
      %p203 = por %p201, %p202
      %s204 = ssub.s32 1, %s25
      %s205 = smul.u32 %s204, %s26
      %s206 = ssub.s32 0, %s26
      %s207 = smul.u32 %s25, %s206
      %s208 = sadd.s32 %s205, %s207
      %s209 = ssub.s32 1, %s37
      %s210 = smul.u32 %s209, %s33
      %s211 = ssub.s32 0, %s33
      %s212 = smul.u32 %s37, %s211
      %s213 = sadd.s32 %s210, %s212
      %s214 = ssub.s32 %s208, %s213
      %s215 = ssub.s32 %s25, %s37
      %s216 = sor.u32 %s214, %s215
      %p217 = scmp.eq.s32.totalorder %s216, 0
      %s219 = sadd.s32 %s218, 1
      %s220 = scalar_select %p217, %s218, %s219
      %p223 = pneg %p217
      %p224 = scmp.eq.s32.totalorder %s18, 1
      %p225 = por %p223, %p224
      %p226 = scmp.ne.s32.totalorder %s218, %s221
      %p227 = scmp.eq.s32.totalorder %s18, 0
      %p228 = por %p226, %p227
      %p229 = scmp.ne.s32.totalorder %s218, %s221
      %p230 = scmp.eq.s32.totalorder %s23, 1
      %p231 = por %p229, %p230
      %p232 = scmp.ne.s32.totalorder %s221, %s222
      %p233 = scmp.eq.s32.totalorder %s23, 0
      %p234 = por %p232, %p233
      %p235 = scmp.ne.s32.totalorder %s221, %s222
      %p236 = scmp.eq.s32.totalorder %s24, 1
      %p237 = por %p235, %p236
      %p239 = scmp.ne.s32.totalorder %s222, %s238
      %p240 = scmp.eq.s32.totalorder %s24, 0
      %p241 = por %p239, %p240
      %p242 = scmp.le.s32.totalorder 1, %s18
      %p243 = scmp.lt.s32.totalorder %s18, 3
      %p244 = pnand %p242, %p243
      %p245 = pneg %p244
      // Predicated region
      $region9: #{lstm_block_forward.3} parent=5 // pred_check
        _
      $region10: #{lstm_block_forward.3} parent=5 // pred_check_branch
        %247 = sbr.rel (%p244) target = $region12
      $region11: #{lstm_block_forward.3} parent=5 // pred_region
        %s248 = ssub.s32 %s18, 1
      $region12: #{lstm_block_forward.3} parent=5 // pred_fallthru
        _
      %p249 = scmp.lt.s32.totalorder %s18, 2
      // Predicated region
      $region13: #{lstm_block_forward.3} parent=5 // pred_check
        %p250 = pneg %p249
      $region14: #{lstm_block_forward.3} parent=5 // pred_check_branch
        %252 = sbr.rel (%p250) target = $region16
      $region15: #{lstm_block_forward.3} parent=5 // pred_region
        // Predicated region
        $region17: #{lstm_block_forward.3} parent=15 // pred_check
          %p253 = pneg %p60
        $region18: #{lstm_block_forward.3} parent=15 // pred_check_branch
          %255 = sbr.rel (%p253) target = $region20
        $region19: #{lstm_block_forward.3} parent=15 // pred_region
          %s256 = ssub.s32 1, %s25
          %s257 = smul.u32 %s256, %s26
          %s258 = ssub.s32 0, %s26
          %s259 = smul.u32 %s25, %s258
          %s260 = sadd.s32 %s257, %s259
          %s261 = smul.u32 8, %s260
          %p262 = scmp.lt.s32.totalorder %s261, 7
          %s263 = scalar_select %p262, %s261, 7
          %s264 = smul.addr %s263, 2
          %s265 = smul.addr %s264, 4
          %s266 = scalar_lea.vmem %s0, %s265
          %s267 = ssub.s32 1, %s25
          %s268 = smul.u32 %s267, %s26
          %s269 = ssub.s32 0, %s26
          %s270 = smul.u32 %s25, %s269
          %s271 = sadd.s32 %s268, %s270
          %s272 = smul.u32 8, %s271
        $region20: #{lstm_block_forward.3} parent=15 // pred_fallthru
          _
        // Predicated region
        $region21: #{lstm_block_forward.3} parent=15 // pred_check
          %p273 = pneg %p86
        $region22: #{lstm_block_forward.3} parent=15 // pred_check_branch
          %275 = sbr.rel (%p273) target = $region24
        $region23: #{lstm_block_forward.3} parent=15 // pred_region
          %s276 = sand.u32 %s76, 1
          %s277 = scalar_lea.sflag [#allocation6], %s276
          %s278 = sand.u32 %s76, 1
          %s279 = smul.addr %s278, 512
          %s280 = scalar_lea.vmem [#allocation5], %s279
          %282 = vsyncadd %s277, 0
          %s283 = smul.addr %s25, 128
          %s284 = smul.addr %s283, 4
          %s285 = scalar_lea.hbm %s1, %s284
          %s286 = sshll.u32 %s285, 4
          %s287 = int_to_ptr.hbm [resolvable:$true] %s286
          %s288 = sshll.u32 %s280, 4
          %s289 = int_to_ptr.vmem [resolvable:$true] %s288
          %294 = dma.hbm_to_vmem [thread:$0]  %s287, 8192, %s289, %s277, 256, 256, 16
        $region24: #{lstm_block_forward.3} parent=15 // pred_fallthru
          _
        // Predicated region
        $region25: #{lstm_block_forward.3} parent=15 // pred_check
          %p295 = pneg %p112
        $region26: #{lstm_block_forward.3} parent=15 // pred_check_branch
          %297 = sbr.rel (%p295) target = $region28
        $region27: #{lstm_block_forward.3} parent=15 // pred_region
          %s298 = sand.u32 %s102, 1
          %s299 = scalar_lea.sflag [#allocation8], %s298
          %s300 = sand.u32 %s102, 1
          %s301 = smul.addr %s300, 256
          %s302 = scalar_lea.vmem [#allocation7], %s301
          %304 = vsyncadd %s299, 0
          %s305 = smul.addr %s25, 64
          %s306 = smul.addr %s305, 4
          %s307 = scalar_lea.hbm %s2, %s306
          %s308 = sshll.u32 %s307, 4
          %s309 = int_to_ptr.hbm [resolvable:$true] %s308
          %s310 = sshll.u32 %s302, 4
          %s311 = int_to_ptr.vmem [resolvable:$true] %s310
          %316 = dma.hbm_to_vmem [thread:$0]  %s309, 4096, %s311, %s299, 256, 256, 16
        $region28: #{lstm_block_forward.3} parent=15 // pred_fallthru
          _
        // Predicated region
        $region29: #{lstm_block_forward.3} parent=15 // pred_check
          %p317 = pneg %p138
        $region30: #{lstm_block_forward.3} parent=15 // pred_check_branch
          %319 = sbr.rel (%p317) target = $region32
        $region31: #{lstm_block_forward.3} parent=15 // pred_region
          %p320 = scmp.lt.s32.totalorder %s25, 1
          %s321 = scalar_select %p320, %s25, 1
          %s322 = smul.addr %s321, 4
          %s323 = scalar_lea.vmem %s3, %s322
        $region32: #{lstm_block_forward.3} parent=15 // pred_fallthru
          _
        // Predicated region
        $region33: #{lstm_block_forward.3} parent=15 // pred_check
          %p324 = pneg %p164
        $region34: #{lstm_block_forward.3} parent=15 // pred_check_branch
          %326 = sbr.rel (%p324) target = $region36
        $region35: #{lstm_block_forward.3} parent=15 // pred_region
          %p327 = scmp.lt.s32.totalorder %s25, 1
          %s328 = scalar_select %p327, %s25, 1
          %s329 = smul.addr %s328, 8
          %s330 = scalar_lea.vmem %s4, %s329
        $region36: #{lstm_block_forward.3} parent=15 // pred_fallthru
          _
        // Predicated region
        $region37: #{lstm_block_forward.3} parent=15 // pred_check
          %p331 = pneg %p190
        $region38: #{lstm_block_forward.3} parent=15 // pred_check_branch
          %333 = sbr.rel (%p331) target = $region40
        $region39: #{lstm_block_forward.3} parent=15 // pred_region
          %p334 = scmp.lt.s32.totalorder %s25, 1
          %s335 = scalar_select %p334, %s25, 1
          %s336 = smul.addr %s335, 8
          %s337 = scalar_lea.vmem %s5, %s336
        $region40: #{lstm_block_forward.3} parent=15 // pred_fallthru
          _
      $region16: #{lstm_block_forward.3} parent=5 // pred_fallthru
        _
      %p338 = scmp.le.s32.totalorder 1, %s18
      %p339 = scmp.lt.s32.totalorder %s18, 3
      %p340 = pnand %p338, %p339
      %p341 = pneg %p340
      // Predicated region
      $region41: #{lstm_block_forward.3} parent=5 // pred_check
        _
      $region42: #{lstm_block_forward.3} parent=5 // pred_check_branch
        %343 = sbr.rel (%p340) target = $region44
      $region43: #{lstm_block_forward.3} parent=5 // pred_region
        %s344 = ssub.s32 %s18, 1
        %s345 = sand.u32 %s79, 1
        %s346 = scalar_lea.sflag [#allocation6], %s345
        %s347 = sand.u32 %s79, 1
        %s348 = smul.addr %s347, 512
        %s349 = scalar_lea.vmem [#allocation5], %s348
        // Predicated region
        $region45: #{lstm_block_forward.3} parent=43 // pred_check
          %p350 = pneg %p92
        $region46: #{lstm_block_forward.3} parent=43 // pred_check_branch
          %352 = sbr.rel (%p350) target = $region48
        $region47: #{lstm_block_forward.3} parent=43 // pred_region
          %354 = dma.done %s346, 8192
        $region48: #{lstm_block_forward.3} parent=43 // pred_fallthru
          _
        %s355 = sand.u32 %s105, 1
        %s356 = scalar_lea.sflag [#allocation8], %s355
        %s357 = sand.u32 %s105, 1
        %s358 = smul.addr %s357, 256
        %s359 = scalar_lea.vmem [#allocation7], %s358
        // Predicated region
        $region49: #{lstm_block_forward.3} parent=43 // pred_check
          %p360 = pneg %p118
        $region50: #{lstm_block_forward.3} parent=43 // pred_check_branch
          %362 = sbr.rel (%p360) target = $region52
        $region51: #{lstm_block_forward.3} parent=43 // pred_region
          %364 = dma.done %s356, 4096
        $region52: #{lstm_block_forward.3} parent=43 // pred_fallthru
          _
        %s365 = ssub.s32 1, %s27
        %s366 = smul.u32 %s365, %s28
        %s367 = ssub.s32 0, %s28
        %s368 = smul.u32 %s27, %s367
        %s369 = sadd.s32 %s366, %s368
        %s370 = smul.u32 8, %s369
        %p371 = scmp.lt.s32.totalorder %s370, 7
        %s372 = scalar_select %p371, %s370, 7
        %s373 = smul.addr %s372, 2
        %s374 = smul.addr %s373, 4
        %s375 = scalar_lea.vmem %s0, %s374
        %p376 = pneg %p66
        %p377 = pneg %p63
        %s378 = sand.u32 %s79, 1
        %s379 = scalar_lea.sflag [#allocation6], %s378
        %s380 = sand.u32 %s79, 1
        %s381 = smul.addr %s380, 512
        %s382 = scalar_lea.vmem [#allocation5], %s381
        %p383 = pneg %p92
        %p384 = pneg %p89
        %s385 = sand.u32 %s105, 1
        %s386 = scalar_lea.sflag [#allocation8], %s385
        %s387 = sand.u32 %s105, 1
        %s388 = smul.addr %s387, 256
        %s389 = scalar_lea.vmem [#allocation7], %s388
        %p390 = pneg %p118
        %p391 = pneg %p115
        %p392 = scmp.lt.s32.totalorder %s27, 1
        %s393 = scalar_select %p392, %s27, 1
        %s394 = smul.addr %s393, 4
        %s395 = scalar_lea.vmem %s3, %s394
        %p396 = pneg %p144
        %p397 = pneg %p141
        %p398 = scmp.lt.s32.totalorder %s27, 1
        %s399 = scalar_select %p398, %s27, 1
        %s400 = smul.addr %s399, 8
        %s401 = scalar_lea.vmem %s4, %s400
        %p402 = pneg %p170
        %p403 = pneg %p167
        %p404 = scmp.lt.s32.totalorder %s27, 1
        %s405 = scalar_select %p404, %s27, 1
        %s406 = smul.addr %s405, 8
        %s407 = scalar_lea.vmem %s5, %s406
        %p408 = pneg %p196
        %p409 = pneg %p193
        %p410 = pneg %p234
        %p411 = pneg %p231
        %s412 = sand.u32 %s221, 1
        %s413 = sand.u32 %s221, 1
        %s414 = smul.addr %s413, 64
        %s415 = scalar_lea.vmem [#allocation9], %s414
        %s416 = ssub.s32 1, %s27
        %s417 = smul.u32 %s416, %s28
        %s418 = ssub.s32 0, %s28
        %s419 = smul.u32 %s27, %s418
        %s420 = sadd.s32 %s417, %s419
        %s421 = smul.u32 8, %s420
        %p422 = scmp.lt.s32.totalorder %s421, 7
        %s423 = scalar_select %p422, %s421, 7
        %s424 = smul.addr %s423, 2
        %s425 = smul.addr %s424, 4
        %s426 = scalar_lea.vmem %s0, %s425
        %s427 = ssub.s32 1, %s27
        %s428 = smul.u32 %s427, %s28
        %s429 = ssub.s32 0, %s28
        %s430 = smul.u32 %s27, %s429
        %s431 = sadd.s32 %s428, %s430
        %s432 = smul.u32 8, %s431
        %p433 = scmp.lt.s32.totalorder %s27, 1
        %s434 = scalar_select %p433, %s27, 1
        %s435 = smul.addr %s434, 4
        %s436 = scalar_lea.vmem %s3, %s435
        %p437 = scmp.lt.s32.totalorder %s27, 1
        %s438 = scalar_select %p437, %s27, 1
        %s439 = smul.addr %s438, 8
        %s440 = scalar_lea.vmem %s4, %s439
        %p441 = scmp.lt.s32.totalorder %s27, 1
        %s442 = scalar_select %p441, %s27, 1
        %s443 = smul.addr %s442, 8
        %s444 = scalar_lea.vmem %s5, %s443
        %s445 = ssub.s32 1, %s27
        %s446 = smul.u32 %s445, %s28
        %s447 = ssub.s32 0, %s28
        %s448 = smul.u32 %s27, %s447
        %s449 = sadd.s32 %s446, %s448
        %s450 = smul.u32 8, %s449
        %p451 = scmp.eq.s32.totalorder %s28, 0
        // Predicated region
        $region53: #{lstm_block_forward.3} parent=43 // pred_check
          %p452 = pneg %p451
        $region54: #{lstm_block_forward.3} parent=43 // pred_check_branch
          %454 = sbr.rel (%p452) target = $region56
        $region55: #{lstm_block_forward.3} parent=43 // pred_region
          %v455 = vld [vmem:[%s440] sm:$0xff]
          %456 = vst [vmem:[#allocation2] sm:$0xff] %v455
          %v457 = vld [vmem:[%s444] sm:$0xff]
          %458 = vst [vmem:[#allocation3] sm:$0xff] %v457
        $region56: #{lstm_block_forward.3} parent=43 // pred_fallthru
          _
        %v459 = vld [vmem:[%s426] sm:$0xff]
        %v460 = vld [vmem:[%s426 + $0x8] sm:$0xff]
        %v461 = vld [vmem:[%s426 + $0x10] sm:$0xff]
        %v462 = vld [vmem:[%s426 + $0x18] sm:$0xff]
        %v463 = vld [vmem:[%s426 + $0x20] sm:$0xff]
        %v464 = vld [vmem:[%s426 + $0x28] sm:$0xff]
        %v465 = vld [vmem:[%s426 + $0x30] sm:$0xff]
        %v466 = vld [vmem:[%s426 + $0x38] sm:$0xff]
        %v467 = vld [vmem:[%s349] sm:$0xff]
        %v468 = vld [vmem:[%s349 + $0x8] sm:$0xff]
        %v469 = vld [vmem:[%s349 + $0x10] sm:$0xff]
        %v470 = vld [vmem:[%s349 + $0x18] sm:$0xff]
        %v471 = vld [vmem:[%s349 + $0x20] sm:$0xff]
        %v472 = vld [vmem:[%s349 + $0x28] sm:$0xff]
        %v473 = vld [vmem:[%s349 + $0x30] sm:$0xff]
        %v474 = vld [vmem:[%s349 + $0x38] sm:$0xff]
        %v475 = vld [vmem:[%s349 + $0x40] sm:$0xff]
        %v476 = vld [vmem:[%s349 + $0x48] sm:$0xff]
        %v477 = vld [vmem:[%s349 + $0x50] sm:$0xff]
        %v478 = vld [vmem:[%s349 + $0x58] sm:$0xff]
        %v479 = vld [vmem:[%s349 + $0x60] sm:$0xff]
        %v480 = vld [vmem:[%s349 + $0x68] sm:$0xff]
        %v481 = vld [vmem:[%s349 + $0x70] sm:$0xff]
        %v482 = vld [vmem:[%s349 + $0x78] sm:$0xff]
        %v483 = vld [vmem:[%s349 + $0x80] sm:$0xff]
        %v484 = vld [vmem:[%s349 + $0x88] sm:$0xff]
        %v485 = vld [vmem:[%s349 + $0x90] sm:$0xff]
        %v486 = vld [vmem:[%s349 + $0x98] sm:$0xff]
        %v487 = vld [vmem:[%s349 + $0xa0] sm:$0xff]
        %v488 = vld [vmem:[%s349 + $0xa8] sm:$0xff]
        %v489 = vld [vmem:[%s349 + $0xb0] sm:$0xff]
        %v490 = vld [vmem:[%s349 + $0xb8] sm:$0xff]
        %v491 = vld [vmem:[%s349 + $0xc0] sm:$0xff]
        %v492 = vld [vmem:[%s349 + $0xc8] sm:$0xff]
        %v493 = vld [vmem:[%s349 + $0xd0] sm:$0xff]
        %v494 = vld [vmem:[%s349 + $0xd8] sm:$0xff]
        %v495 = vld [vmem:[%s349 + $0xe0] sm:$0xff]
        %v496 = vld [vmem:[%s349 + $0xe8] sm:$0xff]
        %v497 = vld [vmem:[%s349 + $0xf0] sm:$0xff]
        %v498 = vld [vmem:[%s349 + $0xf8] sm:$0xff]
        %v499 = vld [vmem:[%s349 + $0x100] sm:$0xff]
        %v500 = vld [vmem:[%s349 + $0x108] sm:$0xff]
        %v501 = vld [vmem:[%s349 + $0x110] sm:$0xff]
        %v502 = vld [vmem:[%s349 + $0x118] sm:$0xff]
        %v503 = vld [vmem:[%s349 + $0x120] sm:$0xff]
        %v504 = vld [vmem:[%s349 + $0x128] sm:$0xff]
        %v505 = vld [vmem:[%s349 + $0x130] sm:$0xff]
        %v506 = vld [vmem:[%s349 + $0x138] sm:$0xff]
        %v507 = vld [vmem:[%s349 + $0x140] sm:$0xff]
        %v508 = vld [vmem:[%s349 + $0x148] sm:$0xff]
        %v509 = vld [vmem:[%s349 + $0x150] sm:$0xff]
        %v510 = vld [vmem:[%s349 + $0x158] sm:$0xff]
        %v511 = vld [vmem:[%s349 + $0x160] sm:$0xff]
        %v512 = vld [vmem:[%s349 + $0x168] sm:$0xff]
        %v513 = vld [vmem:[%s349 + $0x170] sm:$0xff]
        %v514 = vld [vmem:[%s349 + $0x178] sm:$0xff]
        %v515 = vld [vmem:[%s349 + $0x180] sm:$0xff]
        %v516 = vld [vmem:[%s349 + $0x188] sm:$0xff]
        %v517 = vld [vmem:[%s349 + $0x190] sm:$0xff]
        %v518 = vld [vmem:[%s349 + $0x198] sm:$0xff]
        %v519 = vld [vmem:[%s349 + $0x1a0] sm:$0xff]
        %v520 = vld [vmem:[%s349 + $0x1a8] sm:$0xff]
        %v521 = vld [vmem:[%s349 + $0x1b0] sm:$0xff]
        %v522 = vld [vmem:[%s349 + $0x1b8] sm:$0xff]
        %v523 = vld [vmem:[%s349 + $0x1c0] sm:$0xff]
        %v524 = vld [vmem:[%s349 + $0x1c8] sm:$0xff]
        %v525 = vld [vmem:[%s349 + $0x1d0] sm:$0xff]
        %v526 = vld [vmem:[%s349 + $0x1d8] sm:$0xff]
        %v527 = vld [vmem:[%s349 + $0x1e0] sm:$0xff]
        %v528 = vld [vmem:[%s349 + $0x1e8] sm:$0xff]
        %v529 = vld [vmem:[%s349 + $0x1f0] sm:$0xff]
        %v530 = vld [vmem:[%s349 + $0x1f8] sm:$0xff]
        %v531 = vld [vmem:[%s436] sm:$0xf]
        %v533 = vperm.slane %v531, 0
        %v534 = vperm.slane %v531, 1
        %v535 = vperm.slane %v531, 2
        %v536 = vperm.slane %v531, 3
        %v549 = vunpack.c.l.b16 %v459
        %v550 = vunpack.c.h.b16 %v459
        %v551 = vunpack.c.l.b16 %v460
        %v552 = vunpack.c.h.b16 %v460
        %v553 = vunpack.c.l.b16 %v461
        %v554 = vunpack.c.h.b16 %v461
        %v555 = vunpack.c.l.b16 %v462
        %v556 = vunpack.c.h.b16 %v462
        %v557 = vunpack.c.l.b16 %v463
        %v558 = vunpack.c.h.b16 %v463
        %v559 = vunpack.c.l.b16 %v464
        %v560 = vunpack.c.h.b16 %v464
        %v561 = vunpack.c.l.b16 %v465
        %v562 = vunpack.c.h.b16 %v465
        %v563 = vunpack.c.l.b16 %v466
        %v564 = vunpack.c.h.b16 %v466
        %v565 = vpack.c.b16 %v551, %v549
        %v566 = vpack.c.b16 %v552, %v550
        %v567 = vpack.c.b16 %v555, %v553
        %v568 = vpack.c.b16 %v556, %v554
        %v569 = vpack.c.b16 %v559, %v557
        %v570 = vpack.c.b16 %v560, %v558
        %v571 = vpack.c.b16 %v563, %v561
        %v572 = vpack.c.b16 %v564, %v562
        %v645 = vunpack.c.l.b16 %v467
        %v646 = vunpack.c.h.b16 %v467
        %v647 = vunpack.c.l.b16 %v468
        %v648 = vunpack.c.h.b16 %v468
        %v649 = vunpack.c.l.b16 %v469
        %v650 = vunpack.c.h.b16 %v469
        %v651 = vunpack.c.l.b16 %v470
        %v652 = vunpack.c.h.b16 %v470
        %v653 = vunpack.c.l.b16 %v471
        %v654 = vunpack.c.h.b16 %v471
        %v655 = vunpack.c.l.b16 %v472
        %v656 = vunpack.c.h.b16 %v472
        %v657 = vunpack.c.l.b16 %v473
        %v658 = vunpack.c.h.b16 %v473
        %v659 = vunpack.c.l.b16 %v474
        %v660 = vunpack.c.h.b16 %v474
        %v661 = vunpack.c.l.b16 %v475
        %v662 = vunpack.c.h.b16 %v475
        %v663 = vunpack.c.l.b16 %v476
        %v664 = vunpack.c.h.b16 %v476
        %v665 = vunpack.c.l.b16 %v477
        %v666 = vunpack.c.h.b16 %v477
        %v667 = vunpack.c.l.b16 %v478
        %v668 = vunpack.c.h.b16 %v478
        %v669 = vunpack.c.l.b16 %v479
        %v670 = vunpack.c.h.b16 %v479
        %v671 = vunpack.c.l.b16 %v480
        %v672 = vunpack.c.h.b16 %v480
        %v673 = vunpack.c.l.b16 %v481
        %v674 = vunpack.c.h.b16 %v481
        %v675 = vunpack.c.l.b16 %v482
        %v676 = vunpack.c.h.b16 %v482
        %v677 = vunpack.c.l.b16 %v483
        %v678 = vunpack.c.h.b16 %v483
        %v679 = vunpack.c.l.b16 %v484
        %v680 = vunpack.c.h.b16 %v484
        %v681 = vunpack.c.l.b16 %v485
        %v682 = vunpack.c.h.b16 %v485
        %v683 = vunpack.c.l.b16 %v486
        %v684 = vunpack.c.h.b16 %v486
        %v685 = vunpack.c.l.b16 %v487
        %v686 = vunpack.c.h.b16 %v487
        %v687 = vunpack.c.l.b16 %v488
        %v688 = vunpack.c.h.b16 %v488
        %v689 = vunpack.c.l.b16 %v489
        %v690 = vunpack.c.h.b16 %v489
        %v691 = vunpack.c.l.b16 %v490
        %v692 = vunpack.c.h.b16 %v490
        %v693 = vunpack.c.l.b16 %v491
        %v694 = vunpack.c.h.b16 %v491
        %v695 = vunpack.c.l.b16 %v492
        %v696 = vunpack.c.h.b16 %v492
        %v697 = vunpack.c.l.b16 %v493
        %v698 = vunpack.c.h.b16 %v493
        %v699 = vunpack.c.l.b16 %v494
        %v700 = vunpack.c.h.b16 %v494
        %v701 = vunpack.c.l.b16 %v495
        %v702 = vunpack.c.h.b16 %v495
        %v703 = vunpack.c.l.b16 %v496
        %v704 = vunpack.c.h.b16 %v496
        %v705 = vunpack.c.l.b16 %v497
        %v706 = vunpack.c.h.b16 %v497
        %v707 = vunpack.c.l.b16 %v498
        %v708 = vunpack.c.h.b16 %v498
        %v709 = vunpack.c.l.b16 %v499
        %v710 = vunpack.c.h.b16 %v499
        %v711 = vunpack.c.l.b16 %v500
        %v712 = vunpack.c.h.b16 %v500
        %v713 = vunpack.c.l.b16 %v501
        %v714 = vunpack.c.h.b16 %v501
        %v715 = vunpack.c.l.b16 %v502
        %v716 = vunpack.c.h.b16 %v502
        %v717 = vunpack.c.l.b16 %v503
        %v718 = vunpack.c.h.b16 %v503
        %v719 = vunpack.c.l.b16 %v504
        %v720 = vunpack.c.h.b16 %v504
        %v721 = vunpack.c.l.b16 %v505
        %v722 = vunpack.c.h.b16 %v505
        %v723 = vunpack.c.l.b16 %v506
        %v724 = vunpack.c.h.b16 %v506
        %v725 = vunpack.c.l.b16 %v507
        %v726 = vunpack.c.h.b16 %v507
        %v727 = vunpack.c.l.b16 %v508
        %v728 = vunpack.c.h.b16 %v508
        %v729 = vunpack.c.l.b16 %v509
        %v730 = vunpack.c.h.b16 %v509
        %v731 = vunpack.c.l.b16 %v510
        %v732 = vunpack.c.h.b16 %v510
        %v733 = vunpack.c.l.b16 %v511
        %v734 = vunpack.c.h.b16 %v511
        %v735 = vunpack.c.l.b16 %v512
        %v736 = vunpack.c.h.b16 %v512
        %v737 = vunpack.c.l.b16 %v513
        %v738 = vunpack.c.h.b16 %v513
        %v739 = vunpack.c.l.b16 %v514
        %v740 = vunpack.c.h.b16 %v514
        %v741 = vunpack.c.l.b16 %v515
        %v742 = vunpack.c.h.b16 %v515
        %v743 = vunpack.c.l.b16 %v516
        %v744 = vunpack.c.h.b16 %v516
        %v745 = vunpack.c.l.b16 %v517
        %v746 = vunpack.c.h.b16 %v517
        %v747 = vunpack.c.l.b16 %v518
        %v748 = vunpack.c.h.b16 %v518
        %v749 = vunpack.c.l.b16 %v519
        %v750 = vunpack.c.h.b16 %v519
        %v751 = vunpack.c.l.b16 %v520
        %v752 = vunpack.c.h.b16 %v520
        %v753 = vunpack.c.l.b16 %v521
        %v754 = vunpack.c.h.b16 %v521
        %v755 = vunpack.c.l.b16 %v522
        %v756 = vunpack.c.h.b16 %v522
        %v757 = vunpack.c.l.b16 %v523
        %v758 = vunpack.c.h.b16 %v523
        %v759 = vunpack.c.l.b16 %v524
        %v760 = vunpack.c.h.b16 %v524
        %v761 = vunpack.c.l.b16 %v525
        %v762 = vunpack.c.h.b16 %v525
        %v763 = vunpack.c.l.b16 %v526
        %v764 = vunpack.c.h.b16 %v526
        %v765 = vunpack.c.l.b16 %v527
        %v766 = vunpack.c.h.b16 %v527
        %v767 = vunpack.c.l.b16 %v528
        %v768 = vunpack.c.h.b16 %v528
        %v769 = vunpack.c.l.b16 %v529
        %v770 = vunpack.c.h.b16 %v529
        %v771 = vunpack.c.l.b16 %v530
        %v772 = vunpack.c.h.b16 %v530
        %v773 = vpack.c.b16 %v649, %v645
        %v774 = vpack.c.b16 %v650, %v646
        %v775 = vpack.c.b16 %v651, %v647
        %v776 = vpack.c.b16 %v652, %v648
        %v777 = vpack.c.b16 %v657, %v653
        %v778 = vpack.c.b16 %v658, %v654
        %v779 = vpack.c.b16 %v659, %v655
        %v780 = vpack.c.b16 %v660, %v656
        %v781 = vpack.c.b16 %v665, %v661
        %v782 = vpack.c.b16 %v666, %v662
        %v783 = vpack.c.b16 %v667, %v663
        %v784 = vpack.c.b16 %v668, %v664
        %v785 = vpack.c.b16 %v673, %v669
        %v786 = vpack.c.b16 %v674, %v670
        %v787 = vpack.c.b16 %v675, %v671
        %v788 = vpack.c.b16 %v676, %v672
        %v789 = vpack.c.b16 %v681, %v677
        %v790 = vpack.c.b16 %v682, %v678
        %v791 = vpack.c.b16 %v683, %v679
        %v792 = vpack.c.b16 %v684, %v680
        %v793 = vpack.c.b16 %v689, %v685
        %v794 = vpack.c.b16 %v690, %v686
        %v795 = vpack.c.b16 %v691, %v687
        %v796 = vpack.c.b16 %v692, %v688
        %v797 = vpack.c.b16 %v697, %v693
        %v798 = vpack.c.b16 %v698, %v694
        %v799 = vpack.c.b16 %v699, %v695
        %v800 = vpack.c.b16 %v700, %v696
        %v801 = vpack.c.b16 %v705, %v701
        %v802 = vpack.c.b16 %v706, %v702
        %v803 = vpack.c.b16 %v707, %v703
        %v804 = vpack.c.b16 %v708, %v704
        %v805 = vpack.c.b16 %v713, %v709
        %v806 = vpack.c.b16 %v714, %v710
        %v807 = vpack.c.b16 %v715, %v711
        %v808 = vpack.c.b16 %v716, %v712
        %v809 = vpack.c.b16 %v721, %v717
        %v810 = vpack.c.b16 %v722, %v718
        %v811 = vpack.c.b16 %v723, %v719
        %v812 = vpack.c.b16 %v724, %v720
        %v813 = vpack.c.b16 %v729, %v725
        %v814 = vpack.c.b16 %v730, %v726
        %v815 = vpack.c.b16 %v731, %v727
        %v816 = vpack.c.b16 %v732, %v728
        %v817 = vpack.c.b16 %v737, %v733
        %v818 = vpack.c.b16 %v738, %v734
        %v819 = vpack.c.b16 %v739, %v735
        %v820 = vpack.c.b16 %v740, %v736
        %v821 = vpack.c.b16 %v745, %v741
        %v822 = vpack.c.b16 %v746, %v742
        %v823 = vpack.c.b16 %v747, %v743
        %v824 = vpack.c.b16 %v748, %v744
        %v825 = vpack.c.b16 %v753, %v749
        %v826 = vpack.c.b16 %v754, %v750
        %v827 = vpack.c.b16 %v755, %v751
        %v828 = vpack.c.b16 %v756, %v752
        %v829 = vpack.c.b16 %v761, %v757
        %v830 = vpack.c.b16 %v762, %v758
        %v831 = vpack.c.b16 %v763, %v759
        %v832 = vpack.c.b16 %v764, %v760
        %v833 = vpack.c.b16 %v769, %v765
        %v834 = vpack.c.b16 %v770, %v766
        %v835 = vpack.c.b16 %v771, %v767
        %v836 = vpack.c.b16 %v772, %v768
        %901 = vmatpush.bf16.msra.mxu0 %v801
        %902 = vmatpush.bf16.msra.mxu0 %v797
        %903 = vmatpush.bf16.msra.mxu0 %v793
        %904 = vmatpush.bf16.msra.mxu0 %v789
        %905 = vmatpush.bf16.msra.mxu0 %v785
        %906 = vmatpush.bf16.msra.mxu0 %v781
        %907 = vmatpush.bf16.msra.mxu0 %v777
        %908 = vmatpush.bf16.msra.mxu0 %v773
        %909 = vmatmul.bf16.gmra.mxu0 %v565
        %v910 = vpop.f32.mrf.mxu0
        %v911 = vadd.f32 %v533, %v910
        %v912 = vpop.f32.mrf.mxu0
        %v913 = vadd.f32 %v533, %v912
        %914 = vmatmul.bf16.gmra.mxu0 %v567
        %v915 = vpop.f32.mrf.mxu0
        %v916 = vadd.f32 %v533, %v915
        %v917 = vpop.f32.mrf.mxu0
        %v918 = vadd.f32 %v533, %v917
        %919 = vmatmul.bf16.gmra.mxu0 %v569
        %v920 = vpop.f32.mrf.mxu0
        %v921 = vadd.f32 %v533, %v920
        %v922 = vpop.f32.mrf.mxu0
        %v923 = vadd.f32 %v533, %v922
        %924 = vmatmul.bf16.gmra.mxu0 %v571
        %v925 = vpop.f32.mrf.mxu0
        %v926 = vadd.f32 %v533, %v925
        %v927 = vpop.f32.mrf.mxu0
        %v928 = vadd.f32 %v533, %v927
        %929 = vdwg.mxu0
        %930 = vmatpush.bf16.msra.mxu0 %v833
        %931 = vmatpush.bf16.msra.mxu0 %v829
        %932 = vmatpush.bf16.msra.mxu0 %v825
        %933 = vmatpush.bf16.msra.mxu0 %v821
        %934 = vmatpush.bf16.msra.mxu0 %v817
        %935 = vmatpush.bf16.msra.mxu0 %v813
        %936 = vmatpush.bf16.msra.mxu0 %v809
        %937 = vmatpush.bf16.msra.mxu0 %v805
        %938 = vmatmul.bf16.gmra.mxu0 %v566
        %v939 = vpop.f32.mrf.mxu0
        %v940 = vadd.f32 %v911, %v939
        %v941 = vpop.f32.mrf.mxu0
        %v942 = vadd.f32 %v913, %v941
        %943 = vmatmul.bf16.gmra.mxu0 %v568
        %v944 = vpop.f32.mrf.mxu0
        %v945 = vadd.f32 %v916, %v944
        %v946 = vpop.f32.mrf.mxu0
        %v947 = vadd.f32 %v918, %v946
        %948 = vmatmul.bf16.gmra.mxu0 %v570
        %v949 = vpop.f32.mrf.mxu0
        %v950 = vadd.f32 %v921, %v949
        %v951 = vpop.f32.mrf.mxu0
        %v952 = vadd.f32 %v923, %v951
        %953 = vmatmul.bf16.gmra.mxu0 %v572
        %v954 = vpop.f32.mrf.mxu0
        %v955 = vadd.f32 %v926, %v954
        %v956 = vpop.f32.mrf.mxu0
        %v957 = vadd.f32 %v928, %v956
        %958 = vdwg.mxu0
        %959 = vmatpush.bf16.msra.mxu0 %v802
        %960 = vmatpush.bf16.msra.mxu0 %v798
        %961 = vmatpush.bf16.msra.mxu0 %v794
        %962 = vmatpush.bf16.msra.mxu0 %v790
        %963 = vmatpush.bf16.msra.mxu0 %v786
        %964 = vmatpush.bf16.msra.mxu0 %v782
        %965 = vmatpush.bf16.msra.mxu0 %v778
        %966 = vmatpush.bf16.msra.mxu0 %v774
        %967 = vmatmul.bf16.gmra.mxu0 %v565
        %v968 = vpop.f32.mrf.mxu0
        %v969 = vadd.f32 %v534, %v968
        %v970 = vpop.f32.mrf.mxu0
        %v971 = vadd.f32 %v534, %v970
        %972 = vmatmul.bf16.gmra.mxu0 %v567
        %v973 = vpop.f32.mrf.mxu0
        %v974 = vadd.f32 %v534, %v973
        %v975 = vpop.f32.mrf.mxu0
        %v976 = vadd.f32 %v534, %v975
        %977 = vmatmul.bf16.gmra.mxu0 %v569
        %v978 = vpop.f32.mrf.mxu0
        %v979 = vadd.f32 %v534, %v978
        %v980 = vpop.f32.mrf.mxu0
        %v981 = vadd.f32 %v534, %v980
        %982 = vmatmul.bf16.gmra.mxu0 %v571
        %v983 = vpop.f32.mrf.mxu0
        %v984 = vadd.f32 %v534, %v983
        %v985 = vpop.f32.mrf.mxu0
        %v986 = vadd.f32 %v534, %v985
        %987 = vdwg.mxu0
        %988 = vmatpush.bf16.msra.mxu0 %v834
        %989 = vmatpush.bf16.msra.mxu0 %v830
        %990 = vmatpush.bf16.msra.mxu0 %v826
        %991 = vmatpush.bf16.msra.mxu0 %v822
        %992 = vmatpush.bf16.msra.mxu0 %v818
        %993 = vmatpush.bf16.msra.mxu0 %v814
        %994 = vmatpush.bf16.msra.mxu0 %v810
        %995 = vmatpush.bf16.msra.mxu0 %v806
        %996 = vmatmul.bf16.gmra.mxu0 %v566
        %v997 = vpop.f32.mrf.mxu0
        %v998 = vadd.f32 %v969, %v997
        %v999 = vpop.f32.mrf.mxu0
        %v1000 = vadd.f32 %v971, %v999
        %1001 = vmatmul.bf16.gmra.mxu0 %v568
        %v1002 = vpop.f32.mrf.mxu0
        %v1003 = vadd.f32 %v974, %v1002
        %v1004 = vpop.f32.mrf.mxu0
        %v1005 = vadd.f32 %v976, %v1004
        %1006 = vmatmul.bf16.gmra.mxu0 %v570
        %v1007 = vpop.f32.mrf.mxu0
        %v1008 = vadd.f32 %v979, %v1007
        %v1009 = vpop.f32.mrf.mxu0
        %v1010 = vadd.f32 %v981, %v1009
        %1011 = vmatmul.bf16.gmra.mxu0 %v572
        %v1012 = vpop.f32.mrf.mxu0
        %v1013 = vadd.f32 %v984, %v1012
        %v1014 = vpop.f32.mrf.mxu0
        %v1015 = vadd.f32 %v986, %v1014
        %1016 = vdwg.mxu0
        %1017 = vmatpush.bf16.msra.mxu0 %v803
        %1018 = vmatpush.bf16.msra.mxu0 %v799
        %1019 = vmatpush.bf16.msra.mxu0 %v795
        %1020 = vmatpush.bf16.msra.mxu0 %v791
        %1021 = vmatpush.bf16.msra.mxu0 %v787
        %1022 = vmatpush.bf16.msra.mxu0 %v783
        %1023 = vmatpush.bf16.msra.mxu0 %v779
        %1024 = vmatpush.bf16.msra.mxu0 %v775
        %1025 = vmatmul.bf16.gmra.mxu0 %v565
        %v1026 = vpop.f32.mrf.mxu0
        %v1027 = vadd.f32 %v535, %v1026
        %v1028 = vpop.f32.mrf.mxu0
        %v1029 = vadd.f32 %v535, %v1028
        %1030 = vmatmul.bf16.gmra.mxu0 %v567
        %v1031 = vpop.f32.mrf.mxu0
        %v1032 = vadd.f32 %v535, %v1031
        %v1033 = vpop.f32.mrf.mxu0
        %v1034 = vadd.f32 %v535, %v1033
        %1035 = vmatmul.bf16.gmra.mxu0 %v569
        %v1036 = vpop.f32.mrf.mxu0
        %v1037 = vadd.f32 %v535, %v1036
        %v1038 = vpop.f32.mrf.mxu0
        %v1039 = vadd.f32 %v535, %v1038
        %1040 = vmatmul.bf16.gmra.mxu0 %v571
        %v1041 = vpop.f32.mrf.mxu0
        %v1042 = vadd.f32 %v535, %v1041
        %v1043 = vpop.f32.mrf.mxu0
        %v1044 = vadd.f32 %v535, %v1043
        %1045 = vdwg.mxu0
        %1046 = vmatpush.bf16.msra.mxu0 %v835
        %1047 = vmatpush.bf16.msra.mxu0 %v831
        %1048 = vmatpush.bf16.msra.mxu0 %v827
        %1049 = vmatpush.bf16.msra.mxu0 %v823
        %1050 = vmatpush.bf16.msra.mxu0 %v819
        %1051 = vmatpush.bf16.msra.mxu0 %v815
        %1052 = vmatpush.bf16.msra.mxu0 %v811
        %1053 = vmatpush.bf16.msra.mxu0 %v807
        %1054 = vmatmul.bf16.gmra.mxu0 %v566
        %v1055 = vpop.f32.mrf.mxu0
        %v1056 = vadd.f32 %v1027, %v1055
        %v1057 = vpop.f32.mrf.mxu0
        %v1058 = vadd.f32 %v1029, %v1057
        %1059 = vmatmul.bf16.gmra.mxu0 %v568
        %v1060 = vpop.f32.mrf.mxu0
        %v1061 = vadd.f32 %v1032, %v1060
        %v1062 = vpop.f32.mrf.mxu0
        %v1063 = vadd.f32 %v1034, %v1062
        %1064 = vmatmul.bf16.gmra.mxu0 %v570
        %v1065 = vpop.f32.mrf.mxu0
        %v1066 = vadd.f32 %v1037, %v1065
        %v1067 = vpop.f32.mrf.mxu0
        %v1068 = vadd.f32 %v1039, %v1067
        %1069 = vmatmul.bf16.gmra.mxu0 %v572
        %v1070 = vpop.f32.mrf.mxu0
        %v1071 = vadd.f32 %v1042, %v1070
        %v1072 = vpop.f32.mrf.mxu0
        %v1073 = vadd.f32 %v1044, %v1072
        %1074 = vdwg.mxu0
        %1075 = vmatpush.bf16.msra.mxu0 %v804
        %1076 = vmatpush.bf16.msra.mxu0 %v800
        %1077 = vmatpush.bf16.msra.mxu0 %v796
        %1078 = vmatpush.bf16.msra.mxu0 %v792
        %1079 = vmatpush.bf16.msra.mxu0 %v788
        %1080 = vmatpush.bf16.msra.mxu0 %v784
        %1081 = vmatpush.bf16.msra.mxu0 %v780
        %1082 = vmatpush.bf16.msra.mxu0 %v776
        %1083 = vmatmul.bf16.gmra.mxu0 %v565
        %v1084 = vpop.f32.mrf.mxu0
        %v1085 = vadd.f32 %v536, %v1084
        %v1086 = vpop.f32.mrf.mxu0
        %v1087 = vadd.f32 %v536, %v1086
        %1088 = vmatmul.bf16.gmra.mxu0 %v567
        %v1089 = vpop.f32.mrf.mxu0
        %v1090 = vadd.f32 %v536, %v1089
        %v1091 = vpop.f32.mrf.mxu0
        %v1092 = vadd.f32 %v536, %v1091
        %1093 = vmatmul.bf16.gmra.mxu0 %v569
        %v1094 = vpop.f32.mrf.mxu0
        %v1095 = vadd.f32 %v536, %v1094
        %v1096 = vpop.f32.mrf.mxu0
        %v1097 = vadd.f32 %v536, %v1096
        %1098 = vmatmul.bf16.gmra.mxu0 %v571
        %v1099 = vpop.f32.mrf.mxu0
        %v1100 = vadd.f32 %v536, %v1099
        %v1101 = vpop.f32.mrf.mxu0
        %v1102 = vadd.f32 %v536, %v1101
        %1103 = vdwg.mxu0
        %1104 = vmatpush.bf16.msra.mxu0 %v836
        %1105 = vmatpush.bf16.msra.mxu0 %v832
        %1106 = vmatpush.bf16.msra.mxu0 %v828
        %1107 = vmatpush.bf16.msra.mxu0 %v824
        %1108 = vmatpush.bf16.msra.mxu0 %v820
        %1109 = vmatpush.bf16.msra.mxu0 %v816
        %1110 = vmatpush.bf16.msra.mxu0 %v812
        %1111 = vmatpush.bf16.msra.mxu0 %v808
        %1112 = vmatmul.bf16.gmra.mxu0 %v566
        %v1113 = vpop.f32.mrf.mxu0
        %v1114 = vadd.f32 %v1085, %v1113
        %v1115 = vpop.f32.mrf.mxu0
        %v1116 = vadd.f32 %v1087, %v1115
        %1117 = vmatmul.bf16.gmra.mxu0 %v568
        %v1118 = vpop.f32.mrf.mxu0
        %v1119 = vadd.f32 %v1090, %v1118
        %v1120 = vpop.f32.mrf.mxu0
        %v1121 = vadd.f32 %v1092, %v1120
        %1122 = vmatmul.bf16.gmra.mxu0 %v570
        %v1123 = vpop.f32.mrf.mxu0
        %v1124 = vadd.f32 %v1095, %v1123
        %v1125 = vpop.f32.mrf.mxu0
        %v1126 = vadd.f32 %v1097, %v1125
        %1127 = vmatmul.bf16.gmra.mxu0 %v572
        %v1128 = vpop.f32.mrf.mxu0
        %v1129 = vadd.f32 %v1100, %v1128
        %v1130 = vpop.f32.mrf.mxu0
        %v1131 = vadd.f32 %v1102, %v1130
        %1132 = vdwg.mxu0
        %1133 = vst [vmem:[#allocation4] sm:$0xff] %v940
        %1134 = vst [vmem:[#allocation4 + $0x8] sm:$0xff] %v998
        %1135 = vst [vmem:[#allocation4 + $0x10] sm:$0xff] %v1056
        %1136 = vst [vmem:[#allocation4 + $0x18] sm:$0xff] %v1114
        %1137 = vst [vmem:[#allocation4 + $0x20] sm:$0xff] %v942
        %1138 = vst [vmem:[#allocation4 + $0x28] sm:$0xff] %v1000
        %1139 = vst [vmem:[#allocation4 + $0x30] sm:$0xff] %v1058
        %1140 = vst [vmem:[#allocation4 + $0x38] sm:$0xff] %v1116
        %1141 = vst [vmem:[#allocation4 + $0x40] sm:$0xff] %v945
        %1142 = vst [vmem:[#allocation4 + $0x48] sm:$0xff] %v1003
        %1143 = vst [vmem:[#allocation4 + $0x50] sm:$0xff] %v1061
        %1144 = vst [vmem:[#allocation4 + $0x58] sm:$0xff] %v1119
        %1145 = vst [vmem:[#allocation4 + $0x60] sm:$0xff] %v947
        %1146 = vst [vmem:[#allocation4 + $0x68] sm:$0xff] %v1005
        %1147 = vst [vmem:[#allocation4 + $0x70] sm:$0xff] %v1063
        %1148 = vst [vmem:[#allocation4 + $0x78] sm:$0xff] %v1121
        %1149 = vst [vmem:[#allocation4 + $0x80] sm:$0xff] %v950
        %1150 = vst [vmem:[#allocation4 + $0x88] sm:$0xff] %v1008
        %1151 = vst [vmem:[#allocation4 + $0x90] sm:$0xff] %v1066
        %1152 = vst [vmem:[#allocation4 + $0x98] sm:$0xff] %v1124
        %1153 = vst [vmem:[#allocation4 + $0xa0] sm:$0xff] %v952
        %1154 = vst [vmem:[#allocation4 + $0xa8] sm:$0xff] %v1010
        %1155 = vst [vmem:[#allocation4 + $0xb0] sm:$0xff] %v1068
        %1156 = vst [vmem:[#allocation4 + $0xb8] sm:$0xff] %v1126
        %1157 = vst [vmem:[#allocation4 + $0xc0] sm:$0xff] %v955
        %1158 = vst [vmem:[#allocation4 + $0xc8] sm:$0xff] %v1013
        %1159 = vst [vmem:[#allocation4 + $0xd0] sm:$0xff] %v1071
        %1160 = vst [vmem:[#allocation4 + $0xd8] sm:$0xff] %v1129
        %1161 = vst [vmem:[#allocation4 + $0xe0] sm:$0xff] %v957
        %1162 = vst [vmem:[#allocation4 + $0xe8] sm:$0xff] %v1015
        %1163 = vst [vmem:[#allocation4 + $0xf0] sm:$0xff] %v1073
        %1164 = vst [vmem:[#allocation4 + $0xf8] sm:$0xff] %v1131
        %v1165 = vld [vmem:[%s359] sm:$0xff]
        %v1166 = vld [vmem:[%s359 + $0x8] sm:$0xff]
        %v1167 = vld [vmem:[%s359 + $0x10] sm:$0xff]
        %v1168 = vld [vmem:[%s359 + $0x18] sm:$0xff]
        %v1169 = vld [vmem:[%s359 + $0x20] sm:$0xff]
        %v1170 = vld [vmem:[%s359 + $0x28] sm:$0xff]
        %v1171 = vld [vmem:[%s359 + $0x30] sm:$0xff]
        %v1172 = vld [vmem:[%s359 + $0x38] sm:$0xff]
        %v1173 = vld [vmem:[%s359 + $0x40] sm:$0xff]
        %v1174 = vld [vmem:[%s359 + $0x48] sm:$0xff]
        %v1175 = vld [vmem:[%s359 + $0x50] sm:$0xff]
        %v1176 = vld [vmem:[%s359 + $0x58] sm:$0xff]
        %v1177 = vld [vmem:[%s359 + $0x60] sm:$0xff]
        %v1178 = vld [vmem:[%s359 + $0x68] sm:$0xff]
        %v1179 = vld [vmem:[%s359 + $0x70] sm:$0xff]
        %v1180 = vld [vmem:[%s359 + $0x78] sm:$0xff]
        %v1181 = vld [vmem:[%s359 + $0x80] sm:$0xff]
        %v1182 = vld [vmem:[%s359 + $0x88] sm:$0xff]
        %v1183 = vld [vmem:[%s359 + $0x90] sm:$0xff]
        %v1184 = vld [vmem:[%s359 + $0x98] sm:$0xff]
        %v1185 = vld [vmem:[%s359 + $0xa0] sm:$0xff]
        %v1186 = vld [vmem:[%s359 + $0xa8] sm:$0xff]
        %v1187 = vld [vmem:[%s359 + $0xb0] sm:$0xff]
        %v1188 = vld [vmem:[%s359 + $0xb8] sm:$0xff]
        %v1189 = vld [vmem:[%s359 + $0xc0] sm:$0xff]
        %v1190 = vld [vmem:[%s359 + $0xc8] sm:$0xff]
        %v1191 = vld [vmem:[%s359 + $0xd0] sm:$0xff]
        %v1192 = vld [vmem:[%s359 + $0xd8] sm:$0xff]
        %v1193 = vld [vmem:[%s359 + $0xe0] sm:$0xff]
        %v1194 = vld [vmem:[%s359 + $0xe8] sm:$0xff]
        %v1195 = vld [vmem:[%s359 + $0xf0] sm:$0xff]
        %v1196 = vld [vmem:[%s359 + $0xf8] sm:$0xff]
        %s1197 = smul.u32 %s27, 7
        %s1198 = smul.u32 %s1197, 4
        %s1199 = smul.addr %s1198, 8
        %s1200 = scalar_lea.vmem [#allocation4], %s1199
        %v1201 = vld [vmem:[%s1200] sm:$0xff]
        %v1202 = vld [vmem:[%s1200 + $0x8] sm:$0xff]
        %v1203 = vld [vmem:[%s1200 + $0x10] sm:$0xff]
        %v1204 = vld [vmem:[%s1200 + $0x18] sm:$0xff]
        %v1205 = vld [vmem:[#allocation2] sm:$0xff]
        %v1206 = vld [vmem:[#allocation3] sm:$0xff]
        %v1207 = vpack.c.bf16 %v1205, %v1205
        %v1240 = vunpack.c.l.b16 %v1165
        %v1241 = vunpack.c.h.b16 %v1165
        %v1242 = vunpack.c.l.b16 %v1166
        %v1243 = vunpack.c.h.b16 %v1166
        %v1244 = vunpack.c.l.b16 %v1167
        %v1245 = vunpack.c.h.b16 %v1167
        %v1246 = vunpack.c.l.b16 %v1168
        %v1247 = vunpack.c.h.b16 %v1168
        %v1248 = vunpack.c.l.b16 %v1169
        %v1249 = vunpack.c.h.b16 %v1169
        %v1250 = vunpack.c.l.b16 %v1170
        %v1251 = vunpack.c.h.b16 %v1170
        %v1252 = vunpack.c.l.b16 %v1171
        %v1253 = vunpack.c.h.b16 %v1171
        %v1254 = vunpack.c.l.b16 %v1172
        %v1255 = vunpack.c.h.b16 %v1172
        %v1256 = vunpack.c.l.b16 %v1173
        %v1257 = vunpack.c.h.b16 %v1173
        %v1258 = vunpack.c.l.b16 %v1174
        %v1259 = vunpack.c.h.b16 %v1174
        %v1260 = vunpack.c.l.b16 %v1175
        %v1261 = vunpack.c.h.b16 %v1175
        %v1262 = vunpack.c.l.b16 %v1176
        %v1263 = vunpack.c.h.b16 %v1176
        %v1264 = vunpack.c.l.b16 %v1177
        %v1265 = vunpack.c.h.b16 %v1177
        %v1266 = vunpack.c.l.b16 %v1178
        %v1267 = vunpack.c.h.b16 %v1178
        %v1268 = vunpack.c.l.b16 %v1179
        %v1269 = vunpack.c.h.b16 %v1179
        %v1270 = vunpack.c.l.b16 %v1180
        %v1271 = vunpack.c.h.b16 %v1180
        %v1272 = vunpack.c.l.b16 %v1181
        %v1273 = vunpack.c.h.b16 %v1181
        %v1274 = vunpack.c.l.b16 %v1182
        %v1275 = vunpack.c.h.b16 %v1182
        %v1276 = vunpack.c.l.b16 %v1183
        %v1277 = vunpack.c.h.b16 %v1183
        %v1278 = vunpack.c.l.b16 %v1184
        %v1279 = vunpack.c.h.b16 %v1184
        %v1280 = vunpack.c.l.b16 %v1185
        %v1281 = vunpack.c.h.b16 %v1185
        %v1282 = vunpack.c.l.b16 %v1186
        %v1283 = vunpack.c.h.b16 %v1186
        %v1284 = vunpack.c.l.b16 %v1187
        %v1285 = vunpack.c.h.b16 %v1187
        %v1286 = vunpack.c.l.b16 %v1188
        %v1287 = vunpack.c.h.b16 %v1188
        %v1288 = vunpack.c.l.b16 %v1189
        %v1289 = vunpack.c.h.b16 %v1189
        %v1290 = vunpack.c.l.b16 %v1190
        %v1291 = vunpack.c.h.b16 %v1190
        %v1292 = vunpack.c.l.b16 %v1191
        %v1293 = vunpack.c.h.b16 %v1191
        %v1294 = vunpack.c.l.b16 %v1192
        %v1295 = vunpack.c.h.b16 %v1192
        %v1296 = vunpack.c.l.b16 %v1193
        %v1297 = vunpack.c.h.b16 %v1193
        %v1298 = vunpack.c.l.b16 %v1194
        %v1299 = vunpack.c.h.b16 %v1194
        %v1300 = vunpack.c.l.b16 %v1195
        %v1301 = vunpack.c.h.b16 %v1195
        %v1302 = vunpack.c.l.b16 %v1196
        %v1303 = vunpack.c.h.b16 %v1196
        %v1304 = vpack.c.b16 %v1244, %v1240
        %v1305 = vpack.c.b16 %v1245, %v1241
        %v1306 = vpack.c.b16 %v1246, %v1242
        %v1307 = vpack.c.b16 %v1247, %v1243
        %v1308 = vpack.c.b16 %v1252, %v1248
        %v1309 = vpack.c.b16 %v1253, %v1249
        %v1310 = vpack.c.b16 %v1254, %v1250
        %v1311 = vpack.c.b16 %v1255, %v1251
        %v1312 = vpack.c.b16 %v1260, %v1256
        %v1313 = vpack.c.b16 %v1261, %v1257
        %v1314 = vpack.c.b16 %v1262, %v1258
        %v1315 = vpack.c.b16 %v1263, %v1259
        %v1316 = vpack.c.b16 %v1268, %v1264
        %v1317 = vpack.c.b16 %v1269, %v1265
        %v1318 = vpack.c.b16 %v1270, %v1266
        %v1319 = vpack.c.b16 %v1271, %v1267
        %v1320 = vpack.c.b16 %v1276, %v1272
        %v1321 = vpack.c.b16 %v1277, %v1273
        %v1322 = vpack.c.b16 %v1278, %v1274
        %v1323 = vpack.c.b16 %v1279, %v1275
        %v1324 = vpack.c.b16 %v1284, %v1280
        %v1325 = vpack.c.b16 %v1285, %v1281
        %v1326 = vpack.c.b16 %v1286, %v1282
        %v1327 = vpack.c.b16 %v1287, %v1283
        %v1328 = vpack.c.b16 %v1292, %v1288
        %v1329 = vpack.c.b16 %v1293, %v1289
        %v1330 = vpack.c.b16 %v1294, %v1290
        %v1331 = vpack.c.b16 %v1295, %v1291
        %v1332 = vpack.c.b16 %v1300, %v1296
        %v1333 = vpack.c.b16 %v1301, %v1297
        %v1334 = vpack.c.b16 %v1302, %v1298
        %v1335 = vpack.c.b16 %v1303, %v1299
        %1368 = vmatpush.bf16.msra.mxu0 %v1332
        %1369 = vmatpush.bf16.msra.mxu0 %v1328
        %1370 = vmatpush.bf16.msra.mxu0 %v1324
        %1371 = vmatpush.bf16.msra.mxu0 %v1320
        %1372 = vmatpush.bf16.msra.mxu0 %v1316
        %1373 = vmatpush.bf16.msra.mxu0 %v1312
        %1374 = vmatpush.bf16.msra.mxu0 %v1308
        %1375 = vmatpush.bf16.msra.mxu0 %v1304
        %1376 = vmatmul.bf16.gmra.mxu0 %v1207
        %v1377 = vpop.f32.mrf.mxu0
        %v1378 = vadd.f32 0.0, %v1377
        %v1379 = vpop.f32.mrf.mxu0
        %1380 = vdwg.mxu0
        %1381 = vmatpush.bf16.msra.mxu0 %v1333
        %1382 = vmatpush.bf16.msra.mxu0 %v1329
        %1383 = vmatpush.bf16.msra.mxu0 %v1325
        %1384 = vmatpush.bf16.msra.mxu0 %v1321
        %1385 = vmatpush.bf16.msra.mxu0 %v1317
        %1386 = vmatpush.bf16.msra.mxu0 %v1313
        %1387 = vmatpush.bf16.msra.mxu0 %v1309
        %1388 = vmatpush.bf16.msra.mxu0 %v1305
        %1389 = vmatmul.bf16.gmra.mxu0 %v1207
        %v1390 = vpop.f32.mrf.mxu0
        %v1391 = vadd.f32 0.0, %v1390
        %v1392 = vpop.f32.mrf.mxu0
        %1393 = vdwg.mxu0
        %1394 = vmatpush.bf16.msra.mxu0 %v1334
        %1395 = vmatpush.bf16.msra.mxu0 %v1330
        %1396 = vmatpush.bf16.msra.mxu0 %v1326
        %1397 = vmatpush.bf16.msra.mxu0 %v1322
        %1398 = vmatpush.bf16.msra.mxu0 %v1318
        %1399 = vmatpush.bf16.msra.mxu0 %v1314
        %1400 = vmatpush.bf16.msra.mxu0 %v1310
        %1401 = vmatpush.bf16.msra.mxu0 %v1306
        %1402 = vmatmul.bf16.gmra.mxu0 %v1207
        %v1403 = vpop.f32.mrf.mxu0
        %v1404 = vadd.f32 0.0, %v1403
        %v1405 = vpop.f32.mrf.mxu0
        %1406 = vdwg.mxu0
        %1407 = vmatpush.bf16.msra.mxu0 %v1335
        %1408 = vmatpush.bf16.msra.mxu0 %v1331
        %1409 = vmatpush.bf16.msra.mxu0 %v1327
        %1410 = vmatpush.bf16.msra.mxu0 %v1323
        %1411 = vmatpush.bf16.msra.mxu0 %v1319
        %1412 = vmatpush.bf16.msra.mxu0 %v1315
        %1413 = vmatpush.bf16.msra.mxu0 %v1311
        %1414 = vmatpush.bf16.msra.mxu0 %v1307
        %1415 = vmatmul.bf16.gmra.mxu0 %v1207
        %v1416 = vpop.f32.mrf.mxu0
        %v1417 = vadd.f32 0.0, %v1416
        %v1418 = vpop.f32.mrf.mxu0
        %1419 = vdwg.mxu0
        %v1420 = vadd.f32 %v1201, %v1378
        %v1421 = vadd.f32 %v1202, %v1391
        %v1422 = vadd.f32 %v1203, %v1404
        %v1423 = vadd.f32 %v1204, %v1417
        %v1424 = vxor.u32 %v1420, 2147483648
        %v1425 = vmul.f32 %v1424, 1.442695
        %v1426 = vpow.pop %v1425
        %v1427 = vadd.f32 %v1426, 1.0
        %v1428 = vrcp.pop %v1427
        %v1429 = vmul.f32 %v1427, %v1428
        %v1430 = vsub.f32 1.0, %v1429
        %v1431 = vmul.f32 %v1428, %v1430
        %v1432 = vadd.f32 %v1428, %v1431
        %vm1433 = vweird.f32 %v1427
        %vm1434 = vweird.f32 %v1428
        %vm1435 = vmor %vm1433, %vm1434
        %v1436 = vsel %vm1435, %v1428, %v1432
        %v1437 = vand.u32 2147483647, %v1427
        %vm1438 = vcmp.eq.f32.partialorder %v1437, 8.507059e+37
        %v1439 = vand.u32 %v1427, 2147483648
        %v1440 = vor.u32 1.1754944e-38, %v1439
        %v1441 = vsel %vm1438, %v1440, %v1436
        %v1442 = vmul.f32 1.0, %v1441
        %v1443 = vxor.u32 %v1421, 2147483648
        %v1444 = vmul.f32 %v1443, 1.442695
        %v1445 = vpow.pop %v1444
        %v1446 = vadd.f32 %v1445, 1.0
        %v1447 = vrcp.pop %v1446
        %v1448 = vmul.f32 %v1446, %v1447
        %v1449 = vsub.f32 1.0, %v1448
        %v1450 = vmul.f32 %v1447, %v1449
        %v1451 = vadd.f32 %v1447, %v1450
        %vm1452 = vweird.f32 %v1446
        %vm1453 = vweird.f32 %v1447
        %vm1454 = vmor %vm1452, %vm1453
        %v1455 = vsel %vm1454, %v1447, %v1451
        %v1456 = vand.u32 2147483647, %v1446
        %vm1457 = vcmp.eq.f32.partialorder %v1456, 8.507059e+37
        %v1458 = vand.u32 %v1446, 2147483648
        %v1459 = vor.u32 1.1754944e-38, %v1458
        %v1460 = vsel %vm1457, %v1459, %v1455
        %v1461 = vmul.f32 1.0, %v1460
        %v1462 = vtanh.pop %v1422
        %v1463 = vxor.u32 %v1423, 2147483648
        %v1464 = vmul.f32 %v1463, 1.442695
        %v1465 = vpow.pop %v1464
        %v1466 = vadd.f32 %v1465, 1.0
        %v1467 = vrcp.pop %v1466
        %v1468 = vmul.f32 %v1466, %v1467
        %v1469 = vsub.f32 1.0, %v1468
        %v1470 = vmul.f32 %v1467, %v1469
        %v1471 = vadd.f32 %v1467, %v1470
        %vm1472 = vweird.f32 %v1466
        %vm1473 = vweird.f32 %v1467
        %vm1474 = vmor %vm1472, %vm1473
        %v1475 = vsel %vm1474, %v1467, %v1471
        %v1476 = vand.u32 2147483647, %v1466
        %vm1477 = vcmp.eq.f32.partialorder %v1476, 8.507059e+37
        %v1478 = vand.u32 %v1466, 2147483648
        %v1479 = vor.u32 1.1754944e-38, %v1478
        %v1480 = vsel %vm1477, %v1479, %v1475
        %v1481 = vmul.f32 1.0, %v1480
        %v1482 = vmul.f32 %v1461, %v1206
        %v1483 = vmul.f32 %v1442, %v1462
        %v1484 = vadd.f32 %v1482, %v1483
        %v1485 = vtanh.pop %v1484
        %v1486 = vmul.f32 %v1481, %v1485
        %1487 = vst [vmem:[#allocation3] sm:$0xff] %v1484
        %1488 = vst [vmem:[#allocation2] sm:$0xff] %v1486
        %s1489 = smul.u32 %s1197, 8
        %s1490 = scalar_lea.vmem %s415, %s1489 [#allocation9]
        %1491 = vst [vmem:[%s1490] sm:$0xff] %v1486
        %s1492 = ssub.s32 1, %s27
        %s1493 = smul.u32 %s27, 6
        %s1494 = sadd.s32 %s1492, %s1493
        %s1495 = smul.u32 %s1494, 4
        %s1496 = smul.addr %s1495, 8
        %s1497 = scalar_lea.vmem [#allocation4], %s1496
        %v1498 = vld [vmem:[%s1497] sm:$0xff]
        %v1499 = vld [vmem:[%s1497 + $0x8] sm:$0xff]
        %v1500 = vld [vmem:[%s1497 + $0x10] sm:$0xff]
        %v1501 = vld [vmem:[%s1497 + $0x18] sm:$0xff]
        %v1502 = vld [vmem:[#allocation2] sm:$0xff]
        %v1503 = vld [vmem:[#allocation3] sm:$0xff]
        %v1504 = vpack.c.bf16 %v1502, %v1502
        %1505 = vmatpush.bf16.msra.mxu0 %v1332
        %1506 = vmatpush.bf16.msra.mxu0 %v1328
        %1507 = vmatpush.bf16.msra.mxu0 %v1324
        %1508 = vmatpush.bf16.msra.mxu0 %v1320
        %1509 = vmatpush.bf16.msra.mxu0 %v1316
        %1510 = vmatpush.bf16.msra.mxu0 %v1312
        %1511 = vmatpush.bf16.msra.mxu0 %v1308
        %1512 = vmatpush.bf16.msra.mxu0 %v1304
        %1513 = vmatmul.bf16.gmra.mxu0 %v1504
        %v1514 = vpop.f32.mrf.mxu0
        %v1515 = vadd.f32 0.0, %v1514
        %v1516 = vpop.f32.mrf.mxu0
        %1517 = vdwg.mxu0
        %1518 = vmatpush.bf16.msra.mxu0 %v1333
        %1519 = vmatpush.bf16.msra.mxu0 %v1329
        %1520 = vmatpush.bf16.msra.mxu0 %v1325
        %1521 = vmatpush.bf16.msra.mxu0 %v1321
        %1522 = vmatpush.bf16.msra.mxu0 %v1317
        %1523 = vmatpush.bf16.msra.mxu0 %v1313
        %1524 = vmatpush.bf16.msra.mxu0 %v1309
        %1525 = vmatpush.bf16.msra.mxu0 %v1305
        %1526 = vmatmul.bf16.gmra.mxu0 %v1504
        %v1527 = vpop.f32.mrf.mxu0
        %v1528 = vadd.f32 0.0, %v1527
        %v1529 = vpop.f32.mrf.mxu0
        %1530 = vdwg.mxu0
        %1531 = vmatpush.bf16.msra.mxu0 %v1334
        %1532 = vmatpush.bf16.msra.mxu0 %v1330
        %1533 = vmatpush.bf16.msra.mxu0 %v1326
        %1534 = vmatpush.bf16.msra.mxu0 %v1322
        %1535 = vmatpush.bf16.msra.mxu0 %v1318
        %1536 = vmatpush.bf16.msra.mxu0 %v1314
        %1537 = vmatpush.bf16.msra.mxu0 %v1310
        %1538 = vmatpush.bf16.msra.mxu0 %v1306
        %1539 = vmatmul.bf16.gmra.mxu0 %v1504
        %v1540 = vpop.f32.mrf.mxu0
        %v1541 = vadd.f32 0.0, %v1540
        %v1542 = vpop.f32.mrf.mxu0
        %1543 = vdwg.mxu0
        %1544 = vmatpush.bf16.msra.mxu0 %v1335
        %1545 = vmatpush.bf16.msra.mxu0 %v1331
        %1546 = vmatpush.bf16.msra.mxu0 %v1327
        %1547 = vmatpush.bf16.msra.mxu0 %v1323
        %1548 = vmatpush.bf16.msra.mxu0 %v1319
        %1549 = vmatpush.bf16.msra.mxu0 %v1315
        %1550 = vmatpush.bf16.msra.mxu0 %v1311
        %1551 = vmatpush.bf16.msra.mxu0 %v1307
        %1552 = vmatmul.bf16.gmra.mxu0 %v1504
        %v1553 = vpop.f32.mrf.mxu0
        %v1554 = vadd.f32 0.0, %v1553
        %v1555 = vpop.f32.mrf.mxu0
        %1556 = vdwg.mxu0
        %v1557 = vadd.f32 %v1498, %v1515
        %v1558 = vadd.f32 %v1499, %v1528
        %v1559 = vadd.f32 %v1500, %v1541
        %v1560 = vadd.f32 %v1501, %v1554
        %v1561 = vxor.u32 %v1557, 2147483648
        %v1562 = vmul.f32 %v1561, 1.442695
        %v1563 = vpow.pop %v1562
        %v1564 = vadd.f32 %v1563, 1.0
        %v1565 = vrcp.pop %v1564
        %v1566 = vmul.f32 %v1564, %v1565
        %v1567 = vsub.f32 1.0, %v1566
        %v1568 = vmul.f32 %v1565, %v1567
        %v1569 = vadd.f32 %v1565, %v1568
        %vm1570 = vweird.f32 %v1564
        %vm1571 = vweird.f32 %v1565
        %vm1572 = vmor %vm1570, %vm1571
        %v1573 = vsel %vm1572, %v1565, %v1569
        %v1574 = vand.u32 2147483647, %v1564
        %vm1575 = vcmp.eq.f32.partialorder %v1574, 8.507059e+37
        %v1576 = vand.u32 %v1564, 2147483648
        %v1577 = vor.u32 1.1754944e-38, %v1576
        %v1578 = vsel %vm1575, %v1577, %v1573
        %v1579 = vmul.f32 1.0, %v1578
        %v1580 = vxor.u32 %v1558, 2147483648
        %v1581 = vmul.f32 %v1580, 1.442695
        %v1582 = vpow.pop %v1581
        %v1583 = vadd.f32 %v1582, 1.0
        %v1584 = vrcp.pop %v1583
        %v1585 = vmul.f32 %v1583, %v1584
        %v1586 = vsub.f32 1.0, %v1585
        %v1587 = vmul.f32 %v1584, %v1586
        %v1588 = vadd.f32 %v1584, %v1587
        %vm1589 = vweird.f32 %v1583
        %vm1590 = vweird.f32 %v1584
        %vm1591 = vmor %vm1589, %vm1590
        %v1592 = vsel %vm1591, %v1584, %v1588
        %v1593 = vand.u32 2147483647, %v1583
        %vm1594 = vcmp.eq.f32.partialorder %v1593, 8.507059e+37
        %v1595 = vand.u32 %v1583, 2147483648
        %v1596 = vor.u32 1.1754944e-38, %v1595
        %v1597 = vsel %vm1594, %v1596, %v1592
        %v1598 = vmul.f32 1.0, %v1597
        %v1599 = vtanh.pop %v1559
        %v1600 = vxor.u32 %v1560, 2147483648
        %v1601 = vmul.f32 %v1600, 1.442695
        %v1602 = vpow.pop %v1601
        %v1603 = vadd.f32 %v1602, 1.0
        %v1604 = vrcp.pop %v1603
        %v1605 = vmul.f32 %v1603, %v1604
        %v1606 = vsub.f32 1.0, %v1605
        %v1607 = vmul.f32 %v1604, %v1606
        %v1608 = vadd.f32 %v1604, %v1607
        %vm1609 = vweird.f32 %v1603
        %vm1610 = vweird.f32 %v1604
        %vm1611 = vmor %vm1609, %vm1610
        %v1612 = vsel %vm1611, %v1604, %v1608
        %v1613 = vand.u32 2147483647, %v1603
        %vm1614 = vcmp.eq.f32.partialorder %v1613, 8.507059e+37
        %v1615 = vand.u32 %v1603, 2147483648
        %v1616 = vor.u32 1.1754944e-38, %v1615
        %v1617 = vsel %vm1614, %v1616, %v1612
        %v1618 = vmul.f32 1.0, %v1617
        %v1619 = vmul.f32 %v1598, %v1503
        %v1620 = vmul.f32 %v1579, %v1599
        %v1621 = vadd.f32 %v1619, %v1620
        %v1622 = vtanh.pop %v1621
        %v1623 = vmul.f32 %v1618, %v1622
        %1624 = vst [vmem:[#allocation3] sm:$0xff] %v1621
        %1625 = vst [vmem:[#allocation2] sm:$0xff] %v1623
        %s1626 = smul.u32 %s1494, 8
        %s1627 = scalar_lea.vmem %s415, %s1626 [#allocation9]
        %1628 = vst [vmem:[%s1627] sm:$0xff] %v1623
        %s1629 = smul.u32 %s1492, 2
        %s1630 = smul.u32 %s27, 5
        %s1631 = sadd.s32 %s1629, %s1630
        %s1632 = smul.u32 %s1631, 4
        %s1633 = smul.addr %s1632, 8
        %s1634 = scalar_lea.vmem [#allocation4], %s1633
        %v1635 = vld [vmem:[%s1634] sm:$0xff]
        %v1636 = vld [vmem:[%s1634 + $0x8] sm:$0xff]
        %v1637 = vld [vmem:[%s1634 + $0x10] sm:$0xff]
        %v1638 = vld [vmem:[%s1634 + $0x18] sm:$0xff]
        %v1639 = vld [vmem:[#allocation2] sm:$0xff]
        %v1640 = vld [vmem:[#allocation3] sm:$0xff]
        %v1641 = vpack.c.bf16 %v1639, %v1639
        %1642 = vmatpush.bf16.msra.mxu0 %v1332
        %1643 = vmatpush.bf16.msra.mxu0 %v1328
        %1644 = vmatpush.bf16.msra.mxu0 %v1324
        %1645 = vmatpush.bf16.msra.mxu0 %v1320
        %1646 = vmatpush.bf16.msra.mxu0 %v1316
        %1647 = vmatpush.bf16.msra.mxu0 %v1312
        %1648 = vmatpush.bf16.msra.mxu0 %v1308
        %1649 = vmatpush.bf16.msra.mxu0 %v1304
        %1650 = vmatmul.bf16.gmra.mxu0 %v1641
        %v1651 = vpop.f32.mrf.mxu0
        %v1652 = vadd.f32 0.0, %v1651
        %v1653 = vpop.f32.mrf.mxu0
        %1654 = vdwg.mxu0
        %1655 = vmatpush.bf16.msra.mxu0 %v1333
        %1656 = vmatpush.bf16.msra.mxu0 %v1329
        %1657 = vmatpush.bf16.msra.mxu0 %v1325
        %1658 = vmatpush.bf16.msra.mxu0 %v1321
        %1659 = vmatpush.bf16.msra.mxu0 %v1317
        %1660 = vmatpush.bf16.msra.mxu0 %v1313
        %1661 = vmatpush.bf16.msra.mxu0 %v1309
        %1662 = vmatpush.bf16.msra.mxu0 %v1305
        %1663 = vmatmul.bf16.gmra.mxu0 %v1641
        %v1664 = vpop.f32.mrf.mxu0
        %v1665 = vadd.f32 0.0, %v1664
        %v1666 = vpop.f32.mrf.mxu0
        %1667 = vdwg.mxu0
        %1668 = vmatpush.bf16.msra.mxu0 %v1334
        %1669 = vmatpush.bf16.msra.mxu0 %v1330
        %1670 = vmatpush.bf16.msra.mxu0 %v1326
        %1671 = vmatpush.bf16.msra.mxu0 %v1322
        %1672 = vmatpush.bf16.msra.mxu0 %v1318
        %1673 = vmatpush.bf16.msra.mxu0 %v1314
        %1674 = vmatpush.bf16.msra.mxu0 %v1310
        %1675 = vmatpush.bf16.msra.mxu0 %v1306
        %1676 = vmatmul.bf16.gmra.mxu0 %v1641
        %v1677 = vpop.f32.mrf.mxu0
        %v1678 = vadd.f32 0.0, %v1677
        %v1679 = vpop.f32.mrf.mxu0
        %1680 = vdwg.mxu0
        %1681 = vmatpush.bf16.msra.mxu0 %v1335
        %1682 = vmatpush.bf16.msra.mxu0 %v1331
        %1683 = vmatpush.bf16.msra.mxu0 %v1327
        %1684 = vmatpush.bf16.msra.mxu0 %v1323
        %1685 = vmatpush.bf16.msra.mxu0 %v1319
        %1686 = vmatpush.bf16.msra.mxu0 %v1315
        %1687 = vmatpush.bf16.msra.mxu0 %v1311
        %1688 = vmatpush.bf16.msra.mxu0 %v1307
        %1689 = vmatmul.bf16.gmra.mxu0 %v1641
        %v1690 = vpop.f32.mrf.mxu0
        %v1691 = vadd.f32 0.0, %v1690
        %v1692 = vpop.f32.mrf.mxu0
        %1693 = vdwg.mxu0
        %v1694 = vadd.f32 %v1635, %v1652
        %v1695 = vadd.f32 %v1636, %v1665
        %v1696 = vadd.f32 %v1637, %v1678
        %v1697 = vadd.f32 %v1638, %v1691
        %v1698 = vxor.u32 %v1694, 2147483648
        %v1699 = vmul.f32 %v1698, 1.442695
        %v1700 = vpow.pop %v1699
        %v1701 = vadd.f32 %v1700, 1.0
        %v1702 = vrcp.pop %v1701
        %v1703 = vmul.f32 %v1701, %v1702
        %v1704 = vsub.f32 1.0, %v1703
        %v1705 = vmul.f32 %v1702, %v1704
        %v1706 = vadd.f32 %v1702, %v1705
        %vm1707 = vweird.f32 %v1701
        %vm1708 = vweird.f32 %v1702
        %vm1709 = vmor %vm1707, %vm1708
        %v1710 = vsel %vm1709, %v1702, %v1706
        %v1711 = vand.u32 2147483647, %v1701
        %vm1712 = vcmp.eq.f32.partialorder %v1711, 8.507059e+37
        %v1713 = vand.u32 %v1701, 2147483648
        %v1714 = vor.u32 1.1754944e-38, %v1713
        %v1715 = vsel %vm1712, %v1714, %v1710
        %v1716 = vmul.f32 1.0, %v1715
        %v1717 = vxor.u32 %v1695, 2147483648
        %v1718 = vmul.f32 %v1717, 1.442695
        %v1719 = vpow.pop %v1718
        %v1720 = vadd.f32 %v1719, 1.0
        %v1721 = vrcp.pop %v1720
        %v1722 = vmul.f32 %v1720, %v1721
        %v1723 = vsub.f32 1.0, %v1722
        %v1724 = vmul.f32 %v1721, %v1723
        %v1725 = vadd.f32 %v1721, %v1724
        %vm1726 = vweird.f32 %v1720
        %vm1727 = vweird.f32 %v1721
        %vm1728 = vmor %vm1726, %vm1727
        %v1729 = vsel %vm1728, %v1721, %v1725
        %v1730 = vand.u32 2147483647, %v1720
        %vm1731 = vcmp.eq.f32.partialorder %v1730, 8.507059e+37
        %v1732 = vand.u32 %v1720, 2147483648
        %v1733 = vor.u32 1.1754944e-38, %v1732
        %v1734 = vsel %vm1731, %v1733, %v1729
        %v1735 = vmul.f32 1.0, %v1734
        %v1736 = vtanh.pop %v1696
        %v1737 = vxor.u32 %v1697, 2147483648
        %v1738 = vmul.f32 %v1737, 1.442695
        %v1739 = vpow.pop %v1738
        %v1740 = vadd.f32 %v1739, 1.0
        %v1741 = vrcp.pop %v1740
        %v1742 = vmul.f32 %v1740, %v1741
        %v1743 = vsub.f32 1.0, %v1742
        %v1744 = vmul.f32 %v1741, %v1743
        %v1745 = vadd.f32 %v1741, %v1744
        %vm1746 = vweird.f32 %v1740
        %vm1747 = vweird.f32 %v1741
        %vm1748 = vmor %vm1746, %vm1747
        %v1749 = vsel %vm1748, %v1741, %v1745
        %v1750 = vand.u32 2147483647, %v1740
        %vm1751 = vcmp.eq.f32.partialorder %v1750, 8.507059e+37
        %v1752 = vand.u32 %v1740, 2147483648
        %v1753 = vor.u32 1.1754944e-38, %v1752
        %v1754 = vsel %vm1751, %v1753, %v1749
        %v1755 = vmul.f32 1.0, %v1754
        %v1756 = vmul.f32 %v1735, %v1640
        %v1757 = vmul.f32 %v1716, %v1736
        %v1758 = vadd.f32 %v1756, %v1757
        %v1759 = vtanh.pop %v1758
        %v1760 = vmul.f32 %v1755, %v1759
        %1761 = vst [vmem:[#allocation3] sm:$0xff] %v1758
        %1762 = vst [vmem:[#allocation2] sm:$0xff] %v1760
        %s1763 = smul.u32 %s1631, 8
        %s1764 = scalar_lea.vmem %s415, %s1763 [#allocation9]
        %1765 = vst [vmem:[%s1764] sm:$0xff] %v1760
        %s1766 = smul.u32 %s1492, 3
        %s1767 = smul.u32 %s27, 4
        %s1768 = sadd.s32 %s1766, %s1767
        %s1769 = smul.u32 %s1768, 4
        %s1770 = smul.addr %s1769, 8
        %s1771 = scalar_lea.vmem [#allocation4], %s1770
        %v1772 = vld [vmem:[%s1771] sm:$0xff]
        %v1773 = vld [vmem:[%s1771 + $0x8] sm:$0xff]
        %v1774 = vld [vmem:[%s1771 + $0x10] sm:$0xff]
        %v1775 = vld [vmem:[%s1771 + $0x18] sm:$0xff]
        %v1776 = vld [vmem:[#allocation2] sm:$0xff]
        %v1777 = vld [vmem:[#allocation3] sm:$0xff]
        %v1778 = vpack.c.bf16 %v1776, %v1776
        %1779 = vmatpush.bf16.msra.mxu0 %v1332
        %1780 = vmatpush.bf16.msra.mxu0 %v1328
        %1781 = vmatpush.bf16.msra.mxu0 %v1324
        %1782 = vmatpush.bf16.msra.mxu0 %v1320
        %1783 = vmatpush.bf16.msra.mxu0 %v1316
        %1784 = vmatpush.bf16.msra.mxu0 %v1312
        %1785 = vmatpush.bf16.msra.mxu0 %v1308
        %1786 = vmatpush.bf16.msra.mxu0 %v1304
        %1787 = vmatmul.bf16.gmra.mxu0 %v1778
        %v1788 = vpop.f32.mrf.mxu0
        %v1789 = vadd.f32 0.0, %v1788
        %v1790 = vpop.f32.mrf.mxu0
        %1791 = vdwg.mxu0
        %1792 = vmatpush.bf16.msra.mxu0 %v1333
        %1793 = vmatpush.bf16.msra.mxu0 %v1329
        %1794 = vmatpush.bf16.msra.mxu0 %v1325
        %1795 = vmatpush.bf16.msra.mxu0 %v1321
        %1796 = vmatpush.bf16.msra.mxu0 %v1317
        %1797 = vmatpush.bf16.msra.mxu0 %v1313
        %1798 = vmatpush.bf16.msra.mxu0 %v1309
        %1799 = vmatpush.bf16.msra.mxu0 %v1305
        %1800 = vmatmul.bf16.gmra.mxu0 %v1778
        %v1801 = vpop.f32.mrf.mxu0
        %v1802 = vadd.f32 0.0, %v1801
        %v1803 = vpop.f32.mrf.mxu0
        %1804 = vdwg.mxu0
        %1805 = vmatpush.bf16.msra.mxu0 %v1334
        %1806 = vmatpush.bf16.msra.mxu0 %v1330
        %1807 = vmatpush.bf16.msra.mxu0 %v1326
        %1808 = vmatpush.bf16.msra.mxu0 %v1322
        %1809 = vmatpush.bf16.msra.mxu0 %v1318
        %1810 = vmatpush.bf16.msra.mxu0 %v1314
        %1811 = vmatpush.bf16.msra.mxu0 %v1310
        %1812 = vmatpush.bf16.msra.mxu0 %v1306
        %1813 = vmatmul.bf16.gmra.mxu0 %v1778
        %v1814 = vpop.f32.mrf.mxu0
        %v1815 = vadd.f32 0.0, %v1814
        %v1816 = vpop.f32.mrf.mxu0
        %1817 = vdwg.mxu0
        %1818 = vmatpush.bf16.msra.mxu0 %v1335
        %1819 = vmatpush.bf16.msra.mxu0 %v1331
        %1820 = vmatpush.bf16.msra.mxu0 %v1327
        %1821 = vmatpush.bf16.msra.mxu0 %v1323
        %1822 = vmatpush.bf16.msra.mxu0 %v1319
        %1823 = vmatpush.bf16.msra.mxu0 %v1315
        %1824 = vmatpush.bf16.msra.mxu0 %v1311
        %1825 = vmatpush.bf16.msra.mxu0 %v1307
        %1826 = vmatmul.bf16.gmra.mxu0 %v1778
        %v1827 = vpop.f32.mrf.mxu0
        %v1828 = vadd.f32 0.0, %v1827
        %v1829 = vpop.f32.mrf.mxu0
        %1830 = vdwg.mxu0
        %v1831 = vadd.f32 %v1772, %v1789
        %v1832 = vadd.f32 %v1773, %v1802
        %v1833 = vadd.f32 %v1774, %v1815
        %v1834 = vadd.f32 %v1775, %v1828
        %v1835 = vxor.u32 %v1831, 2147483648
        %v1836 = vmul.f32 %v1835, 1.442695
        %v1837 = vpow.pop %v1836
        %v1838 = vadd.f32 %v1837, 1.0
        %v1839 = vrcp.pop %v1838
        %v1840 = vmul.f32 %v1838, %v1839
        %v1841 = vsub.f32 1.0, %v1840
        %v1842 = vmul.f32 %v1839, %v1841
        %v1843 = vadd.f32 %v1839, %v1842
        %vm1844 = vweird.f32 %v1838
        %vm1845 = vweird.f32 %v1839
        %vm1846 = vmor %vm1844, %vm1845
        %v1847 = vsel %vm1846, %v1839, %v1843
        %v1848 = vand.u32 2147483647, %v1838
        %vm1849 = vcmp.eq.f32.partialorder %v1848, 8.507059e+37
        %v1850 = vand.u32 %v1838, 2147483648
        %v1851 = vor.u32 1.1754944e-38, %v1850
        %v1852 = vsel %vm1849, %v1851, %v1847
        %v1853 = vmul.f32 1.0, %v1852
        %v1854 = vxor.u32 %v1832, 2147483648
        %v1855 = vmul.f32 %v1854, 1.442695
        %v1856 = vpow.pop %v1855
        %v1857 = vadd.f32 %v1856, 1.0
        %v1858 = vrcp.pop %v1857
        %v1859 = vmul.f32 %v1857, %v1858
        %v1860 = vsub.f32 1.0, %v1859
        %v1861 = vmul.f32 %v1858, %v1860
        %v1862 = vadd.f32 %v1858, %v1861
        %vm1863 = vweird.f32 %v1857
        %vm1864 = vweird.f32 %v1858
        %vm1865 = vmor %vm1863, %vm1864
        %v1866 = vsel %vm1865, %v1858, %v1862
        %v1867 = vand.u32 2147483647, %v1857
        %vm1868 = vcmp.eq.f32.partialorder %v1867, 8.507059e+37
        %v1869 = vand.u32 %v1857, 2147483648
        %v1870 = vor.u32 1.1754944e-38, %v1869
        %v1871 = vsel %vm1868, %v1870, %v1866
        %v1872 = vmul.f32 1.0, %v1871
        %v1873 = vtanh.pop %v1833
        %v1874 = vxor.u32 %v1834, 2147483648
        %v1875 = vmul.f32 %v1874, 1.442695
        %v1876 = vpow.pop %v1875
        %v1877 = vadd.f32 %v1876, 1.0
        %v1878 = vrcp.pop %v1877
        %v1879 = vmul.f32 %v1877, %v1878
        %v1880 = vsub.f32 1.0, %v1879
        %v1881 = vmul.f32 %v1878, %v1880
        %v1882 = vadd.f32 %v1878, %v1881
        %vm1883 = vweird.f32 %v1877
        %vm1884 = vweird.f32 %v1878
        %vm1885 = vmor %vm1883, %vm1884
        %v1886 = vsel %vm1885, %v1878, %v1882
        %v1887 = vand.u32 2147483647, %v1877
        %vm1888 = vcmp.eq.f32.partialorder %v1887, 8.507059e+37
        %v1889 = vand.u32 %v1877, 2147483648
        %v1890 = vor.u32 1.1754944e-38, %v1889
        %v1891 = vsel %vm1888, %v1890, %v1886
        %v1892 = vmul.f32 1.0, %v1891
        %v1893 = vmul.f32 %v1872, %v1777
        %v1894 = vmul.f32 %v1853, %v1873
        %v1895 = vadd.f32 %v1893, %v1894
        %v1896 = vtanh.pop %v1895
        %v1897 = vmul.f32 %v1892, %v1896
        %1898 = vst [vmem:[#allocation3] sm:$0xff] %v1895
        %1899 = vst [vmem:[#allocation2] sm:$0xff] %v1897
        %s1900 = smul.u32 %s1768, 8
        %s1901 = scalar_lea.vmem %s415, %s1900 [#allocation9]
        %1902 = vst [vmem:[%s1901] sm:$0xff] %v1897
        %s1903 = smul.u32 %s1492, 4
        %s1904 = smul.u32 %s27, 3
        %s1905 = sadd.s32 %s1903, %s1904
        %s1906 = smul.u32 %s1905, 4
        %s1907 = smul.addr %s1906, 8
        %s1908 = scalar_lea.vmem [#allocation4], %s1907
        %v1909 = vld [vmem:[%s1908] sm:$0xff]
        %v1910 = vld [vmem:[%s1908 + $0x8] sm:$0xff]
        %v1911 = vld [vmem:[%s1908 + $0x10] sm:$0xff]
        %v1912 = vld [vmem:[%s1908 + $0x18] sm:$0xff]
        %v1913 = vld [vmem:[#allocation2] sm:$0xff]
        %v1914 = vld [vmem:[#allocation3] sm:$0xff]
        %v1915 = vpack.c.bf16 %v1913, %v1913
        %1916 = vmatpush.bf16.msra.mxu0 %v1332
        %1917 = vmatpush.bf16.msra.mxu0 %v1328
        %1918 = vmatpush.bf16.msra.mxu0 %v1324
        %1919 = vmatpush.bf16.msra.mxu0 %v1320
        %1920 = vmatpush.bf16.msra.mxu0 %v1316
        %1921 = vmatpush.bf16.msra.mxu0 %v1312
        %1922 = vmatpush.bf16.msra.mxu0 %v1308
        %1923 = vmatpush.bf16.msra.mxu0 %v1304
        %1924 = vmatmul.bf16.gmra.mxu0 %v1915
        %v1925 = vpop.f32.mrf.mxu0
        %v1926 = vadd.f32 0.0, %v1925
        %v1927 = vpop.f32.mrf.mxu0
        %1928 = vdwg.mxu0
        %1929 = vmatpush.bf16.msra.mxu0 %v1333
        %1930 = vmatpush.bf16.msra.mxu0 %v1329
        %1931 = vmatpush.bf16.msra.mxu0 %v1325
        %1932 = vmatpush.bf16.msra.mxu0 %v1321
        %1933 = vmatpush.bf16.msra.mxu0 %v1317
        %1934 = vmatpush.bf16.msra.mxu0 %v1313
        %1935 = vmatpush.bf16.msra.mxu0 %v1309
        %1936 = vmatpush.bf16.msra.mxu0 %v1305
        %1937 = vmatmul.bf16.gmra.mxu0 %v1915
        %v1938 = vpop.f32.mrf.mxu0
        %v1939 = vadd.f32 0.0, %v1938
        %v1940 = vpop.f32.mrf.mxu0
        %1941 = vdwg.mxu0
        %1942 = vmatpush.bf16.msra.mxu0 %v1334
        %1943 = vmatpush.bf16.msra.mxu0 %v1330
        %1944 = vmatpush.bf16.msra.mxu0 %v1326
        %1945 = vmatpush.bf16.msra.mxu0 %v1322
        %1946 = vmatpush.bf16.msra.mxu0 %v1318
        %1947 = vmatpush.bf16.msra.mxu0 %v1314
        %1948 = vmatpush.bf16.msra.mxu0 %v1310
        %1949 = vmatpush.bf16.msra.mxu0 %v1306
        %1950 = vmatmul.bf16.gmra.mxu0 %v1915
        %v1951 = vpop.f32.mrf.mxu0
        %v1952 = vadd.f32 0.0, %v1951
        %v1953 = vpop.f32.mrf.mxu0
        %1954 = vdwg.mxu0
        %1955 = vmatpush.bf16.msra.mxu0 %v1335
        %1956 = vmatpush.bf16.msra.mxu0 %v1331
        %1957 = vmatpush.bf16.msra.mxu0 %v1327
        %1958 = vmatpush.bf16.msra.mxu0 %v1323
        %1959 = vmatpush.bf16.msra.mxu0 %v1319
        %1960 = vmatpush.bf16.msra.mxu0 %v1315
        %1961 = vmatpush.bf16.msra.mxu0 %v1311
        %1962 = vmatpush.bf16.msra.mxu0 %v1307
        %1963 = vmatmul.bf16.gmra.mxu0 %v1915
        %v1964 = vpop.f32.mrf.mxu0
        %v1965 = vadd.f32 0.0, %v1964
        %v1966 = vpop.f32.mrf.mxu0
        %1967 = vdwg.mxu0
        %v1968 = vadd.f32 %v1909, %v1926
        %v1969 = vadd.f32 %v1910, %v1939
        %v1970 = vadd.f32 %v1911, %v1952
        %v1971 = vadd.f32 %v1912, %v1965
        %v1972 = vxor.u32 %v1968, 2147483648
        %v1973 = vmul.f32 %v1972, 1.442695
        %v1974 = vpow.pop %v1973
        %v1975 = vadd.f32 %v1974, 1.0
        %v1976 = vrcp.pop %v1975
        %v1977 = vmul.f32 %v1975, %v1976
        %v1978 = vsub.f32 1.0, %v1977
        %v1979 = vmul.f32 %v1976, %v1978
        %v1980 = vadd.f32 %v1976, %v1979
        %vm1981 = vweird.f32 %v1975
        %vm1982 = vweird.f32 %v1976
        %vm1983 = vmor %vm1981, %vm1982
        %v1984 = vsel %vm1983, %v1976, %v1980
        %v1985 = vand.u32 2147483647, %v1975
        %vm1986 = vcmp.eq.f32.partialorder %v1985, 8.507059e+37
        %v1987 = vand.u32 %v1975, 2147483648
        %v1988 = vor.u32 1.1754944e-38, %v1987
        %v1989 = vsel %vm1986, %v1988, %v1984
        %v1990 = vmul.f32 1.0, %v1989
        %v1991 = vxor.u32 %v1969, 2147483648
        %v1992 = vmul.f32 %v1991, 1.442695
        %v1993 = vpow.pop %v1992
        %v1994 = vadd.f32 %v1993, 1.0
        %v1995 = vrcp.pop %v1994
        %v1996 = vmul.f32 %v1994, %v1995
        %v1997 = vsub.f32 1.0, %v1996
        %v1998 = vmul.f32 %v1995, %v1997
        %v1999 = vadd.f32 %v1995, %v1998
        %vm2000 = vweird.f32 %v1994
        %vm2001 = vweird.f32 %v1995
        %vm2002 = vmor %vm2000, %vm2001
        %v2003 = vsel %vm2002, %v1995, %v1999
        %v2004 = vand.u32 2147483647, %v1994
        %vm2005 = vcmp.eq.f32.partialorder %v2004, 8.507059e+37
        %v2006 = vand.u32 %v1994, 2147483648
        %v2007 = vor.u32 1.1754944e-38, %v2006
        %v2008 = vsel %vm2005, %v2007, %v2003
        %v2009 = vmul.f32 1.0, %v2008
        %v2010 = vtanh.pop %v1970
        %v2011 = vxor.u32 %v1971, 2147483648
        %v2012 = vmul.f32 %v2011, 1.442695
        %v2013 = vpow.pop %v2012
        %v2014 = vadd.f32 %v2013, 1.0
        %v2015 = vrcp.pop %v2014
        %v2016 = vmul.f32 %v2014, %v2015
        %v2017 = vsub.f32 1.0, %v2016
        %v2018 = vmul.f32 %v2015, %v2017
        %v2019 = vadd.f32 %v2015, %v2018
        %vm2020 = vweird.f32 %v2014
        %vm2021 = vweird.f32 %v2015
        %vm2022 = vmor %vm2020, %vm2021
        %v2023 = vsel %vm2022, %v2015, %v2019
        %v2024 = vand.u32 2147483647, %v2014
        %vm2025 = vcmp.eq.f32.partialorder %v2024, 8.507059e+37
        %v2026 = vand.u32 %v2014, 2147483648
        %v2027 = vor.u32 1.1754944e-38, %v2026
        %v2028 = vsel %vm2025, %v2027, %v2023
        %v2029 = vmul.f32 1.0, %v2028
        %v2030 = vmul.f32 %v2009, %v1914
        %v2031 = vmul.f32 %v1990, %v2010
        %v2032 = vadd.f32 %v2030, %v2031
        %v2033 = vtanh.pop %v2032
        %v2034 = vmul.f32 %v2029, %v2033
        %2035 = vst [vmem:[#allocation3] sm:$0xff] %v2032
        %2036 = vst [vmem:[#allocation2] sm:$0xff] %v2034
        %s2037 = smul.u32 %s1905, 8
        %s2038 = scalar_lea.vmem %s415, %s2037 [#allocation9]
        %2039 = vst [vmem:[%s2038] sm:$0xff] %v2034
        %s2040 = smul.u32 %s1492, 5
        %s2041 = smul.u32 %s27, 2
        %s2042 = sadd.s32 %s2040, %s2041
        %s2043 = smul.u32 %s2042, 4
        %s2044 = smul.addr %s2043, 8
        %s2045 = scalar_lea.vmem [#allocation4], %s2044
        %v2046 = vld [vmem:[%s2045] sm:$0xff]
        %v2047 = vld [vmem:[%s2045 + $0x8] sm:$0xff]
        %v2048 = vld [vmem:[%s2045 + $0x10] sm:$0xff]
        %v2049 = vld [vmem:[%s2045 + $0x18] sm:$0xff]
        %v2050 = vld [vmem:[#allocation2] sm:$0xff]
        %v2051 = vld [vmem:[#allocation3] sm:$0xff]
        %v2052 = vpack.c.bf16 %v2050, %v2050
        %2053 = vmatpush.bf16.msra.mxu0 %v1332
        %2054 = vmatpush.bf16.msra.mxu0 %v1328
        %2055 = vmatpush.bf16.msra.mxu0 %v1324
        %2056 = vmatpush.bf16.msra.mxu0 %v1320
        %2057 = vmatpush.bf16.msra.mxu0 %v1316
        %2058 = vmatpush.bf16.msra.mxu0 %v1312
        %2059 = vmatpush.bf16.msra.mxu0 %v1308
        %2060 = vmatpush.bf16.msra.mxu0 %v1304
        %2061 = vmatmul.bf16.gmra.mxu0 %v2052
        %v2062 = vpop.f32.mrf.mxu0
        %v2063 = vadd.f32 0.0, %v2062
        %v2064 = vpop.f32.mrf.mxu0
        %2065 = vdwg.mxu0
        %2066 = vmatpush.bf16.msra.mxu0 %v1333
        %2067 = vmatpush.bf16.msra.mxu0 %v1329
        %2068 = vmatpush.bf16.msra.mxu0 %v1325
        %2069 = vmatpush.bf16.msra.mxu0 %v1321
        %2070 = vmatpush.bf16.msra.mxu0 %v1317
        %2071 = vmatpush.bf16.msra.mxu0 %v1313
        %2072 = vmatpush.bf16.msra.mxu0 %v1309
        %2073 = vmatpush.bf16.msra.mxu0 %v1305
        %2074 = vmatmul.bf16.gmra.mxu0 %v2052
        %v2075 = vpop.f32.mrf.mxu0
        %v2076 = vadd.f32 0.0, %v2075
        %v2077 = vpop.f32.mrf.mxu0
        %2078 = vdwg.mxu0
        %2079 = vmatpush.bf16.msra.mxu0 %v1334
        %2080 = vmatpush.bf16.msra.mxu0 %v1330
        %2081 = vmatpush.bf16.msra.mxu0 %v1326
        %2082 = vmatpush.bf16.msra.mxu0 %v1322
        %2083 = vmatpush.bf16.msra.mxu0 %v1318
        %2084 = vmatpush.bf16.msra.mxu0 %v1314
        %2085 = vmatpush.bf16.msra.mxu0 %v1310
        %2086 = vmatpush.bf16.msra.mxu0 %v1306
        %2087 = vmatmul.bf16.gmra.mxu0 %v2052
        %v2088 = vpop.f32.mrf.mxu0
        %v2089 = vadd.f32 0.0, %v2088
        %v2090 = vpop.f32.mrf.mxu0
        %2091 = vdwg.mxu0
        %2092 = vmatpush.bf16.msra.mxu0 %v1335
        %2093 = vmatpush.bf16.msra.mxu0 %v1331
        %2094 = vmatpush.bf16.msra.mxu0 %v1327
        %2095 = vmatpush.bf16.msra.mxu0 %v1323
        %2096 = vmatpush.bf16.msra.mxu0 %v1319
        %2097 = vmatpush.bf16.msra.mxu0 %v1315
        %2098 = vmatpush.bf16.msra.mxu0 %v1311
        %2099 = vmatpush.bf16.msra.mxu0 %v1307
        %2100 = vmatmul.bf16.gmra.mxu0 %v2052
        %v2101 = vpop.f32.mrf.mxu0
        %v2102 = vadd.f32 0.0, %v2101
        %v2103 = vpop.f32.mrf.mxu0
        %2104 = vdwg.mxu0
        %v2105 = vadd.f32 %v2046, %v2063
        %v2106 = vadd.f32 %v2047, %v2076
        %v2107 = vadd.f32 %v2048, %v2089
        %v2108 = vadd.f32 %v2049, %v2102
        %v2109 = vxor.u32 %v2105, 2147483648
        %v2110 = vmul.f32 %v2109, 1.442695
        %v2111 = vpow.pop %v2110
        %v2112 = vadd.f32 %v2111, 1.0
        %v2113 = vrcp.pop %v2112
        %v2114 = vmul.f32 %v2112, %v2113
        %v2115 = vsub.f32 1.0, %v2114
        %v2116 = vmul.f32 %v2113, %v2115
        %v2117 = vadd.f32 %v2113, %v2116
        %vm2118 = vweird.f32 %v2112
        %vm2119 = vweird.f32 %v2113
        %vm2120 = vmor %vm2118, %vm2119
        %v2121 = vsel %vm2120, %v2113, %v2117
        %v2122 = vand.u32 2147483647, %v2112
        %vm2123 = vcmp.eq.f32.partialorder %v2122, 8.507059e+37
        %v2124 = vand.u32 %v2112, 2147483648
        %v2125 = vor.u32 1.1754944e-38, %v2124
        %v2126 = vsel %vm2123, %v2125, %v2121
        %v2127 = vmul.f32 1.0, %v2126
        %v2128 = vxor.u32 %v2106, 2147483648
        %v2129 = vmul.f32 %v2128, 1.442695
        %v2130 = vpow.pop %v2129
        %v2131 = vadd.f32 %v2130, 1.0
        %v2132 = vrcp.pop %v2131
        %v2133 = vmul.f32 %v2131, %v2132
        %v2134 = vsub.f32 1.0, %v2133
        %v2135 = vmul.f32 %v2132, %v2134
        %v2136 = vadd.f32 %v2132, %v2135
        %vm2137 = vweird.f32 %v2131
        %vm2138 = vweird.f32 %v2132
        %vm2139 = vmor %vm2137, %vm2138
        %v2140 = vsel %vm2139, %v2132, %v2136
        %v2141 = vand.u32 2147483647, %v2131
        %vm2142 = vcmp.eq.f32.partialorder %v2141, 8.507059e+37
        %v2143 = vand.u32 %v2131, 2147483648
        %v2144 = vor.u32 1.1754944e-38, %v2143
        %v2145 = vsel %vm2142, %v2144, %v2140
        %v2146 = vmul.f32 1.0, %v2145
        %v2147 = vtanh.pop %v2107
        %v2148 = vxor.u32 %v2108, 2147483648
        %v2149 = vmul.f32 %v2148, 1.442695
        %v2150 = vpow.pop %v2149
        %v2151 = vadd.f32 %v2150, 1.0
        %v2152 = vrcp.pop %v2151
        %v2153 = vmul.f32 %v2151, %v2152
        %v2154 = vsub.f32 1.0, %v2153
        %v2155 = vmul.f32 %v2152, %v2154
        %v2156 = vadd.f32 %v2152, %v2155
        %vm2157 = vweird.f32 %v2151
        %vm2158 = vweird.f32 %v2152
        %vm2159 = vmor %vm2157, %vm2158
        %v2160 = vsel %vm2159, %v2152, %v2156
        %v2161 = vand.u32 2147483647, %v2151
        %vm2162 = vcmp.eq.f32.partialorder %v2161, 8.507059e+37
        %v2163 = vand.u32 %v2151, 2147483648
        %v2164 = vor.u32 1.1754944e-38, %v2163
        %v2165 = vsel %vm2162, %v2164, %v2160
        %v2166 = vmul.f32 1.0, %v2165
        %v2167 = vmul.f32 %v2146, %v2051
        %v2168 = vmul.f32 %v2127, %v2147
        %v2169 = vadd.f32 %v2167, %v2168
        %v2170 = vtanh.pop %v2169
        %v2171 = vmul.f32 %v2166, %v2170
        %2172 = vst [vmem:[#allocation3] sm:$0xff] %v2169
        %2173 = vst [vmem:[#allocation2] sm:$0xff] %v2171
        %s2174 = smul.u32 %s2042, 8
        %s2175 = scalar_lea.vmem %s415, %s2174 [#allocation9]
        %2176 = vst [vmem:[%s2175] sm:$0xff] %v2171
        %s2177 = smul.u32 %s1492, 6
        %s2178 = sadd.s32 %s2177, %s27
        %s2179 = smul.u32 %s2178, 4
        %s2180 = smul.addr %s2179, 8
        %s2181 = scalar_lea.vmem [#allocation4], %s2180
        %v2182 = vld [vmem:[%s2181] sm:$0xff]
        %v2183 = vld [vmem:[%s2181 + $0x8] sm:$0xff]
        %v2184 = vld [vmem:[%s2181 + $0x10] sm:$0xff]
        %v2185 = vld [vmem:[%s2181 + $0x18] sm:$0xff]
        %v2186 = vld [vmem:[#allocation2] sm:$0xff]
        %v2187 = vld [vmem:[#allocation3] sm:$0xff]
        %v2188 = vpack.c.bf16 %v2186, %v2186
        %2189 = vmatpush.bf16.msra.mxu0 %v1332
        %2190 = vmatpush.bf16.msra.mxu0 %v1328
        %2191 = vmatpush.bf16.msra.mxu0 %v1324
        %2192 = vmatpush.bf16.msra.mxu0 %v1320
        %2193 = vmatpush.bf16.msra.mxu0 %v1316
        %2194 = vmatpush.bf16.msra.mxu0 %v1312
        %2195 = vmatpush.bf16.msra.mxu0 %v1308
        %2196 = vmatpush.bf16.msra.mxu0 %v1304
        %2197 = vmatmul.bf16.gmra.mxu0 %v2188
        %v2198 = vpop.f32.mrf.mxu0
        %v2199 = vadd.f32 0.0, %v2198
        %v2200 = vpop.f32.mrf.mxu0
        %2201 = vdwg.mxu0
        %2202 = vmatpush.bf16.msra.mxu0 %v1333
        %2203 = vmatpush.bf16.msra.mxu0 %v1329
        %2204 = vmatpush.bf16.msra.mxu0 %v1325
        %2205 = vmatpush.bf16.msra.mxu0 %v1321
        %2206 = vmatpush.bf16.msra.mxu0 %v1317
        %2207 = vmatpush.bf16.msra.mxu0 %v1313
        %2208 = vmatpush.bf16.msra.mxu0 %v1309
        %2209 = vmatpush.bf16.msra.mxu0 %v1305
        %2210 = vmatmul.bf16.gmra.mxu0 %v2188
        %v2211 = vpop.f32.mrf.mxu0
        %v2212 = vadd.f32 0.0, %v2211
        %v2213 = vpop.f32.mrf.mxu0
        %2214 = vdwg.mxu0
        %2215 = vmatpush.bf16.msra.mxu0 %v1334
        %2216 = vmatpush.bf16.msra.mxu0 %v1330
        %2217 = vmatpush.bf16.msra.mxu0 %v1326
        %2218 = vmatpush.bf16.msra.mxu0 %v1322
        %2219 = vmatpush.bf16.msra.mxu0 %v1318
        %2220 = vmatpush.bf16.msra.mxu0 %v1314
        %2221 = vmatpush.bf16.msra.mxu0 %v1310
        %2222 = vmatpush.bf16.msra.mxu0 %v1306
        %2223 = vmatmul.bf16.gmra.mxu0 %v2188
        %v2224 = vpop.f32.mrf.mxu0
        %v2225 = vadd.f32 0.0, %v2224
        %v2226 = vpop.f32.mrf.mxu0
        %2227 = vdwg.mxu0
        %2228 = vmatpush.bf16.msra.mxu0 %v1335
        %2229 = vmatpush.bf16.msra.mxu0 %v1331
        %2230 = vmatpush.bf16.msra.mxu0 %v1327
        %2231 = vmatpush.bf16.msra.mxu0 %v1323
        %2232 = vmatpush.bf16.msra.mxu0 %v1319
        %2233 = vmatpush.bf16.msra.mxu0 %v1315
        %2234 = vmatpush.bf16.msra.mxu0 %v1311
        %2235 = vmatpush.bf16.msra.mxu0 %v1307
        %2236 = vmatmul.bf16.gmra.mxu0 %v2188
        %v2237 = vpop.f32.mrf.mxu0
        %v2238 = vadd.f32 0.0, %v2237
        %v2239 = vpop.f32.mrf.mxu0
        %2240 = vdwg.mxu0
        %v2241 = vadd.f32 %v2182, %v2199
        %v2242 = vadd.f32 %v2183, %v2212
        %v2243 = vadd.f32 %v2184, %v2225
        %v2244 = vadd.f32 %v2185, %v2238
        %v2245 = vxor.u32 %v2241, 2147483648
        %v2246 = vmul.f32 %v2245, 1.442695
        %v2247 = vpow.pop %v2246
        %v2248 = vadd.f32 %v2247, 1.0
        %v2249 = vrcp.pop %v2248
        %v2250 = vmul.f32 %v2248, %v2249
        %v2251 = vsub.f32 1.0, %v2250
        %v2252 = vmul.f32 %v2249, %v2251
        %v2253 = vadd.f32 %v2249, %v2252
        %vm2254 = vweird.f32 %v2248
        %vm2255 = vweird.f32 %v2249
        %vm2256 = vmor %vm2254, %vm2255
        %v2257 = vsel %vm2256, %v2249, %v2253
        %v2258 = vand.u32 2147483647, %v2248
        %vm2259 = vcmp.eq.f32.partialorder %v2258, 8.507059e+37
        %v2260 = vand.u32 %v2248, 2147483648
        %v2261 = vor.u32 1.1754944e-38, %v2260
        %v2262 = vsel %vm2259, %v2261, %v2257
        %v2263 = vmul.f32 1.0, %v2262
        %v2264 = vxor.u32 %v2242, 2147483648
        %v2265 = vmul.f32 %v2264, 1.442695
        %v2266 = vpow.pop %v2265
        %v2267 = vadd.f32 %v2266, 1.0
        %v2268 = vrcp.pop %v2267
        %v2269 = vmul.f32 %v2267, %v2268
        %v2270 = vsub.f32 1.0, %v2269
        %v2271 = vmul.f32 %v2268, %v2270
        %v2272 = vadd.f32 %v2268, %v2271
        %vm2273 = vweird.f32 %v2267
        %vm2274 = vweird.f32 %v2268
        %vm2275 = vmor %vm2273, %vm2274
        %v2276 = vsel %vm2275, %v2268, %v2272
        %v2277 = vand.u32 2147483647, %v2267
        %vm2278 = vcmp.eq.f32.partialorder %v2277, 8.507059e+37
        %v2279 = vand.u32 %v2267, 2147483648
        %v2280 = vor.u32 1.1754944e-38, %v2279
        %v2281 = vsel %vm2278, %v2280, %v2276
        %v2282 = vmul.f32 1.0, %v2281
        %v2283 = vtanh.pop %v2243
        %v2284 = vxor.u32 %v2244, 2147483648
        %v2285 = vmul.f32 %v2284, 1.442695
        %v2286 = vpow.pop %v2285
        %v2287 = vadd.f32 %v2286, 1.0
        %v2288 = vrcp.pop %v2287
        %v2289 = vmul.f32 %v2287, %v2288
        %v2290 = vsub.f32 1.0, %v2289
        %v2291 = vmul.f32 %v2288, %v2290
        %v2292 = vadd.f32 %v2288, %v2291
        %vm2293 = vweird.f32 %v2287
        %vm2294 = vweird.f32 %v2288
        %vm2295 = vmor %vm2293, %vm2294
        %v2296 = vsel %vm2295, %v2288, %v2292
        %v2297 = vand.u32 2147483647, %v2287
        %vm2298 = vcmp.eq.f32.partialorder %v2297, 8.507059e+37
        %v2299 = vand.u32 %v2287, 2147483648
        %v2300 = vor.u32 1.1754944e-38, %v2299
        %v2301 = vsel %vm2298, %v2300, %v2296
        %v2302 = vmul.f32 1.0, %v2301
        %v2303 = vmul.f32 %v2282, %v2187
        %v2304 = vmul.f32 %v2263, %v2283
        %v2305 = vadd.f32 %v2303, %v2304
        %v2306 = vtanh.pop %v2305
        %v2307 = vmul.f32 %v2302, %v2306
        %2308 = vst [vmem:[#allocation3] sm:$0xff] %v2305
        %2309 = vst [vmem:[#allocation2] sm:$0xff] %v2307
        %s2310 = smul.u32 %s2178, 8
        %s2311 = scalar_lea.vmem %s415, %s2310 [#allocation9]
        %2312 = vst [vmem:[%s2311] sm:$0xff] %v2307
        %s2313 = smul.u32 %s1492, 7
        %s2314 = smul.u32 %s2313, 4
        %s2315 = smul.addr %s2314, 8
        %s2316 = scalar_lea.vmem [#allocation4], %s2315
        %v2317 = vld [vmem:[%s2316] sm:$0xff]
        %v2318 = vld [vmem:[%s2316 + $0x8] sm:$0xff]
        %v2319 = vld [vmem:[%s2316 + $0x10] sm:$0xff]
        %v2320 = vld [vmem:[%s2316 + $0x18] sm:$0xff]
        %v2321 = vld [vmem:[#allocation2] sm:$0xff]
        %v2322 = vld [vmem:[#allocation3] sm:$0xff]
        %v2323 = vpack.c.bf16 %v2321, %v2321
        %2324 = vmatpush.bf16.msra.mxu0 %v1332
        %2325 = vmatpush.bf16.msra.mxu0 %v1328
        %2326 = vmatpush.bf16.msra.mxu0 %v1324
        %2327 = vmatpush.bf16.msra.mxu0 %v1320
        %2328 = vmatpush.bf16.msra.mxu0 %v1316
        %2329 = vmatpush.bf16.msra.mxu0 %v1312
        %2330 = vmatpush.bf16.msra.mxu0 %v1308
        %2331 = vmatpush.bf16.msra.mxu0 %v1304
        %2332 = vmatmul.bf16.gmra.mxu0 %v2323
        %v2333 = vpop.f32.mrf.mxu0
        %v2334 = vadd.f32 0.0, %v2333
        %v2335 = vpop.f32.mrf.mxu0
        %2336 = vdwg.mxu0
        %2337 = vmatpush.bf16.msra.mxu0 %v1333
        %2338 = vmatpush.bf16.msra.mxu0 %v1329
        %2339 = vmatpush.bf16.msra.mxu0 %v1325
        %2340 = vmatpush.bf16.msra.mxu0 %v1321
        %2341 = vmatpush.bf16.msra.mxu0 %v1317
        %2342 = vmatpush.bf16.msra.mxu0 %v1313
        %2343 = vmatpush.bf16.msra.mxu0 %v1309
        %2344 = vmatpush.bf16.msra.mxu0 %v1305
        %2345 = vmatmul.bf16.gmra.mxu0 %v2323
        %v2346 = vpop.f32.mrf.mxu0
        %v2347 = vadd.f32 0.0, %v2346
        %v2348 = vpop.f32.mrf.mxu0
        %2349 = vdwg.mxu0
        %2350 = vmatpush.bf16.msra.mxu0 %v1334
        %2351 = vmatpush.bf16.msra.mxu0 %v1330
        %2352 = vmatpush.bf16.msra.mxu0 %v1326
        %2353 = vmatpush.bf16.msra.mxu0 %v1322
        %2354 = vmatpush.bf16.msra.mxu0 %v1318
        %2355 = vmatpush.bf16.msra.mxu0 %v1314
        %2356 = vmatpush.bf16.msra.mxu0 %v1310
        %2357 = vmatpush.bf16.msra.mxu0 %v1306
        %2358 = vmatmul.bf16.gmra.mxu0 %v2323
        %v2359 = vpop.f32.mrf.mxu0
        %v2360 = vadd.f32 0.0, %v2359
        %v2361 = vpop.f32.mrf.mxu0
        %2362 = vdwg.mxu0
        %2363 = vmatpush.bf16.msra.mxu0 %v1335
        %2364 = vmatpush.bf16.msra.mxu0 %v1331
        %2365 = vmatpush.bf16.msra.mxu0 %v1327
        %2366 = vmatpush.bf16.msra.mxu0 %v1323
        %2367 = vmatpush.bf16.msra.mxu0 %v1319
        %2368 = vmatpush.bf16.msra.mxu0 %v1315
        %2369 = vmatpush.bf16.msra.mxu0 %v1311
        %2370 = vmatpush.bf16.msra.mxu0 %v1307
        %2371 = vmatmul.bf16.gmra.mxu0 %v2323
        %v2372 = vpop.f32.mrf.mxu0
        %v2373 = vadd.f32 0.0, %v2372
        %v2374 = vpop.f32.mrf.mxu0
        %2375 = vdwg.mxu0
        %v2376 = vadd.f32 %v2317, %v2334
        %v2377 = vadd.f32 %v2318, %v2347
        %v2378 = vadd.f32 %v2319, %v2360
        %v2379 = vadd.f32 %v2320, %v2373
        %v2380 = vxor.u32 %v2376, 2147483648
        %v2381 = vmul.f32 %v2380, 1.442695
        %v2382 = vpow.pop %v2381
        %v2383 = vadd.f32 %v2382, 1.0
        %v2384 = vrcp.pop %v2383
        %v2385 = vmul.f32 %v2383, %v2384
        %v2386 = vsub.f32 1.0, %v2385
        %v2387 = vmul.f32 %v2384, %v2386
        %v2388 = vadd.f32 %v2384, %v2387
        %vm2389 = vweird.f32 %v2383
        %vm2390 = vweird.f32 %v2384
        %vm2391 = vmor %vm2389, %vm2390
        %v2392 = vsel %vm2391, %v2384, %v2388
        %v2393 = vand.u32 2147483647, %v2383
        %vm2394 = vcmp.eq.f32.partialorder %v2393, 8.507059e+37
        %v2395 = vand.u32 %v2383, 2147483648
        %v2396 = vor.u32 1.1754944e-38, %v2395
        %v2397 = vsel %vm2394, %v2396, %v2392
        %v2398 = vmul.f32 1.0, %v2397
        %v2399 = vxor.u32 %v2377, 2147483648
        %v2400 = vmul.f32 %v2399, 1.442695
        %v2401 = vpow.pop %v2400
        %v2402 = vadd.f32 %v2401, 1.0
        %v2403 = vrcp.pop %v2402
        %v2404 = vmul.f32 %v2402, %v2403
        %v2405 = vsub.f32 1.0, %v2404
        %v2406 = vmul.f32 %v2403, %v2405
        %v2407 = vadd.f32 %v2403, %v2406
        %vm2408 = vweird.f32 %v2402
        %vm2409 = vweird.f32 %v2403
        %vm2410 = vmor %vm2408, %vm2409
        %v2411 = vsel %vm2410, %v2403, %v2407
        %v2412 = vand.u32 2147483647, %v2402
        %vm2413 = vcmp.eq.f32.partialorder %v2412, 8.507059e+37
        %v2414 = vand.u32 %v2402, 2147483648
        %v2415 = vor.u32 1.1754944e-38, %v2414
        %v2416 = vsel %vm2413, %v2415, %v2411
        %v2417 = vmul.f32 1.0, %v2416
        %v2418 = vtanh.pop %v2378
        %v2419 = vxor.u32 %v2379, 2147483648
        %v2420 = vmul.f32 %v2419, 1.442695
        %v2421 = vpow.pop %v2420
        %v2422 = vadd.f32 %v2421, 1.0
        %v2423 = vrcp.pop %v2422
        %v2424 = vmul.f32 %v2422, %v2423
        %v2425 = vsub.f32 1.0, %v2424
        %v2426 = vmul.f32 %v2423, %v2425
        %v2427 = vadd.f32 %v2423, %v2426
        %vm2428 = vweird.f32 %v2422
        %vm2429 = vweird.f32 %v2423
        %vm2430 = vmor %vm2428, %vm2429
        %v2431 = vsel %vm2430, %v2423, %v2427
        %v2432 = vand.u32 2147483647, %v2422
        %vm2433 = vcmp.eq.f32.partialorder %v2432, 8.507059e+37
        %v2434 = vand.u32 %v2422, 2147483648
        %v2435 = vor.u32 1.1754944e-38, %v2434
        %v2436 = vsel %vm2433, %v2435, %v2431
        %v2437 = vmul.f32 1.0, %v2436
        %v2438 = vmul.f32 %v2417, %v2322
        %v2439 = vmul.f32 %v2398, %v2418
        %v2440 = vadd.f32 %v2438, %v2439
        %v2441 = vtanh.pop %v2440
        %v2442 = vmul.f32 %v2437, %v2441
        %2443 = vst [vmem:[#allocation3] sm:$0xff] %v2440
        %2444 = vst [vmem:[#allocation2] sm:$0xff] %v2442
        %s2445 = smul.u32 %s2313, 8
        %s2446 = scalar_lea.vmem %s415, %s2445 [#allocation9]
        %2447 = vst [vmem:[%s2446] sm:$0xff] %v2442
        %s2448 = sand.u32 %s221, 1
        %s2449 = sand.u32 %s221, 1
        %s2450 = smul.addr %s2449, 64
        %s2451 = scalar_lea.vmem [#allocation9], %s2450
        // Predicated region
        $region57: #{lstm_block_forward.3} parent=43 // pred_check
          %p2452 = pneg %p231
        $region58: #{lstm_block_forward.3} parent=43 // pred_check_branch
          %2454 = sbr.rel (%p2452) target = $region60
        $region59: #{lstm_block_forward.3} parent=43 // pred_region
          %s2455 = ssub.s32 1, %s27
          %s2456 = smul.u32 %s2455, %s28
          %s2457 = ssub.s32 0, %s28
          %s2458 = smul.u32 %s27, %s2457
          %s2459 = sadd.s32 %s2456, %s2458
          %s2460 = smul.u32 8, %s2459
          %s2461 = smul.addr %s2460, 2
          %s2462 = sadd.s32 %s27, %s2461
          %s2463 = smul.addr %s2462, 8
          %s2464 = scalar_lea.vmem %s6, %s2463
          // Predicated region
          $region61: #{lstm_block_forward.3} parent=59 // pred_check
            _
          $region62: #{lstm_block_forward.3} parent=59 // pred_check_branch
            %2466 = sbr.rel (0) target = $region64
          $region63: #{lstm_block_forward.3} parent=59 // pred_region
            // Predicated region
            $region65: #{lstm_block_forward.3} parent=63 // pred_check
              _
            $region66: #{lstm_block_forward.3} parent=63 // pred_check_branch
              %2468 = sbr.rel (0) target = $region68
            $region67: #{lstm_block_forward.3} parent=63 // pred_region
              // Predicated region
              $region80: #{lstm_block_forward.3} parent=67 // pred_check
                _
              $region81: #{lstm_block_forward.3} parent=67 // pred_check_branch
                %2498 = sbr.rel (0) target = $region83
              $region82: #{lstm_block_forward.3} parent=67 // pred_region
                loop: start=0, step=1, limit=1
                $region84: #{lstm_block_forward.3} parent=82 // loop_pre_header
                  _
                $region85: #{lstm_block_forward.3} parent=82 // loop_header
                  %s2500 = sphi 0, %s2504
                  %p2501 = scmp.ge.s32.totalorder %s2500, 1
                  %s2505 = sphi %s2451, %s2451
                  %s2506 = sphi %s2464, %s2464
                $region86: #{lstm_block_forward.3} parent=82 // loop_header_branch
                  %2503 = sbr.rel (%p2501) target = $region90
                $region87: #{lstm_block_forward.3} parent=82 // loop_body
                  %v2507 = vld [vmem:[%s2505] sm:$0xff]
                  %2508 = vst [vmem:[%s2506] sm:$0xff] %v2507
                  %v2509 = vld [vmem:[%s2505 + $0x8] sm:$0xff]
                  %2510 = vst [vmem:[%s2506 + $0x10] sm:$0xff] %v2509
                  %v2511 = vld [vmem:[%s2505 + $0x10] sm:$0xff]
                  %2512 = vst [vmem:[%s2506 + $0x20] sm:$0xff] %v2511
                  %v2513 = vld [vmem:[%s2505 + $0x18] sm:$0xff]
                  %2514 = vst [vmem:[%s2506 + $0x30] sm:$0xff] %v2513
                  %v2515 = vld [vmem:[%s2505 + $0x20] sm:$0xff]
                  %2516 = vst [vmem:[%s2506 + $0x40] sm:$0xff] %v2515
                  %v2517 = vld [vmem:[%s2505 + $0x28] sm:$0xff]
                  %2518 = vst [vmem:[%s2506 + $0x50] sm:$0xff] %v2517
                  %v2519 = vld [vmem:[%s2505 + $0x30] sm:$0xff]
                  %2520 = vst [vmem:[%s2506 + $0x60] sm:$0xff] %v2519
                  %v2521 = vld [vmem:[%s2505 + $0x38] sm:$0xff]
                  %2522 = vst [vmem:[%s2506 + $0x70] sm:$0xff] %v2521
                $region88: #{lstm_block_forward.3} parent=82 // loop_footer
                  %s2504 = sadd.s32 1, %s2500
                $region89: #{lstm_block_forward.3} parent=82 // loop_footer_branch
                  %2499 = sbr.rel target = $region85
                $region90: #{lstm_block_forward.3} parent=82 // loop_exit
                  _
              $region83: #{lstm_block_forward.3} parent=67 // pred_fallthru
                _
              // Predicated region
              $region91: #{lstm_block_forward.3} parent=67 // pred_check
                _
              $region92: #{lstm_block_forward.3} parent=67 // pred_check_branch
                %2524 = sbr.rel target = $region94
              $region93: #{lstm_block_forward.3} parent=67 // pred_region
                _
              $region94: #{lstm_block_forward.3} parent=67 // pred_fallthru
                _
            $region68: #{lstm_block_forward.3} parent=63 // pred_fallthru
              _
            // Predicated region
            $region69: #{lstm_block_forward.3} parent=63 // pred_check
              _
            $region70: #{lstm_block_forward.3} parent=63 // pred_check_branch
              %2470 = sbr.rel target = $region72
            $region71: #{lstm_block_forward.3} parent=63 // pred_region
              %s2472 = ssub.s32 256, 1
              loop: start=0, step=1, limit=1
              $region73: #{lstm_block_forward.3} parent=71 // loop_pre_header
                _
              $region74: #{lstm_block_forward.3} parent=71 // loop_header
                %s2474 = sphi 0, %s2478
                %p2475 = scmp.ge.s32.totalorder %s2474, 1
                %s2479 = sphi %s2451, %s2451
                %s2480 = sphi %s2464, %s2464
              $region75: #{lstm_block_forward.3} parent=71 // loop_header_branch
                %2477 = sbr.rel (%p2475) target = $region79
              $region76: #{lstm_block_forward.3} parent=71 // loop_body
                %v2481 = vld [vmem:[%s2479] sm:%s2472]
                %2482 = vst [vmem:[%s2480] sm:%s2472] %v2481
                %v2483 = vld [vmem:[%s2479 + $0x8] sm:%s2472]
                %2484 = vst [vmem:[%s2480 + $0x10] sm:%s2472] %v2483
                %v2485 = vld [vmem:[%s2479 + $0x10] sm:%s2472]
                %2486 = vst [vmem:[%s2480 + $0x20] sm:%s2472] %v2485
                %v2487 = vld [vmem:[%s2479 + $0x18] sm:%s2472]
                %2488 = vst [vmem:[%s2480 + $0x30] sm:%s2472] %v2487
                %v2489 = vld [vmem:[%s2479 + $0x20] sm:%s2472]
                %2490 = vst [vmem:[%s2480 + $0x40] sm:%s2472] %v2489
                %v2491 = vld [vmem:[%s2479 + $0x28] sm:%s2472]
                %2492 = vst [vmem:[%s2480 + $0x50] sm:%s2472] %v2491
                %v2493 = vld [vmem:[%s2479 + $0x30] sm:%s2472]
                %2494 = vst [vmem:[%s2480 + $0x60] sm:%s2472] %v2493
                %v2495 = vld [vmem:[%s2479 + $0x38] sm:%s2472]
                %2496 = vst [vmem:[%s2480 + $0x70] sm:%s2472] %v2495
              $region77: #{lstm_block_forward.3} parent=71 // loop_footer
                %s2478 = sadd.s32 1, %s2474
              $region78: #{lstm_block_forward.3} parent=71 // loop_footer_branch
                %2473 = sbr.rel target = $region74
              $region79: #{lstm_block_forward.3} parent=71 // loop_exit
                _
            $region72: #{lstm_block_forward.3} parent=63 // pred_fallthru
              _
          $region64: #{lstm_block_forward.3} parent=59 // pred_fallthru
            _
          %2525 = vnop
        $region60: #{lstm_block_forward.3} parent=43 // pred_fallthru
          _
      $region44: #{lstm_block_forward.3} parent=5 // pred_fallthru
        _
      %p2526 = scmp.le.s32.totalorder 2, %s18
      // Predicated region
      $region95: #{lstm_block_forward.3} parent=5 // pred_check
        %p2527 = pneg %p2526
      $region96: #{lstm_block_forward.3} parent=5 // pred_check_branch
        %2529 = sbr.rel (%p2527) target = $region98
      $region97: #{lstm_block_forward.3} parent=5 // pred_region
        %s2530 = ssub.s32 %s18, 2
        // Predicated region
        $region99: #{lstm_block_forward.3} parent=97 // pred_check
          %p2531 = pneg %p237
        $region100: #{lstm_block_forward.3} parent=97 // pred_check_branch
          %2533 = sbr.rel (%p2531) target = $region102
        $region101: #{lstm_block_forward.3} parent=97 // pred_region
          %s2534 = sand.u32 %s222, 1
          %s2535 = sand.u32 %s222, 1
          %s2536 = smul.addr %s2535, 64
          %s2537 = scalar_lea.vmem [#allocation9], %s2536
        $region102: #{lstm_block_forward.3} parent=97 // pred_fallthru
          _
      $region98: #{lstm_block_forward.3} parent=5 // pred_fallthru
        _
    $region6: #{lstm_block_forward.3} parent=1 // loop_footer
      %s22 = sadd.s32 1, %s18
    $region7: #{lstm_block_forward.3} parent=1 // loop_footer_branch
      %17 = sbr.rel target = $region3
    $region8: #{lstm_block_forward.3} parent=1 // loop_exit
      _
    %2538 = vsyncpa [#allocation6], 1
    %s2539 = scalar_lea.sflag [#allocation6], 1
    %2540 = vsyncpa %s2539, 1
    %2541 = vsyncpa [#allocation8], 1
    %s2542 = scalar_lea.sflag [#allocation8], 1
    %2543 = vsyncpa %s2542, 1

</llo_original>
